<compile_context>
chip_gen: v6e
topology: v6e:2x2x1
jax: 0.10.0
libtpu: 0.0.40
codegen_flags: <defaults>
</compile_context>

<pallas_src>
import functools

import jax
import jax.numpy as jnp
from jax.experimental import pallas as pl
from jax.experimental.pallas import tpu as pltpu


def _resnet_block_kernel(rowid_ref, colid_ref, x_ref, w1_ref, b1_ref,
                         w2_ref, b2_ref, o_ref, ybuf, *, C, H, W, eps):
    """One grid step = one batch sample.

    x_ref : (C, Lext) f32  -- reflection-padded x, flattened (Hp*Wp) and zero
                              padded by OFF on both ends so every tap slice is
                              in range.
    w*_ref: (9, C, C) f32  -- per-tap (Cout, Cin) matrices, tap t = a*3 + b.
    b*_ref: (C, 1)    f32
    o_ref : (C, H*W)  f32  -- NCHW-flat output for this sample (lane-dense).
    ybuf  : (C, Lext) f32  -- VMEM scratch holding the padded intermediate.
    """
    Hp, Wp = H + 2, W + 2
    Pp = Hp * Wp
    OFF = Wp + 1
    n_valid = jnp.float32(H * W)

    rowid = rowid_ref[...]                       # (1, Pp) int32 padded-row index
    colid = colid_ref[...]                       # (1, Pp) int32 padded-col index
    interior = ((rowid >= 1) & (rowid <= Hp - 2) &
                (colid >= 1) & (colid <= Wp - 2))  # valid (non-pad) positions

    # tap t = a*3 + b, flat shift s = (a-1)*Wp + (b-1)
    taps = [((a - 1) * Wp + (b - 1), a * 3 + b) for a in range(3) for b in range(3)]

    def conv_taps(load_slice, w_ref, b_ref):
        acc = jnp.zeros((C, Pp), jnp.float32)
        for s, t in taps:                        # fused im2col: 9 shifted matmuls
            acc = acc + jnp.dot(w_ref[t], load_slice(s),
                                preferred_element_type=jnp.float32)
        return acc + b_ref[...]                  # (C,1) broadcasts over lanes

    def inst_norm(y):                            # masked InstanceNorm (pad excluded)
        m = jnp.sum(jnp.where(interior, y, 0.0), axis=1, keepdims=True) / n_valid
        d = y - m
        v = jnp.sum(jnp.where(interior, d * d, 0.0), axis=1, keepdims=True) / n_valid
        return d * jax.lax.rsqrt(v + jnp.float32(eps))

    # ---- conv1 + InstanceNorm + ReLU -------------------------------------
    y1 = conv_taps(lambda s: x_ref[:, OFF + s:OFF + s + Pp], w1_ref, b1_ref)
    y1 = jnp.maximum(inst_norm(y1), 0.0)

    # ---- in-VMEM reflection padding of the intermediate -------------------
    zmargin = jnp.zeros((C, OFF), jnp.float32)
    ybuf[:, 0:OFF] = zmargin                     # keep tap reads finite
    ybuf[:, OFF + Pp:OFF + Pp + OFF] = zmargin
    ybuf[:, OFF:OFF + Pp] = y1
    at_p2 = ybuf[:, OFF + 2:OFF + 2 + Pp]        # value at flat q+2 (column 2)
    at_m2 = ybuf[:, OFF - 2:OFF - 2 + Pp]        # value at flat q-2 (column Wp-3)
    y1 = jnp.where(colid == 0, at_p2,
                   jnp.where(colid == Wp - 1, at_m2, y1))
    ybuf[:, OFF:OFF + Pp] = y1                   # columns reflected
    # rows reflected (contiguous flat slices): row0 <- row2, rowHp-1 <- rowHp-3
    ybuf[:, OFF:OFF + Wp] = ybuf[:, OFF + 2 * Wp:OFF + 3 * Wp]
    ybuf[:, OFF + (Hp - 1) * Wp:OFF + Hp * Wp] = \
        ybuf[:, OFF + (Hp - 3) * Wp:OFF + (Hp - 2) * Wp]

    # ---- conv2 + InstanceNorm + residual ----------------------------------
    y2 = conv_taps(lambda s: ybuf[:, OFF + s:OFF + s + Pp], w2_ref, b2_ref)
    y2 = inst_norm(y2) + x_ref[:, OFF:OFF + Pp]  # residual (interior == original x)

    # ---- extract the H*W interior into the lane-dense NCHW-flat output ----
    for i in range(H):
        o_ref[:, i * W:(i + 1) * W] = y2[:, (i + 1) * Wp + 1:(i + 1) * Wp + 1 + W]


def resnet_block_forward(x, w1, b1, w2, b2, eps=1e-5):
    """x: (N, C, H, W) f32; w*: (C, C, 3, 3); b*: (C,). Returns (N, C, H, W)."""
    N, C, H, W = x.shape
    Hp, Wp = H + 2, W + 2
    Pp = Hp * Wp
    OFF = Wp + 1
    Lext = Pp + 2 * OFF

    # reflection-pad x once (1.3x bytes); the 9x im2col expansion stays in VMEM
    xpad = jnp.pad(x, ((0, 0), (0, 0), (1, 1), (1, 1)), mode="reflect")
    x_ext = jnp.pad(xpad.reshape(N, C, Pp).astype(jnp.float32),
                    ((0, 0), (0, 0), (OFF, OFF)))

    # per-tap (Cout, Cin) weight matrices, tap index t = a*3 + b
    w1_taps = jnp.transpose(w1, (2, 3, 0, 1)).reshape(9, C, C).astype(jnp.float32)
    w2_taps = jnp.transpose(w2, (2, 3, 0, 1)).reshape(9, C, C).astype(jnp.float32)
    b1c = b1.reshape(C, 1).astype(jnp.float32)
    b2c = b2.reshape(C, 1).astype(jnp.float32)

    q = jnp.arange(Pp, dtype=jnp.int32).reshape(1, Pp)
    rowid = q // Wp
    colid = q % Wp

    kern = functools.partial(_resnet_block_kernel, C=C, H=H, W=W, eps=eps)
    out_flat = pl.pallas_call(
        kern,
        out_shape=jax.ShapeDtypeStruct((N, C, H * W), jnp.float32),
        grid=(N,),
        in_specs=[
            pl.BlockSpec((1, Pp), lambda n: (0, 0)),            # rowid
            pl.BlockSpec((1, Pp), lambda n: (0, 0)),            # colid
            pl.BlockSpec((None, C, Lext), lambda n: (n, 0, 0)),  # x_ext
            pl.BlockSpec((9, C, C), lambda n: (0, 0, 0)),        # w1 taps
            pl.BlockSpec((C, 1), lambda n: (0, 0)),              # b1
            pl.BlockSpec((9, C, C), lambda n: (0, 0, 0)),        # w2 taps
            pl.BlockSpec((C, 1), lambda n: (0, 0)),              # b2
        ],
        out_specs=pl.BlockSpec((None, C, H * W), lambda n: (n, 0, 0)),
        scratch_shapes=[pltpu.VMEM((C, Lext), jnp.float32)],
        compiler_params=pltpu.CompilerParams(
            dimension_semantics=("parallel",),
            vmem_limit_bytes=32 * 1024 * 1024),
    )(rowid, colid, x_ext, w1_taps, b1c, w2_taps, b2c)
    return out_flat.reshape(N, C, H, W)


if __name__ == "__main__":
    key = jax.random.PRNGKey(0)
    k_x, k_w1, k_b1, k_w2, k_b2 = jax.random.split(key, 5)

    N, C, H, W = 2, 4, 16, 16
    x = jax.random.normal(k_x, (N, C, H, W), dtype=jnp.float32)
    w1 = jax.random.normal(k_w1, (C, C, 3, 3), dtype=jnp.float32) * 0.2
    b1 = jax.random.normal(k_b1, (C,), dtype=jnp.float32) * 0.1
    w2 = jax.random.normal(k_w2, (C, C, 3, 3), dtype=jnp.float32) * 0.2
    b2 = jax.random.normal(k_b2, (C,), dtype=jnp.float32) * 0.1

    y = resnet_block_forward(x, w1, b1, w2, b2)
    jax.block_until_ready(y)

    # pure-JAX reference: ReflectionPad -> Conv -> IN -> ReLU ->
    #                     ReflectionPad -> Conv -> IN -> (+ x)
    def inorm(t, eps=1e-5):
        m = jnp.mean(t, axis=(2, 3), keepdims=True)
        v = jnp.mean((t - m) ** 2, axis=(2, 3), keepdims=True)
        return (t - m) / jnp.sqrt(v + eps)

    def conv(t, w, b):
        return jax.lax.conv_general_dilated(
            t, w, (1, 1), "VALID",
            dimension_numbers=("NCHW", "OIHW", "NCHW"),
            precision=jax.lax.Precision.HIGHEST) + b.reshape(1, -1, 1, 1)

    xp = jnp.pad(x, ((0, 0), (0, 0), (1, 1), (1, 1)), mode="reflect")
    h1 = jnp.maximum(inorm(conv(xp, w1, b1)), 0.0)
    h1p = jnp.pad(h1, ((0, 0), (0, 0), (1, 1), (1, 1)), mode="reflect")
    y_ref = inorm(conv(h1p, w2, b2)) + x

    assert y.shape == y_ref.shape
    err = float(jnp.max(jnp.abs(y - y_ref)))
    assert jnp.allclose(y, y_ref, rtol=2e-2, atol=2e-2), err
    print("KERNEL_OK")
</pallas_src>

<mosaic_0001>
module attributes {stable_mosaic.version = 11 : i64} {
  func.func @_resnet_block_kernel(%arg0: i32, %arg1: memref<1x324xi32, #tpu.memory_space<vmem>>, %arg2: memref<1x324xi32, #tpu.memory_space<vmem>>, %arg3: memref<1x4x362xf32, #tpu.memory_space<vmem>>, %arg4: memref<9x4x4xf32, #tpu.memory_space<vmem>>, %arg5: memref<4x1xf32, #tpu.memory_space<vmem>>, %arg6: memref<9x4x4xf32, #tpu.memory_space<vmem>>, %arg7: memref<4x1xf32, #tpu.memory_space<vmem>>, %arg8: memref<1x4x256xf32, #tpu.memory_space<vmem>>, %arg9: memref<4x362xf32, #tpu.memory_space<vmem>>) attributes {dimension_semantics = [#tpu.dimension_semantics<parallel>], iteration_bounds = array<i64: 2>, scalar_prefetch = 0 : i64, scratch_operands = 1 : i64, tpu.core_type = #tpu.core_type<tc>, window_params = [{pipeline_mode = #tpu.pipeline_mode<synchronous>, transform_indices = @transform_0, window_bounds = array<i64: 1, 324>}, {pipeline_mode = #tpu.pipeline_mode<synchronous>, transform_indices = @transform_1, window_bounds = array<i64: 1, 324>}, {transform_indices = @transform_2, window_bounds = array<i64: 1, 4, 362>}, {pipeline_mode = #tpu.pipeline_mode<synchronous>, transform_indices = @transform_3, window_bounds = array<i64: 9, 4, 4>}, {pipeline_mode = #tpu.pipeline_mode<synchronous>, transform_indices = @transform_4, window_bounds = array<i64: 4, 1>}, {pipeline_mode = #tpu.pipeline_mode<synchronous>, transform_indices = @transform_5, window_bounds = array<i64: 9, 4, 4>}, {pipeline_mode = #tpu.pipeline_mode<synchronous>, transform_indices = @transform_6, window_bounds = array<i64: 4, 1>}, {transform_indices = @transform_7, window_bounds = array<i64: 1, 4, 256>}]} {
    %c0 = arith.constant 0 : index
    %c0_0 = arith.constant 0 : index
    %0 = vector.load %arg1[%c0, %c0_0] : memref<1x324xi32, #tpu.memory_space<vmem>>, vector<1x324xi32>
    %c0_1 = arith.constant 0 : index
    %c0_2 = arith.constant 0 : index
    %1 = vector.load %arg2[%c0_1, %c0_2] : memref<1x324xi32, #tpu.memory_space<vmem>>, vector<1x324xi32>
    %c1_i32 = arith.constant 1 : i32
    %2 = vector.broadcast %c1_i32 : i32 to vector<1x324xi32>
    %3 = arith.cmpi sge, %0, %2 : vector<1x324xi32>
    %c16_i32 = arith.constant 16 : i32
    %4 = vector.broadcast %c16_i32 : i32 to vector<1x324xi32>
    %5 = arith.cmpi sle, %0, %4 : vector<1x324xi32>
    %6 = arith.andi %3, %5 : vector<1x324xi1>
    %c1_i32_3 = arith.constant 1 : i32
    %7 = vector.broadcast %c1_i32_3 : i32 to vector<1x324xi32>
    %8 = arith.cmpi sge, %1, %7 : vector<1x324xi32>
    %9 = arith.andi %6, %8 : vector<1x324xi1>
    %c16_i32_4 = arith.constant 16 : i32
    %10 = vector.broadcast %c16_i32_4 : i32 to vector<1x324xi32>
    %11 = arith.cmpi sle, %1, %10 : vector<1x324xi32>
    %12 = arith.andi %9, %11 : vector<1x324xi1>
    %cst = arith.constant 0.000000e+00 : f32
    %13 = vector.broadcast %cst : f32 to vector<4x324xf32>
    %c0_5 = arith.constant 0 : index
    %c0_6 = arith.constant 0 : index
    %c0_7 = arith.constant 0 : index
    %14 = vector.load %arg4[%c0_5, %c0_6, %c0_7] : memref<9x4x4xf32, #tpu.memory_space<vmem>>, vector<1x4x4xf32>
    %15 = vector.shape_cast %14 : vector<1x4x4xf32> to vector<4x4xf32>
    %c0_8 = arith.constant 0 : index
    %c0_9 = arith.constant 0 : index
    %c0_10 = arith.constant 0 : index
    %16 = vector.load %arg3[%c0_8, %c0_9, %c0_10] : memref<1x4x362xf32, #tpu.memory_space<vmem>>, vector<1x4x324xf32>
    %17 = vector.shape_cast %16 : vector<1x4x324xf32> to vector<4x324xf32>
    %cst_11 = arith.constant dense<0.000000e+00> : vector<4x324xf32>
    %18 = tpu.matmul %15, %17, %cst_11 {dimension_numbers = #tpu.dot_dimension_numbers<[1], [0], [0], [1], [0, 0, 1, 1], [], []>} : vector<4x4xf32>, vector<4x324xf32>, vector<4x324xf32> -> vector<4x324xf32>
    %19 = arith.addf %13, %18 : vector<4x324xf32>
    %c1 = arith.constant 1 : index
    %c0_12 = arith.constant 0 : index
    %c0_13 = arith.constant 0 : index
    %20 = vector.load %arg4[%c1, %c0_12, %c0_13] : memref<9x4x4xf32, #tpu.memory_space<vmem>>, vector<1x4x4xf32>
    %21 = vector.shape_cast %20 : vector<1x4x4xf32> to vector<4x4xf32>
    %c0_14 = arith.constant 0 : index
    %c0_15 = arith.constant 0 : index
    %c1_16 = arith.constant 1 : index
    %22 = vector.load %arg3[%c0_14, %c0_15, %c1_16] : memref<1x4x362xf32, #tpu.memory_space<vmem>>, vector<1x4x324xf32>
    %23 = vector.shape_cast %22 : vector<1x4x324xf32> to vector<4x324xf32>
    %cst_17 = arith.constant dense<0.000000e+00> : vector<4x324xf32>
    %24 = tpu.matmul %21, %23, %cst_17 {dimension_numbers = #tpu.dot_dimension_numbers<[1], [0], [0], [1], [0, 0, 1, 1], [], []>} : vector<4x4xf32>, vector<4x324xf32>, vector<4x324xf32> -> vector<4x324xf32>
    %25 = arith.addf %19, %24 : vector<4x324xf32>
    %c2 = arith.constant 2 : index
    %c0_18 = arith.constant 0 : index
    %c0_19 = arith.constant 0 : index
    %26 = vector.load %arg4[%c2, %c0_18, %c0_19] : memref<9x4x4xf32, #tpu.memory_space<vmem>>, vector<1x4x4xf32>
    %27 = vector.shape_cast %26 : vector<1x4x4xf32> to vector<4x4xf32>
    %c0_20 = arith.constant 0 : index
    %c0_21 = arith.constant 0 : index
    %c2_22 = arith.constant 2 : index
    %28 = vector.load %arg3[%c0_20, %c0_21, %c2_22] : memref<1x4x362xf32, #tpu.memory_space<vmem>>, vector<1x4x324xf32>
    %29 = vector.shape_cast %28 : vector<1x4x324xf32> to vector<4x324xf32>
    %cst_23 = arith.constant dense<0.000000e+00> : vector<4x324xf32>
    %30 = tpu.matmul %27, %29, %cst_23 {dimension_numbers = #tpu.dot_dimension_numbers<[1], [0], [0], [1], [0, 0, 1, 1], [], []>} : vector<4x4xf32>, vector<4x324xf32>, vector<4x324xf32> -> vector<4x324xf32>
    %31 = arith.addf %25, %30 : vector<4x324xf32>
    %c3 = arith.constant 3 : index
    %c0_24 = arith.constant 0 : index
    %c0_25 = arith.constant 0 : index
    %32 = vector.load %arg4[%c3, %c0_24, %c0_25] : memref<9x4x4xf32, #tpu.memory_space<vmem>>, vector<1x4x4xf32>
    %33 = vector.shape_cast %32 : vector<1x4x4xf32> to vector<4x4xf32>
    %c0_26 = arith.constant 0 : index
    %c0_27 = arith.constant 0 : index
    %c18 = arith.constant 18 : index
    %34 = vector.load %arg3[%c0_26, %c0_27, %c18] : memref<1x4x362xf32, #tpu.memory_space<vmem>>, vector<1x4x324xf32>
    %35 = vector.shape_cast %34 : vector<1x4x324xf32> to vector<4x324xf32>
    %cst_28 = arith.constant dense<0.000000e+00> : vector<4x324xf32>
    %36 = tpu.matmul %33, %35, %cst_28 {dimension_numbers = #tpu.dot_dimension_numbers<[1], [0], [0], [1], [0, 0, 1, 1], [], []>} : vector<4x4xf32>, vector<4x324xf32>, vector<4x324xf32> -> vector<4x324xf32>
    %37 = arith.addf %31, %36 : vector<4x324xf32>
    %c4 = arith.constant 4 : index
    %c0_29 = arith.constant 0 : index
    %c0_30 = arith.constant 0 : index
    %38 = vector.load %arg4[%c4, %c0_29, %c0_30] : memref<9x4x4xf32, #tpu.memory_space<vmem>>, vector<1x4x4xf32>
    %39 = vector.shape_cast %38 : vector<1x4x4xf32> to vector<4x4xf32>
    %c0_31 = arith.constant 0 : index
    %c0_32 = arith.constant 0 : index
    %c19 = arith.constant 19 : index
    %40 = vector.load %arg3[%c0_31, %c0_32, %c19] : memref<1x4x362xf32, #tpu.memory_space<vmem>>, vector<1x4x324xf32>
    %41 = vector.shape_cast %40 : vector<1x4x324xf32> to vector<4x324xf32>
    %cst_33 = arith.constant dense<0.000000e+00> : vector<4x324xf32>
    %42 = tpu.matmul %39, %41, %cst_33 {dimension_numbers = #tpu.dot_dimension_numbers<[1], [0], [0], [1], [0, 0, 1, 1], [], []>} : vector<4x4xf32>, vector<4x324xf32>, vector<4x324xf32> -> vector<4x324xf32>
    %43 = arith.addf %37, %42 : vector<4x324xf32>
    %c5 = arith.constant 5 : index
    %c0_34 = arith.constant 0 : index
    %c0_35 = arith.constant 0 : index
    %44 = vector.load %arg4[%c5, %c0_34, %c0_35] : memref<9x4x4xf32, #tpu.memory_space<vmem>>, vector<1x4x4xf32>
    %45 = vector.shape_cast %44 : vector<1x4x4xf32> to vector<4x4xf32>
    %c0_36 = arith.constant 0 : index
    %c0_37 = arith.constant 0 : index
    %c20 = arith.constant 20 : index
    %46 = vector.load %arg3[%c0_36, %c0_37, %c20] : memref<1x4x362xf32, #tpu.memory_space<vmem>>, vector<1x4x324xf32>
    %47 = vector.shape_cast %46 : vector<1x4x324xf32> to vector<4x324xf32>
    %cst_38 = arith.constant dense<0.000000e+00> : vector<4x324xf32>
    %48 = tpu.matmul %45, %47, %cst_38 {dimension_numbers = #tpu.dot_dimension_numbers<[1], [0], [0], [1], [0, 0, 1, 1], [], []>} : vector<4x4xf32>, vector<4x324xf32>, vector<4x324xf32> -> vector<4x324xf32>
    %49 = arith.addf %43, %48 : vector<4x324xf32>
    %c6 = arith.constant 6 : index
    %c0_39 = arith.constant 0 : index
    %c0_40 = arith.constant 0 : index
    %50 = vector.load %arg4[%c6, %c0_39, %c0_40] : memref<9x4x4xf32, #tpu.memory_space<vmem>>, vector<1x4x4xf32>
    %51 = vector.shape_cast %50 : vector<1x4x4xf32> to vector<4x4xf32>
    %c0_41 = arith.constant 0 : index
    %c0_42 = arith.constant 0 : index
    %c36 = arith.constant 36 : index
    %52 = vector.load %arg3[%c0_41, %c0_42, %c36] : memref<1x4x362xf32, #tpu.memory_space<vmem>>, vector<1x4x324xf32>
    %53 = vector.shape_cast %52 : vector<1x4x324xf32> to vector<4x324xf32>
    %cst_43 = arith.constant dense<0.000000e+00> : vector<4x324xf32>
    %54 = tpu.matmul %51, %53, %cst_43 {dimension_numbers = #tpu.dot_dimension_numbers<[1], [0], [0], [1], [0, 0, 1, 1], [], []>} : vector<4x4xf32>, vector<4x324xf32>, vector<4x324xf32> -> vector<4x324xf32>
    %55 = arith.addf %49, %54 : vector<4x324xf32>
    %c7 = arith.constant 7 : index
    %c0_44 = arith.constant 0 : index
    %c0_45 = arith.constant 0 : index
    %56 = vector.load %arg4[%c7, %c0_44, %c0_45] : memref<9x4x4xf32, #tpu.memory_space<vmem>>, vector<1x4x4xf32>
    %57 = vector.shape_cast %56 : vector<1x4x4xf32> to vector<4x4xf32>
    %c0_46 = arith.constant 0 : index
    %c0_47 = arith.constant 0 : index
    %c37 = arith.constant 37 : index
    %58 = vector.load %arg3[%c0_46, %c0_47, %c37] : memref<1x4x362xf32, #tpu.memory_space<vmem>>, vector<1x4x324xf32>
    %59 = vector.shape_cast %58 : vector<1x4x324xf32> to vector<4x324xf32>
    %cst_48 = arith.constant dense<0.000000e+00> : vector<4x324xf32>
    %60 = tpu.matmul %57, %59, %cst_48 {dimension_numbers = #tpu.dot_dimension_numbers<[1], [0], [0], [1], [0, 0, 1, 1], [], []>} : vector<4x4xf32>, vector<4x324xf32>, vector<4x324xf32> -> vector<4x324xf32>
    %61 = arith.addf %55, %60 : vector<4x324xf32>
    %c8 = arith.constant 8 : index
    %c0_49 = arith.constant 0 : index
    %c0_50 = arith.constant 0 : index
    %62 = vector.load %arg4[%c8, %c0_49, %c0_50] : memref<9x4x4xf32, #tpu.memory_space<vmem>>, vector<1x4x4xf32>
    %63 = vector.shape_cast %62 : vector<1x4x4xf32> to vector<4x4xf32>
    %c0_51 = arith.constant 0 : index
    %c0_52 = arith.constant 0 : index
    %c38 = arith.constant 38 : index
    %64 = vector.load %arg3[%c0_51, %c0_52, %c38] : memref<1x4x362xf32, #tpu.memory_space<vmem>>, vector<1x4x324xf32>
    %65 = vector.shape_cast %64 : vector<1x4x324xf32> to vector<4x324xf32>
    %cst_53 = arith.constant dense<0.000000e+00> : vector<4x324xf32>
    %66 = tpu.matmul %63, %65, %cst_53 {dimension_numbers = #tpu.dot_dimension_numbers<[1], [0], [0], [1], [0, 0, 1, 1], [], []>} : vector<4x4xf32>, vector<4x324xf32>, vector<4x324xf32> -> vector<4x324xf32>
    %67 = arith.addf %61, %66 : vector<4x324xf32>
    %c0_54 = arith.constant 0 : index
    %c0_55 = arith.constant 0 : index
    %68 = vector.load %arg5[%c0_54, %c0_55] : memref<4x1xf32, #tpu.memory_space<vmem>>, vector<4x1xf32>
    %69 = vector.broadcast %68 : vector<4x1xf32> to vector<4x324xf32>
    %70 = arith.addf %67, %69 : vector<4x324xf32>
    %cst_56 = arith.constant 0.000000e+00 : f32
    %71 = vector.shape_cast %12 : vector<1x324xi1> to vector<1x324xi1>
    %72 = vector.broadcast %71 : vector<1x324xi1> to vector<4x324xi1>
    %73 = vector.broadcast %cst_56 : f32 to vector<4x324xf32>
    %74 = arith.select %72, %70, %73 : vector<4x324xi1>, vector<4x324xf32>
    %cst_57 = arith.constant dense<0.000000e+00> : vector<4xf32>
    %75 = vector.multi_reduction <add>, %74, %cst_57 [1] : vector<4x324xf32> to vector<4xf32>
    %76 = vector.shape_cast %75 : vector<4xf32> to vector<4x1xf32>
    %cst_58 = arith.constant 2.560000e+02 : f32
    %77 = vector.broadcast %cst_58 : f32 to vector<4x1xf32>
    %78 = arith.divf %76, %77 : vector<4x1xf32>
    %79 = vector.broadcast %78 : vector<4x1xf32> to vector<4x324xf32>
    %80 = arith.subf %70, %79 : vector<4x324xf32>
    %81 = arith.mulf %80, %80 : vector<4x324xf32>
    %cst_59 = arith.constant 0.000000e+00 : f32
    %82 = vector.shape_cast %12 : vector<1x324xi1> to vector<1x324xi1>
    %83 = vector.broadcast %82 : vector<1x324xi1> to vector<4x324xi1>
    %84 = vector.broadcast %cst_59 : f32 to vector<4x324xf32>
    %85 = arith.select %83, %81, %84 : vector<4x324xi1>, vector<4x324xf32>
    %cst_60 = arith.constant dense<0.000000e+00> : vector<4xf32>
    %86 = vector.multi_reduction <add>, %85, %cst_60 [1] : vector<4x324xf32> to vector<4xf32>
    %87 = vector.shape_cast %86 : vector<4xf32> to vector<4x1xf32>
    %cst_61 = arith.constant 2.560000e+02 : f32
    %88 = vector.broadcast %cst_61 : f32 to vector<4x1xf32>
    %89 = arith.divf %87, %88 : vector<4x1xf32>
    %cst_62 = arith.constant 9.99999974E-6 : f32
    %90 = vector.broadcast %cst_62 : f32 to vector<4x1xf32>
    %91 = arith.addf %89, %90 : vector<4x1xf32>
    %92 = math.rsqrt %91 : vector<4x1xf32>
    %93 = vector.broadcast %92 : vector<4x1xf32> to vector<4x324xf32>
    %94 = arith.mulf %80, %93 : vector<4x324xf32>
    %cst_63 = arith.constant 0.000000e+00 : f32
    %95 = vector.broadcast %cst_63 : f32 to vector<4x324xf32>
    %96 = arith.maximumf %94, %95 : vector<4x324xf32>
    %cst_64 = arith.constant 0.000000e+00 : f32
    %97 = vector.broadcast %cst_64 : f32 to vector<4x19xf32>
    %c0_65 = arith.constant 0 : index
    %c0_66 = arith.constant 0 : index
    %98 = vector.load %arg9[%c0_65, %c0_66] : memref<4x362xf32, #tpu.memory_space<vmem>>, vector<4x19xf32>
    tpu.vector_store %arg9[%c0_65, %c0_66], %97 {strides = array<i32>} : memref<4x362xf32, #tpu.memory_space<vmem>>, vector<4x19xf32>,
    %c0_67 = arith.constant 0 : index
    %c343 = arith.constant 343 : index
    %99 = vector.load %arg9[%c0_67, %c343] : memref<4x362xf32, #tpu.memory_space<vmem>>, vector<4x19xf32>
    tpu.vector_store %arg9[%c0_67, %c343], %97 {strides = array<i32>} : memref<4x362xf32, #tpu.memory_space<vmem>>, vector<4x19xf32>,
    %c0_68 = arith.constant 0 : index
    %c19_69 = arith.constant 19 : index
    %100 = vector.load %arg9[%c0_68, %c19_69] : memref<4x362xf32, #tpu.memory_space<vmem>>, vector<4x324xf32>
    tpu.vector_store %arg9[%c0_68, %c19_69], %96 {strides = array<i32>} : memref<4x362xf32, #tpu.memory_space<vmem>>, vector<4x324xf32>,
    %c0_70 = arith.constant 0 : index
    %c21 = arith.constant 21 : index
    %101 = vector.load %arg9[%c0_70, %c21] : memref<4x362xf32, #tpu.memory_space<vmem>>, vector<4x324xf32>
    %c0_71 = arith.constant 0 : index
    %c17 = arith.constant 17 : index
    %102 = vector.load %arg9[%c0_71, %c17] : memref<4x362xf32, #tpu.memory_space<vmem>>, vector<4x324xf32>
    %c0_i32 = arith.constant 0 : i32
    %103 = vector.broadcast %c0_i32 : i32 to vector<1x324xi32>
    %104 = arith.cmpi eq, %1, %103 : vector<1x324xi32>
    %c17_i32 = arith.constant 17 : i32
    %105 = vector.broadcast %c17_i32 : i32 to vector<1x324xi32>
    %106 = arith.cmpi eq, %1, %105 : vector<1x324xi32>
    %107 = vector.shape_cast %106 : vector<1x324xi1> to vector<1x324xi1>
    %108 = vector.broadcast %107 : vector<1x324xi1> to vector<4x324xi1>
    %109 = arith.select %108, %102, %96 : vector<4x324xi1>, vector<4x324xf32>
    %110 = vector.shape_cast %104 : vector<1x324xi1> to vector<1x324xi1>
    %111 = vector.broadcast %110 : vector<1x324xi1> to vector<4x324xi1>
    %112 = arith.select %111, %101, %109 : vector<4x324xi1>, vector<4x324xf32>
    %c0_72 = arith.constant 0 : index
    %c19_73 = arith.constant 19 : index
    %113 = vector.load %arg9[%c0_72, %c19_73] : memref<4x362xf32, #tpu.memory_space<vmem>>, vector<4x324xf32>
    tpu.vector_store %arg9[%c0_72, %c19_73], %112 {strides = array<i32>} : memref<4x362xf32, #tpu.memory_space<vmem>>, vector<4x324xf32>,
    %c0_74 = arith.constant 0 : index
    %c55 = arith.constant 55 : index
    %114 = vector.load %arg9[%c0_74, %c55] : memref<4x362xf32, #tpu.memory_space<vmem>>, vector<4x18xf32>
    %c0_75 = arith.constant 0 : index
    %c19_76 = arith.constant 19 : index
    %115 = vector.load %arg9[%c0_75, %c19_76] : memref<4x362xf32, #tpu.memory_space<vmem>>, vector<4x18xf32>
    tpu.vector_store %arg9[%c0_75, %c19_76], %114 {strides = array<i32>} : memref<4x362xf32, #tpu.memory_space<vmem>>, vector<4x18xf32>,
    %c0_77 = arith.constant 0 : index
    %c289 = arith.constant 289 : index
    %116 = vector.load %arg9[%c0_77, %c289] : memref<4x362xf32, #tpu.memory_space<vmem>>, vector<4x18xf32>
    %c0_78 = arith.constant 0 : index
    %c325 = arith.constant 325 : index
    %117 = vector.load %arg9[%c0_78, %c325] : memref<4x362xf32, #tpu.memory_space<vmem>>, vector<4x18xf32>
    tpu.vector_store %arg9[%c0_78, %c325], %116 {strides = array<i32>} : memref<4x362xf32, #tpu.memory_space<vmem>>, vector<4x18xf32>,
    %cst_79 = arith.constant 0.000000e+00 : f32
    %118 = vector.broadcast %cst_79 : f32 to vector<4x324xf32>
    %c0_80 = arith.constant 0 : index
    %c0_81 = arith.constant 0 : index
    %c0_82 = arith.constant 0 : index
    %119 = vector.load %arg6[%c0_80, %c0_81, %c0_82] : memref<9x4x4xf32, #tpu.memory_space<vmem>>, vector<1x4x4xf32>
    %120 = vector.shape_cast %119 : vector<1x4x4xf32> to vector<4x4xf32>
    %c0_83 = arith.constant 0 : index
    %c0_84 = arith.constant 0 : index
    %121 = vector.load %arg9[%c0_83, %c0_84] : memref<4x362xf32, #tpu.memory_space<vmem>>, vector<4x324xf32>
    %cst_85 = arith.constant dense<0.000000e+00> : vector<4x324xf32>
    %122 = tpu.matmul %120, %121, %cst_85 {dimension_numbers = #tpu.dot_dimension_numbers<[1], [0], [0], [1], [0, 0, 1, 1], [], []>} : vector<4x4xf32>, vector<4x324xf32>, vector<4x324xf32> -> vector<4x324xf32>
    %123 = arith.addf %118, %122 : vector<4x324xf32>
    %c1_86 = arith.constant 1 : index
    %c0_87 = arith.constant 0 : index
    %c0_88 = arith.constant 0 : index
    %124 = vector.load %arg6[%c1_86, %c0_87, %c0_88] : memref<9x4x4xf32, #tpu.memory_space<vmem>>, vector<1x4x4xf32>
    %125 = vector.shape_cast %124 : vector<1x4x4xf32> to vector<4x4xf32>
    %c0_89 = arith.constant 0 : index
    %c1_90 = arith.constant 1 : index
    %126 = vector.load %arg9[%c0_89, %c1_90] : memref<4x362xf32, #tpu.memory_space<vmem>>, vector<4x324xf32>
    %cst_91 = arith.constant dense<0.000000e+00> : vector<4x324xf32>
    %127 = tpu.matmul %125, %126, %cst_91 {dimension_numbers = #tpu.dot_dimension_numbers<[1], [0], [0], [1], [0, 0, 1, 1], [], []>} : vector<4x4xf32>, vector<4x324xf32>, vector<4x324xf32> -> vector<4x324xf32>
    %128 = arith.addf %123, %127 : vector<4x324xf32>
    %c2_92 = arith.constant 2 : index
    %c0_93 = arith.constant 0 : index
    %c0_94 = arith.constant 0 : index
    %129 = vector.load %arg6[%c2_92, %c0_93, %c0_94] : memref<9x4x4xf32, #tpu.memory_space<vmem>>, vector<1x4x4xf32>
    %130 = vector.shape_cast %129 : vector<1x4x4xf32> to vector<4x4xf32>
    %c0_95 = arith.constant 0 : index
    %c2_96 = arith.constant 2 : index
    %131 = vector.load %arg9[%c0_95, %c2_96] : memref<4x362xf32, #tpu.memory_space<vmem>>, vector<4x324xf32>
    %cst_97 = arith.constant dense<0.000000e+00> : vector<4x324xf32>
    %132 = tpu.matmul %130, %131, %cst_97 {dimension_numbers = #tpu.dot_dimension_numbers<[1], [0], [0], [1], [0, 0, 1, 1], [], []>} : vector<4x4xf32>, vector<4x324xf32>, vector<4x324xf32> -> vector<4x324xf32>
    %133 = arith.addf %128, %132 : vector<4x324xf32>
    %c3_98 = arith.constant 3 : index
    %c0_99 = arith.constant 0 : index
    %c0_100 = arith.constant 0 : index
    %134 = vector.load %arg6[%c3_98, %c0_99, %c0_100] : memref<9x4x4xf32, #tpu.memory_space<vmem>>, vector<1x4x4xf32>
    %135 = vector.shape_cast %134 : vector<1x4x4xf32> to vector<4x4xf32>
    %c0_101 = arith.constant 0 : index
    %c18_102 = arith.constant 18 : index
    %136 = vector.load %arg9[%c0_101, %c18_102] : memref<4x362xf32, #tpu.memory_space<vmem>>, vector<4x324xf32>
    %cst_103 = arith.constant dense<0.000000e+00> : vector<4x324xf32>
    %137 = tpu.matmul %135, %136, %cst_103 {dimension_numbers = #tpu.dot_dimension_numbers<[1], [0], [0], [1], [0, 0, 1, 1], [], []>} : vector<4x4xf32>, vector<4x324xf32>, vector<4x324xf32> -> vector<4x324xf32>
    %138 = arith.addf %133, %137 : vector<4x324xf32>
    %c4_104 = arith.constant 4 : index
    %c0_105 = arith.constant 0 : index
    %c0_106 = arith.constant 0 : index
    %139 = vector.load %arg6[%c4_104, %c0_105, %c0_106] : memref<9x4x4xf32, #tpu.memory_space<vmem>>, vector<1x4x4xf32>
    %140 = vector.shape_cast %139 : vector<1x4x4xf32> to vector<4x4xf32>
    %c0_107 = arith.constant 0 : index
    %c19_108 = arith.constant 19 : index
    %141 = vector.load %arg9[%c0_107, %c19_108] : memref<4x362xf32, #tpu.memory_space<vmem>>, vector<4x324xf32>
    %cst_109 = arith.constant dense<0.000000e+00> : vector<4x324xf32>
    %142 = tpu.matmul %140, %141, %cst_109 {dimension_numbers = #tpu.dot_dimension_numbers<[1], [0], [0], [1], [0, 0, 1, 1], [], []>} : vector<4x4xf32>, vector<4x324xf32>, vector<4x324xf32> -> vector<4x324xf32>
    %143 = arith.addf %138, %142 : vector<4x324xf32>
    %c5_110 = arith.constant 5 : index
    %c0_111 = arith.constant 0 : index
    %c0_112 = arith.constant 0 : index
    %144 = vector.load %arg6[%c5_110, %c0_111, %c0_112] : memref<9x4x4xf32, #tpu.memory_space<vmem>>, vector<1x4x4xf32>
    %145 = vector.shape_cast %144 : vector<1x4x4xf32> to vector<4x4xf32>
    %c0_113 = arith.constant 0 : index
    %c20_114 = arith.constant 20 : index
    %146 = vector.load %arg9[%c0_113, %c20_114] : memref<4x362xf32, #tpu.memory_space<vmem>>, vector<4x324xf32>
    %cst_115 = arith.constant dense<0.000000e+00> : vector<4x324xf32>
    %147 = tpu.matmul %145, %146, %cst_115 {dimension_numbers = #tpu.dot_dimension_numbers<[1], [0], [0], [1], [0, 0, 1, 1], [], []>} : vector<4x4xf32>, vector<4x324xf32>, vector<4x324xf32> -> vector<4x324xf32>
    %148 = arith.addf %143, %147 : vector<4x324xf32>
    %c6_116 = arith.constant 6 : index
    %c0_117 = arith.constant 0 : index
    %c0_118 = arith.constant 0 : index
    %149 = vector.load %arg6[%c6_116, %c0_117, %c0_118] : memref<9x4x4xf32, #tpu.memory_space<vmem>>, vector<1x4x4xf32>
    %150 = vector.shape_cast %149 : vector<1x4x4xf32> to vector<4x4xf32>
    %c0_119 = arith.constant 0 : index
    %c36_120 = arith.constant 36 : index
    %151 = vector.load %arg9[%c0_119, %c36_120] : memref<4x362xf32, #tpu.memory_space<vmem>>, vector<4x324xf32>
    %cst_121 = arith.constant dense<0.000000e+00> : vector<4x324xf32>
    %152 = tpu.matmul %150, %151, %cst_121 {dimension_numbers = #tpu.dot_dimension_numbers<[1], [0], [0], [1], [0, 0, 1, 1], [], []>} : vector<4x4xf32>, vector<4x324xf32>, vector<4x324xf32> -> vector<4x324xf32>
    %153 = arith.addf %148, %152 : vector<4x324xf32>
    %c7_122 = arith.constant 7 : index
    %c0_123 = arith.constant 0 : index
    %c0_124 = arith.constant 0 : index
    %154 = vector.load %arg6[%c7_122, %c0_123, %c0_124] : memref<9x4x4xf32, #tpu.memory_space<vmem>>, vector<1x4x4xf32>
    %155 = vector.shape_cast %154 : vector<1x4x4xf32> to vector<4x4xf32>
    %c0_125 = arith.constant 0 : index
    %c37_126 = arith.constant 37 : index
    %156 = vector.load %arg9[%c0_125, %c37_126] : memref<4x362xf32, #tpu.memory_space<vmem>>, vector<4x324xf32>
    %cst_127 = arith.constant dense<0.000000e+00> : vector<4x324xf32>
    %157 = tpu.matmul %155, %156, %cst_127 {dimension_numbers = #tpu.dot_dimension_numbers<[1], [0], [0], [1], [0, 0, 1, 1], [], []>} : vector<4x4xf32>, vector<4x324xf32>, vector<4x324xf32> -> vector<4x324xf32>
    %158 = arith.addf %153, %157 : vector<4x324xf32>
    %c8_128 = arith.constant 8 : index
    %c0_129 = arith.constant 0 : index
    %c0_130 = arith.constant 0 : index
    %159 = vector.load %arg6[%c8_128, %c0_129, %c0_130] : memref<9x4x4xf32, #tpu.memory_space<vmem>>, vector<1x4x4xf32>
    %160 = vector.shape_cast %159 : vector<1x4x4xf32> to vector<4x4xf32>
    %c0_131 = arith.constant 0 : index
    %c38_132 = arith.constant 38 : index
    %161 = vector.load %arg9[%c0_131, %c38_132] : memref<4x362xf32, #tpu.memory_space<vmem>>, vector<4x324xf32>
    %cst_133 = arith.constant dense<0.000000e+00> : vector<4x324xf32>
    %162 = tpu.matmul %160, %161, %cst_133 {dimension_numbers = #tpu.dot_dimension_numbers<[1], [0], [0], [1], [0, 0, 1, 1], [], []>} : vector<4x4xf32>, vector<4x324xf32>, vector<4x324xf32> -> vector<4x324xf32>
    %163 = arith.addf %158, %162 : vector<4x324xf32>
    %c0_134 = arith.constant 0 : index
    %c0_135 = arith.constant 0 : index
    %164 = vector.load %arg7[%c0_134, %c0_135] : memref<4x1xf32, #tpu.memory_space<vmem>>, vector<4x1xf32>
    %165 = vector.broadcast %164 : vector<4x1xf32> to vector<4x324xf32>
    %166 = arith.addf %163, %165 : vector<4x324xf32>
    %cst_136 = arith.constant 0.000000e+00 : f32
    %167 = vector.shape_cast %12 : vector<1x324xi1> to vector<1x324xi1>
    %168 = vector.broadcast %167 : vector<1x324xi1> to vector<4x324xi1>
    %169 = vector.broadcast %cst_136 : f32 to vector<4x324xf32>
    %170 = arith.select %168, %166, %169 : vector<4x324xi1>, vector<4x324xf32>
    %cst_137 = arith.constant dense<0.000000e+00> : vector<4xf32>
    %171 = vector.multi_reduction <add>, %170, %cst_137 [1] : vector<4x324xf32> to vector<4xf32>
    %172 = vector.shape_cast %171 : vector<4xf32> to vector<4x1xf32>
    %cst_138 = arith.constant 2.560000e+02 : f32
    %173 = vector.broadcast %cst_138 : f32 to vector<4x1xf32>
    %174 = arith.divf %172, %173 : vector<4x1xf32>
    %175 = vector.broadcast %174 : vector<4x1xf32> to vector<4x324xf32>
    %176 = arith.subf %166, %175 : vector<4x324xf32>
    %177 = arith.mulf %176, %176 : vector<4x324xf32>
    %cst_139 = arith.constant 0.000000e+00 : f32
    %178 = vector.shape_cast %12 : vector<1x324xi1> to vector<1x324xi1>
    %179 = vector.broadcast %178 : vector<1x324xi1> to vector<4x324xi1>
    %180 = vector.broadcast %cst_139 : f32 to vector<4x324xf32>
    %181 = arith.select %179, %177, %180 : vector<4x324xi1>, vector<4x324xf32>
    %cst_140 = arith.constant dense<0.000000e+00> : vector<4xf32>
    %182 = vector.multi_reduction <add>, %181, %cst_140 [1] : vector<4x324xf32> to vector<4xf32>
    %183 = vector.shape_cast %182 : vector<4xf32> to vector<4x1xf32>
    %cst_141 = arith.constant 2.560000e+02 : f32
    %184 = vector.broadcast %cst_141 : f32 to vector<4x1xf32>
    %185 = arith.divf %183, %184 : vector<4x1xf32>
    %cst_142 = arith.constant 9.99999974E-6 : f32
    %186 = vector.broadcast %cst_142 : f32 to vector<4x1xf32>
    %187 = arith.addf %185, %186 : vector<4x1xf32>
    %188 = math.rsqrt %187 : vector<4x1xf32>
    %189 = vector.broadcast %188 : vector<4x1xf32> to vector<4x324xf32>
    %190 = arith.mulf %176, %189 : vector<4x324xf32>
    %c0_143 = arith.constant 0 : index
    %c0_144 = arith.constant 0 : index
    %c19_145 = arith.constant 19 : index
    %191 = vector.load %arg3[%c0_143, %c0_144, %c19_145] : memref<1x4x362xf32, #tpu.memory_space<vmem>>, vector<1x4x324xf32>
    %192 = vector.shape_cast %191 : vector<1x4x324xf32> to vector<4x324xf32>
    %193 = arith.addf %190, %192 : vector<4x324xf32>
    %194 = vector.extract_strided_slice %193 {offsets = [0, 19], sizes = [4, 16], strides = [1, 1]} : vector<4x324xf32> to vector<4x16xf32>
    %c0_146 = arith.constant 0 : index
    %c0_147 = arith.constant 0 : index
    %c0_148 = arith.constant 0 : index
    %195 = vector.load %arg8[%c0_146, %c0_147, %c0_148] : memref<1x4x256xf32, #tpu.memory_space<vmem>>, vector<1x4x16xf32>
    %196 = vector.shape_cast %195 : vector<1x4x16xf32> to vector<4x16xf32>
    %197 = vector.shape_cast %194 : vector<4x16xf32> to vector<1x4x16xf32>
    tpu.vector_store %arg8[%c0_146, %c0_147, %c0_148], %197 {strides = array<i32>} : memref<1x4x256xf32, #tpu.memory_space<vmem>>, vector<1x4x16xf32>,
    %198 = vector.extract_strided_slice %193 {offsets = [0, 37], sizes = [4, 16], strides = [1, 1]} : vector<4x324xf32> to vector<4x16xf32>
    %c0_149 = arith.constant 0 : index
    %c0_150 = arith.constant 0 : index
    %c16 = arith.constant 16 : index
    %199 = vector.load %arg8[%c0_149, %c0_150, %c16] : memref<1x4x256xf32, #tpu.memory_space<vmem>>, vector<1x4x16xf32>
    %200 = vector.shape_cast %199 : vector<1x4x16xf32> to vector<4x16xf32>
    %201 = vector.shape_cast %198 : vector<4x16xf32> to vector<1x4x16xf32>
    tpu.vector_store %arg8[%c0_149, %c0_150, %c16], %201 {strides = array<i32>} : memref<1x4x256xf32, #tpu.memory_space<vmem>>, vector<1x4x16xf32>,
    %202 = vector.extract_strided_slice %193 {offsets = [0, 55], sizes = [4, 16], strides = [1, 1]} : vector<4x324xf32> to vector<4x16xf32>
    %c0_151 = arith.constant 0 : index
    %c0_152 = arith.constant 0 : index
    %c32 = arith.constant 32 : index
    %203 = vector.load %arg8[%c0_151, %c0_152, %c32] : memref<1x4x256xf32, #tpu.memory_space<vmem>>, vector<1x4x16xf32>
    %204 = vector.shape_cast %203 : vector<1x4x16xf32> to vector<4x16xf32>
    %205 = vector.shape_cast %202 : vector<4x16xf32> to vector<1x4x16xf32>
    tpu.vector_store %arg8[%c0_151, %c0_152, %c32], %205 {strides = array<i32>} : memref<1x4x256xf32, #tpu.memory_space<vmem>>, vector<1x4x16xf32>,
    %206 = vector.extract_strided_slice %193 {offsets = [0, 73], sizes = [4, 16], strides = [1, 1]} : vector<4x324xf32> to vector<4x16xf32>
    %c0_153 = arith.constant 0 : index
    %c0_154 = arith.constant 0 : index
    %c48 = arith.constant 48 : index
    %207 = vector.load %arg8[%c0_153, %c0_154, %c48] : memref<1x4x256xf32, #tpu.memory_space<vmem>>, vector<1x4x16xf32>
    %208 = vector.shape_cast %207 : vector<1x4x16xf32> to vector<4x16xf32>
    %209 = vector.shape_cast %206 : vector<4x16xf32> to vector<1x4x16xf32>
    tpu.vector_store %arg8[%c0_153, %c0_154, %c48], %209 {strides = array<i32>} : memref<1x4x256xf32, #tpu.memory_space<vmem>>, vector<1x4x16xf32>,
    %210 = vector.extract_strided_slice %193 {offsets = [0, 91], sizes = [4, 16], strides = [1, 1]} : vector<4x324xf32> to vector<4x16xf32>
    %c0_155 = arith.constant 0 : index
    %c0_156 = arith.constant 0 : index
    %c64 = arith.constant 64 : index
    %211 = vector.load %arg8[%c0_155, %c0_156, %c64] : memref<1x4x256xf32, #tpu.memory_space<vmem>>, vector<1x4x16xf32>
    %212 = vector.shape_cast %211 : vector<1x4x16xf32> to vector<4x16xf32>
    %213 = vector.shape_cast %210 : vector<4x16xf32> to vector<1x4x16xf32>
    tpu.vector_store %arg8[%c0_155, %c0_156, %c64], %213 {strides = array<i32>} : memref<1x4x256xf32, #tpu.memory_space<vmem>>, vector<1x4x16xf32>,
    %214 = vector.extract_strided_slice %193 {offsets = [0, 109], sizes = [4, 16], strides = [1, 1]} : vector<4x324xf32> to vector<4x16xf32>
    %c0_157 = arith.constant 0 : index
    %c0_158 = arith.constant 0 : index
    %c80 = arith.constant 80 : index
    %215 = vector.load %arg8[%c0_157, %c0_158, %c80] : memref<1x4x256xf32, #tpu.memory_space<vmem>>, vector<1x4x16xf32>
    %216 = vector.shape_cast %215 : vector<1x4x16xf32> to vector<4x16xf32>
    %217 = vector.shape_cast %214 : vector<4x16xf32> to vector<1x4x16xf32>
    tpu.vector_store %arg8[%c0_157, %c0_158, %c80], %217 {strides = array<i32>} : memref<1x4x256xf32, #tpu.memory_space<vmem>>, vector<1x4x16xf32>,
    %218 = vector.extract_strided_slice %193 {offsets = [0, 127], sizes = [4, 16], strides = [1, 1]} : vector<4x324xf32> to vector<4x16xf32>
    %c0_159 = arith.constant 0 : index
    %c0_160 = arith.constant 0 : index
    %c96 = arith.constant 96 : index
    %219 = vector.load %arg8[%c0_159, %c0_160, %c96] : memref<1x4x256xf32, #tpu.memory_space<vmem>>, vector<1x4x16xf32>
    %220 = vector.shape_cast %219 : vector<1x4x16xf32> to vector<4x16xf32>
    %221 = vector.shape_cast %218 : vector<4x16xf32> to vector<1x4x16xf32>
    tpu.vector_store %arg8[%c0_159, %c0_160, %c96], %221 {strides = array<i32>} : memref<1x4x256xf32, #tpu.memory_space<vmem>>, vector<1x4x16xf32>,
    %222 = vector.extract_strided_slice %193 {offsets = [0, 145], sizes = [4, 16], strides = [1, 1]} : vector<4x324xf32> to vector<4x16xf32>
    %c0_161 = arith.constant 0 : index
    %c0_162 = arith.constant 0 : index
    %c112 = arith.constant 112 : index
    %223 = vector.load %arg8[%c0_161, %c0_162, %c112] : memref<1x4x256xf32, #tpu.memory_space<vmem>>, vector<1x4x16xf32>
    %224 = vector.shape_cast %223 : vector<1x4x16xf32> to vector<4x16xf32>
    %225 = vector.shape_cast %222 : vector<4x16xf32> to vector<1x4x16xf32>
    tpu.vector_store %arg8[%c0_161, %c0_162, %c112], %225 {strides = array<i32>} : memref<1x4x256xf32, #tpu.memory_space<vmem>>, vector<1x4x16xf32>,
    %226 = vector.extract_strided_slice %193 {offsets = [0, 163], sizes = [4, 16], strides = [1, 1]} : vector<4x324xf32> to vector<4x16xf32>
    %c0_163 = arith.constant 0 : index
    %c0_164 = arith.constant 0 : index
    %c128 = arith.constant 128 : index
    %227 = vector.load %arg8[%c0_163, %c0_164, %c128] : memref<1x4x256xf32, #tpu.memory_space<vmem>>, vector<1x4x16xf32>
    %228 = vector.shape_cast %227 : vector<1x4x16xf32> to vector<4x16xf32>
    %229 = vector.shape_cast %226 : vector<4x16xf32> to vector<1x4x16xf32>
    tpu.vector_store %arg8[%c0_163, %c0_164, %c128], %229 {strides = array<i32>} : memref<1x4x256xf32, #tpu.memory_space<vmem>>, vector<1x4x16xf32>,
    %230 = vector.extract_strided_slice %193 {offsets = [0, 181], sizes = [4, 16], strides = [1, 1]} : vector<4x324xf32> to vector<4x16xf32>
    %c0_165 = arith.constant 0 : index
    %c0_166 = arith.constant 0 : index
    %c144 = arith.constant 144 : index
    %231 = vector.load %arg8[%c0_165, %c0_166, %c144] : memref<1x4x256xf32, #tpu.memory_space<vmem>>, vector<1x4x16xf32>
    %232 = vector.shape_cast %231 : vector<1x4x16xf32> to vector<4x16xf32>
    %233 = vector.shape_cast %230 : vector<4x16xf32> to vector<1x4x16xf32>
    tpu.vector_store %arg8[%c0_165, %c0_166, %c144], %233 {strides = array<i32>} : memref<1x4x256xf32, #tpu.memory_space<vmem>>, vector<1x4x16xf32>,
    %234 = vector.extract_strided_slice %193 {offsets = [0, 199], sizes = [4, 16], strides = [1, 1]} : vector<4x324xf32> to vector<4x16xf32>
    %c0_167 = arith.constant 0 : index
    %c0_168 = arith.constant 0 : index
    %c160 = arith.constant 160 : index
    %235 = vector.load %arg8[%c0_167, %c0_168, %c160] : memref<1x4x256xf32, #tpu.memory_space<vmem>>, vector<1x4x16xf32>
    %236 = vector.shape_cast %235 : vector<1x4x16xf32> to vector<4x16xf32>
    %237 = vector.shape_cast %234 : vector<4x16xf32> to vector<1x4x16xf32>
    tpu.vector_store %arg8[%c0_167, %c0_168, %c160], %237 {strides = array<i32>} : memref<1x4x256xf32, #tpu.memory_space<vmem>>, vector<1x4x16xf32>,
    %238 = vector.extract_strided_slice %193 {offsets = [0, 217], sizes = [4, 16], strides = [1, 1]} : vector<4x324xf32> to vector<4x16xf32>
    %c0_169 = arith.constant 0 : index
    %c0_170 = arith.constant 0 : index
    %c176 = arith.constant 176 : index
    %239 = vector.load %arg8[%c0_169, %c0_170, %c176] : memref<1x4x256xf32, #tpu.memory_space<vmem>>, vector<1x4x16xf32>
    %240 = vector.shape_cast %239 : vector<1x4x16xf32> to vector<4x16xf32>
    %241 = vector.shape_cast %238 : vector<4x16xf32> to vector<1x4x16xf32>
    tpu.vector_store %arg8[%c0_169, %c0_170, %c176], %241 {strides = array<i32>} : memref<1x4x256xf32, #tpu.memory_space<vmem>>, vector<1x4x16xf32>,
    %242 = vector.extract_strided_slice %193 {offsets = [0, 235], sizes = [4, 16], strides = [1, 1]} : vector<4x324xf32> to vector<4x16xf32>
    %c0_171 = arith.constant 0 : index
    %c0_172 = arith.constant 0 : index
    %c192 = arith.constant 192 : index
    %243 = vector.load %arg8[%c0_171, %c0_172, %c192] : memref<1x4x256xf32, #tpu.memory_space<vmem>>, vector<1x4x16xf32>
    %244 = vector.shape_cast %243 : vector<1x4x16xf32> to vector<4x16xf32>
    %245 = vector.shape_cast %242 : vector<4x16xf32> to vector<1x4x16xf32>
    tpu.vector_store %arg8[%c0_171, %c0_172, %c192], %245 {strides = array<i32>} : memref<1x4x256xf32, #tpu.memory_space<vmem>>, vector<1x4x16xf32>,
    %246 = vector.extract_strided_slice %193 {offsets = [0, 253], sizes = [4, 16], strides = [1, 1]} : vector<4x324xf32> to vector<4x16xf32>
    %c0_173 = arith.constant 0 : index
    %c0_174 = arith.constant 0 : index
    %c208 = arith.constant 208 : index
    %247 = vector.load %arg8[%c0_173, %c0_174, %c208] : memref<1x4x256xf32, #tpu.memory_space<vmem>>, vector<1x4x16xf32>
    %248 = vector.shape_cast %247 : vector<1x4x16xf32> to vector<4x16xf32>
    %249 = vector.shape_cast %246 : vector<4x16xf32> to vector<1x4x16xf32>
    tpu.vector_store %arg8[%c0_173, %c0_174, %c208], %249 {strides = array<i32>} : memref<1x4x256xf32, #tpu.memory_space<vmem>>, vector<1x4x16xf32>,
    %250 = vector.extract_strided_slice %193 {offsets = [0, 271], sizes = [4, 16], strides = [1, 1]} : vector<4x324xf32> to vector<4x16xf32>
    %c0_175 = arith.constant 0 : index
    %c0_176 = arith.constant 0 : index
    %c224 = arith.constant 224 : index
    %251 = vector.load %arg8[%c0_175, %c0_176, %c224] : memref<1x4x256xf32, #tpu.memory_space<vmem>>, vector<1x4x16xf32>
    %252 = vector.shape_cast %251 : vector<1x4x16xf32> to vector<4x16xf32>
    %253 = vector.shape_cast %250 : vector<4x16xf32> to vector<1x4x16xf32>
    tpu.vector_store %arg8[%c0_175, %c0_176, %c224], %253 {strides = array<i32>} : memref<1x4x256xf32, #tpu.memory_space<vmem>>, vector<1x4x16xf32>,
    %254 = vector.extract_strided_slice %193 {offsets = [0, 289], sizes = [4, 16], strides = [1, 1]} : vector<4x324xf32> to vector<4x16xf32>
    %c0_177 = arith.constant 0 : index
    %c0_178 = arith.constant 0 : index
    %c240 = arith.constant 240 : index
    %255 = vector.load %arg8[%c0_177, %c0_178, %c240] : memref<1x4x256xf32, #tpu.memory_space<vmem>>, vector<1x4x16xf32>
    %256 = vector.shape_cast %255 : vector<1x4x16xf32> to vector<4x16xf32>
    %257 = vector.shape_cast %254 : vector<4x16xf32> to vector<1x4x16xf32>
    tpu.vector_store %arg8[%c0_177, %c0_178, %c240], %257 {strides = array<i32>} : memref<1x4x256xf32, #tpu.memory_space<vmem>>, vector<1x4x16xf32>,
    return
  }
  func.func @transform_0(%arg0: i32) -> (i32, i32) {
    %c0_i32 = arith.constant 0 : i32
    %c0_i32_0 = arith.constant 0 : i32
    %c0_i32_1 = arith.constant 0 : i32
    return %c0_i32, %c0_i32_0 : i32, i32
  }
  func.func @transform_1(%arg0: i32) -> (i32, i32) {
    %c0_i32 = arith.constant 0 : i32
    %c0_i32_0 = arith.constant 0 : i32
    %c0_i32_1 = arith.constant 0 : i32
    return %c0_i32, %c0_i32_0 : i32, i32
  }
  func.func @transform_2(%arg0: i32) -> (i32, i32, i32) {
    %c0_i32 = arith.constant 0 : i32
    %c0_i32_0 = arith.constant 0 : i32
    %c0_i32_1 = arith.constant 0 : i32
    return %arg0, %c0_i32, %c0_i32_0 : i32, i32, i32
  }
  func.func @transform_3(%arg0: i32) -> (i32, i32, i32) {
    %c0_i32 = arith.constant 0 : i32
    %c0_i32_0 = arith.constant 0 : i32
    %c0_i32_1 = arith.constant 0 : i32
    %c0_i32_2 = arith.constant 0 : i32
    return %c0_i32, %c0_i32_0, %c0_i32_1 : i32, i32, i32
  }
  func.func @transform_4(%arg0: i32) -> (i32, i32) {
    %c0_i32 = arith.constant 0 : i32
    %c0_i32_0 = arith.constant 0 : i32
    %c0_i32_1 = arith.constant 0 : i32
    return %c0_i32, %c0_i32_0 : i32, i32
  }
  func.func @transform_5(%arg0: i32) -> (i32, i32, i32) {
    %c0_i32 = arith.constant 0 : i32
    %c0_i32_0 = arith.constant 0 : i32
    %c0_i32_1 = arith.constant 0 : i32
    %c0_i32_2 = arith.constant 0 : i32
    return %c0_i32, %c0_i32_0, %c0_i32_1 : i32, i32, i32
  }
  func.func @transform_6(%arg0: i32) -> (i32, i32) {
    %c0_i32 = arith.constant 0 : i32
    %c0_i32_0 = arith.constant 0 : i32
    %c0_i32_1 = arith.constant 0 : i32
    return %c0_i32, %c0_i32_0 : i32, i32
  }
  func.func @transform_7(%arg0: i32) -> (i32, i32, i32) {
    %c0_i32 = arith.constant 0 : i32
    %c0_i32_0 = arith.constant 0 : i32
    %c0_i32_1 = arith.constant 0 : i32
    return %arg0, %c0_i32, %c0_i32_0 : i32, i32, i32
  }
}

</mosaic_0001>

<llo_original>
// kernel: tpu_custom_call.1
$region0: #{tpu_custom_call.1}
  #allocation0 [shape = 'u32[]', space=smem, size = 0x4, offset = 0x4, fixed_abs, tag = 'smem constant byte address 0x4 - core index']
  #allocation1 [shape = 'u32[144,128]{1,0:T(1,128)}', space=vmem, size = 0x12000, scoped, tag = 'internal scratch']
  #allocation2 [shape = 'f32[4,362]{1,0:T(4,128)}', space=vmem, size = 0x1800, scoped, tag = 'scratch operand']
  %s0 = inlined_call_operand.vmem [shape: s32[1,324], index: 0, kind: input, shape index: {}]
  %s1 = inlined_call_operand.vmem [shape: s32[1,324], index: 1, kind: input, shape index: {}]
  %s2 = inlined_call_operand.vmem [shape: f32[2,4,362], index: 2, kind: input, shape index: {}]
  %s3 = inlined_call_operand.vmem [shape: f32[9,4,4], index: 3, kind: input, shape index: {}]
  %s4 = inlined_call_operand.vmem [shape: f32[4,1], index: 4, kind: input, shape index: {}]
  %s5 = inlined_call_operand.vmem [shape: f32[9,4,4], index: 5, kind: input, shape index: {}]
  %s6 = inlined_call_operand.vmem [shape: f32[4,1], index: 6, kind: input, shape index: {}]
  %s7 = inlined_call_operand.hbm [shape: f32[2,4,256], index: 7, kind: output, shape index: {}]
  %s8 = sld [smem:[#allocation0]]
  $region61: #{tpu_custom_call.1} parent=0
    _
  %s10 = ssub.s32 1, %s8
  %s11 = scalar_select 0, %s10, %s8
  $region1: #{tpu_custom_call.1} parent=0
    #allocation3 [shape = 'u8[8192]{0}', space=vmem, size = 0x2000, scoped, tag = 'output window, operand 0']
    #allocation4 [shape = 's32[2]{0}', space=sflag, size = 0x8, scoped, tag = 'scoped memory for tpu_custom_call.1']
    %12 = vsyncpa [#allocation4], 0
    %s13 = scalar_lea.sflag [#allocation4], 1
    %14 = vsyncpa %s13, 0
    loop: start=0, step=1, limit=4
    $region2: #{tpu_custom_call.1} parent=1 // loop_pre_header
      _
    $region3: #{tpu_custom_call.1} parent=1 // loop_header
      %s16 = sphi 0, %s20
      %p17 = scmp.ge.s32.totalorder %s16, 4
      %s24 = sphi 0, %s24
      %s26 = sphi 0, %s24
      %s27 = sphi 0, %s26
      %s41 = sphi 0, %s27
      %s45 = sphi 0, %s45
      %s47 = sphi 0, %s45
      %s48 = sphi 0, %s47
      %s62 = sphi 0, %s48
      %s68 = sphi 0, %s70
      %s71 = sphi 0, %s68
      %s72 = sphi 0, %s71
      %s88 = sphi 0, %s72
      %s92 = sphi 0, %s92
      %s94 = sphi 0, %s92
      %s95 = sphi 0, %s94
      %s109 = sphi 0, %s95
      %s113 = sphi 0, %s113
      %s115 = sphi 0, %s113
      %s116 = sphi 0, %s115
      %s130 = sphi 0, %s116
      %s134 = sphi 0, %s134
      %s136 = sphi 0, %s134
      %s137 = sphi 0, %s136
      %s151 = sphi 0, %s137
      %s155 = sphi 0, %s155
      %s157 = sphi 0, %s155
      %s158 = sphi 0, %s157
      %s172 = sphi 0, %s158
      %s178 = sphi 0, %s180
      %s181 = sphi 0, %s178
      %s182 = sphi 0, %s181
      %s198 = sphi 0, %s182
    $region4: #{tpu_custom_call.1} parent=1 // loop_header_branch
      %19 = sbr.rel (%p17) target = $region8
    $region5: #{tpu_custom_call.1} parent=1 // loop_body
      %s21 = ssub.s32 %s16, 1
      %s22 = ssub.s32 %s16, 2
      %s23 = sadd.s32 %s16, 1
      %s25 = sadd.s32 %s24, 1
      %p28 = scmp.eq.s32.totalorder %s16, 1
      %p29 = scmp.ne.s32.totalorder %s24, %s26
      %p30 = scmp.eq.s32.totalorder %s16, 0
      %p31 = por %p29, %p30
      %p32 = scmp.ne.s32.totalorder %s24, %s26
      %p33 = scmp.eq.s32.totalorder %s21, 1
      %p34 = por %p32, %p33
      %p35 = scmp.ne.s32.totalorder %s26, %s27
      %p36 = scmp.eq.s32.totalorder %s21, 0
      %p37 = por %p35, %p36
      %p38 = scmp.ne.s32.totalorder %s26, %s27
      %p39 = scmp.eq.s32.totalorder %s22, 1
      %p40 = por %p38, %p39
      %p42 = scmp.ne.s32.totalorder %s27, %s41
      %p43 = scmp.eq.s32.totalorder %s22, 0
      %p44 = por %p42, %p43
      %s46 = sadd.s32 %s45, 1
      %p49 = scmp.eq.s32.totalorder %s16, 1
      %p50 = scmp.ne.s32.totalorder %s45, %s47
      %p51 = scmp.eq.s32.totalorder %s16, 0
      %p52 = por %p50, %p51
      %p53 = scmp.ne.s32.totalorder %s45, %s47
      %p54 = scmp.eq.s32.totalorder %s21, 1
      %p55 = por %p53, %p54
      %p56 = scmp.ne.s32.totalorder %s47, %s48
      %p57 = scmp.eq.s32.totalorder %s21, 0
      %p58 = por %p56, %p57
      %p59 = scmp.ne.s32.totalorder %s47, %s48
      %p60 = scmp.eq.s32.totalorder %s22, 1
      %p61 = por %p59, %p60
      %p63 = scmp.ne.s32.totalorder %s48, %s62
      %p64 = scmp.eq.s32.totalorder %s22, 0
      %p65 = por %p63, %p64
      %s66 = ssub.s32 %s16, %s23
      %p67 = scmp.eq.s32.totalorder %s66, 0
      %s69 = sadd.s32 %s68, 1
      %s70 = scalar_select %p67, %s68, %s69
      %p73 = pneg %p67
      %p74 = scmp.eq.s32.totalorder %s16, 1
      %p75 = por %p73, %p74
      %p76 = scmp.ne.s32.totalorder %s68, %s71
      %p77 = scmp.eq.s32.totalorder %s16, 0
      %p78 = por %p76, %p77
      %p79 = scmp.ne.s32.totalorder %s68, %s71
      %p80 = scmp.eq.s32.totalorder %s21, 1
      %p81 = por %p79, %p80
      %p82 = scmp.ne.s32.totalorder %s71, %s72
      %p83 = scmp.eq.s32.totalorder %s21, 0
      %p84 = por %p82, %p83
      %p85 = scmp.ne.s32.totalorder %s71, %s72
      %p86 = scmp.eq.s32.totalorder %s22, 1
      %p87 = por %p85, %p86
      %p89 = scmp.ne.s32.totalorder %s72, %s88
      %p90 = scmp.eq.s32.totalorder %s22, 0
      %p91 = por %p89, %p90
      %s93 = sadd.s32 %s92, 1
      %p96 = scmp.eq.s32.totalorder %s16, 1
      %p97 = scmp.ne.s32.totalorder %s92, %s94
      %p98 = scmp.eq.s32.totalorder %s16, 0
      %p99 = por %p97, %p98
      %p100 = scmp.ne.s32.totalorder %s92, %s94
      %p101 = scmp.eq.s32.totalorder %s21, 1
      %p102 = por %p100, %p101
      %p103 = scmp.ne.s32.totalorder %s94, %s95
      %p104 = scmp.eq.s32.totalorder %s21, 0
      %p105 = por %p103, %p104
      %p106 = scmp.ne.s32.totalorder %s94, %s95
      %p107 = scmp.eq.s32.totalorder %s22, 1
      %p108 = por %p106, %p107
      %p110 = scmp.ne.s32.totalorder %s95, %s109
      %p111 = scmp.eq.s32.totalorder %s22, 0
      %p112 = por %p110, %p111
      %s114 = sadd.s32 %s113, 1
      %p117 = scmp.eq.s32.totalorder %s16, 1
      %p118 = scmp.ne.s32.totalorder %s113, %s115
      %p119 = scmp.eq.s32.totalorder %s16, 0
      %p120 = por %p118, %p119
      %p121 = scmp.ne.s32.totalorder %s113, %s115
      %p122 = scmp.eq.s32.totalorder %s21, 1
      %p123 = por %p121, %p122
      %p124 = scmp.ne.s32.totalorder %s115, %s116
      %p125 = scmp.eq.s32.totalorder %s21, 0
      %p126 = por %p124, %p125
      %p127 = scmp.ne.s32.totalorder %s115, %s116
      %p128 = scmp.eq.s32.totalorder %s22, 1
      %p129 = por %p127, %p128
      %p131 = scmp.ne.s32.totalorder %s116, %s130
      %p132 = scmp.eq.s32.totalorder %s22, 0
      %p133 = por %p131, %p132
      %s135 = sadd.s32 %s134, 1
      %p138 = scmp.eq.s32.totalorder %s16, 1
      %p139 = scmp.ne.s32.totalorder %s134, %s136
      %p140 = scmp.eq.s32.totalorder %s16, 0
      %p141 = por %p139, %p140
      %p142 = scmp.ne.s32.totalorder %s134, %s136
      %p143 = scmp.eq.s32.totalorder %s21, 1
      %p144 = por %p142, %p143
      %p145 = scmp.ne.s32.totalorder %s136, %s137
      %p146 = scmp.eq.s32.totalorder %s21, 0
      %p147 = por %p145, %p146
      %p148 = scmp.ne.s32.totalorder %s136, %s137
      %p149 = scmp.eq.s32.totalorder %s22, 1
      %p150 = por %p148, %p149
      %p152 = scmp.ne.s32.totalorder %s137, %s151
      %p153 = scmp.eq.s32.totalorder %s22, 0
      %p154 = por %p152, %p153
      %s156 = sadd.s32 %s155, 1
      %p159 = scmp.eq.s32.totalorder %s16, 1
      %p160 = scmp.ne.s32.totalorder %s155, %s157
      %p161 = scmp.eq.s32.totalorder %s16, 0
      %p162 = por %p160, %p161
      %p163 = scmp.ne.s32.totalorder %s155, %s157
      %p164 = scmp.eq.s32.totalorder %s21, 1
      %p165 = por %p163, %p164
      %p166 = scmp.ne.s32.totalorder %s157, %s158
      %p167 = scmp.eq.s32.totalorder %s21, 0
      %p168 = por %p166, %p167
      %p169 = scmp.ne.s32.totalorder %s157, %s158
      %p170 = scmp.eq.s32.totalorder %s22, 1
      %p171 = por %p169, %p170
      %p173 = scmp.ne.s32.totalorder %s158, %s172
      %p174 = scmp.eq.s32.totalorder %s22, 0
      %p175 = por %p173, %p174
      %s176 = ssub.s32 %s16, %s23
      %p177 = scmp.eq.s32.totalorder %s176, 0
      %s179 = sadd.s32 %s178, 1
      %s180 = scalar_select %p177, %s178, %s179
      %p183 = pneg %p177
      %p184 = scmp.eq.s32.totalorder %s16, 1
      %p185 = por %p183, %p184
      %p186 = scmp.ne.s32.totalorder %s178, %s181
      %p187 = scmp.eq.s32.totalorder %s16, 0
      %p188 = por %p186, %p187
      %p189 = scmp.ne.s32.totalorder %s178, %s181
      %p190 = scmp.eq.s32.totalorder %s21, 1
      %p191 = por %p189, %p190
      %p192 = scmp.ne.s32.totalorder %s181, %s182
      %p193 = scmp.eq.s32.totalorder %s21, 0
      %p194 = por %p192, %p193
      %p195 = scmp.ne.s32.totalorder %s181, %s182
      %p196 = scmp.eq.s32.totalorder %s22, 1
      %p197 = por %p195, %p196
      %p199 = scmp.ne.s32.totalorder %s182, %s198
      %p200 = scmp.eq.s32.totalorder %s22, 0
      %p201 = por %p199, %p200
      %p202 = scmp.le.s32.totalorder 1, %s16
      %p203 = scmp.lt.s32.totalorder %s16, 3
      %p204 = pnand %p202, %p203
      %p205 = pneg %p204
      // Predicated region
      $region9: #{tpu_custom_call.1} parent=5 // pred_check
        _
      $region10: #{tpu_custom_call.1} parent=5 // pred_check_branch
        %207 = sbr.rel (%p204) target = $region12
      $region11: #{tpu_custom_call.1} parent=5 // pred_region
        %s208 = ssub.s32 %s16, 1
        // Predicated region
        $region13: #{tpu_custom_call.1} parent=11 // pred_check
          %p209 = pneg %p37
        $region14: #{tpu_custom_call.1} parent=11 // pred_check_branch
          %211 = sbr.rel (%p209) target = $region16
        $region15: #{tpu_custom_call.1} parent=11 // pred_region
          _
        $region16: #{tpu_custom_call.1} parent=11 // pred_fallthru
          _
        // Predicated region
        $region17: #{tpu_custom_call.1} parent=11 // pred_check
          %p212 = pneg %p58
        $region18: #{tpu_custom_call.1} parent=11 // pred_check_branch
          %214 = sbr.rel (%p212) target = $region20
        $region19: #{tpu_custom_call.1} parent=11 // pred_region
          _
        $region20: #{tpu_custom_call.1} parent=11 // pred_fallthru
          _
        // Predicated region
        $region21: #{tpu_custom_call.1} parent=11 // pred_check
          %p215 = pneg %p105
        $region22: #{tpu_custom_call.1} parent=11 // pred_check_branch
          %217 = sbr.rel (%p215) target = $region24
        $region23: #{tpu_custom_call.1} parent=11 // pred_region
          _
        $region24: #{tpu_custom_call.1} parent=11 // pred_fallthru
          _
        // Predicated region
        $region25: #{tpu_custom_call.1} parent=11 // pred_check
          %p218 = pneg %p126
        $region26: #{tpu_custom_call.1} parent=11 // pred_check_branch
          %220 = sbr.rel (%p218) target = $region28
        $region27: #{tpu_custom_call.1} parent=11 // pred_region
          _
        $region28: #{tpu_custom_call.1} parent=11 // pred_fallthru
          _
        // Predicated region
        $region29: #{tpu_custom_call.1} parent=11 // pred_check
          %p221 = pneg %p147
        $region30: #{tpu_custom_call.1} parent=11 // pred_check_branch
          %223 = sbr.rel (%p221) target = $region32
        $region31: #{tpu_custom_call.1} parent=11 // pred_region
          _
        $region32: #{tpu_custom_call.1} parent=11 // pred_fallthru
          _
        // Predicated region
        $region33: #{tpu_custom_call.1} parent=11 // pred_check
          %p224 = pneg %p168
        $region34: #{tpu_custom_call.1} parent=11 // pred_check_branch
          %226 = sbr.rel (%p224) target = $region36
        $region35: #{tpu_custom_call.1} parent=11 // pred_region
          _
        $region36: #{tpu_custom_call.1} parent=11 // pred_fallthru
          _
      $region12: #{tpu_custom_call.1} parent=5 // pred_fallthru
        _
      %p227 = scmp.lt.s32.totalorder %s16, 2
      // Predicated region
      $region37: #{tpu_custom_call.1} parent=5 // pred_check
        %p228 = pneg %p227
      $region38: #{tpu_custom_call.1} parent=5 // pred_check_branch
        %230 = sbr.rel (%p228) target = $region40
      $region39: #{tpu_custom_call.1} parent=5 // pred_region
        // Predicated region
        $region41: #{tpu_custom_call.1} parent=39 // pred_check
          %p231 = pneg %p78
        $region42: #{tpu_custom_call.1} parent=39 // pred_check_branch
          %233 = sbr.rel (%p231) target = $region44
        $region43: #{tpu_custom_call.1} parent=39 // pred_region
          %p234 = scmp.lt.s32.totalorder %s16, 1
          %s235 = scalar_select %p234, %s16, 1
          %s236 = smul.addr %s235, 3
          %s237 = smul.addr %s236, 4
          %s238 = scalar_lea.vmem %s2, %s237
        $region44: #{tpu_custom_call.1} parent=39 // pred_fallthru
          _
      $region40: #{tpu_custom_call.1} parent=5 // pred_fallthru
        _
      %p239 = scmp.le.s32.totalorder 1, %s16
      %p240 = scmp.lt.s32.totalorder %s16, 3
      %p241 = pnand %p239, %p240
      %p242 = pneg %p241
      // Predicated region
      $region45: #{tpu_custom_call.1} parent=5 // pred_check
        _
      $region46: #{tpu_custom_call.1} parent=5 // pred_check_branch
        %244 = sbr.rel (%p241) target = $region48
      $region47: #{tpu_custom_call.1} parent=5 // pred_region
        %s245 = ssub.s32 %s16, 1
        %p246 = pneg %p37
        %p247 = pneg %p34
        %p248 = pneg %p58
        %p249 = pneg %p55
        %p250 = scmp.lt.s32.totalorder %s21, 1
        %s251 = scalar_select %p250, %s21, 1
        %s252 = smul.addr %s251, 3
        %s253 = smul.addr %s252, 4
        %s254 = scalar_lea.vmem %s2, %s253
        %p255 = pneg %p84
        %p256 = pneg %p81
        %p257 = pneg %p105
        %p258 = pneg %p102
        %p259 = pneg %p126
        %p260 = pneg %p123
        %p261 = pneg %p147
        %p262 = pneg %p144
        %p263 = pneg %p168
        %p264 = pneg %p165
        %p265 = pneg %p194
        %p266 = pneg %p191
        %s267 = sand.u32 %s181, 1
        %s268 = scalar_lea.sflag [#allocation4], %s267
        %s269 = sand.u32 %s181, 1
        %s270 = smul.addr %s269, 8
        %s271 = scalar_lea.vmem [#allocation3], %s270
        %p272 = scmp.lt.s32.totalorder %s21, 1
        %s273 = scalar_select %p272, %s21, 1
        %s274 = smul.addr %s273, 3
        %s275 = smul.addr %s274, 4
        %s276 = scalar_lea.vmem %s2, %s275
        %v277 = vld [vmem:[%s0] sm:$0x7]
        %v278 = vld [vmem:[%s1] sm:$0x7]
        %vm279 = vcmp.ge.s32.totalorder %v277, 1
        %vm280 = vcmp.le.s32.totalorder %v277, 16
        %vm281 = vmand %vm279, %vm280
        %vm282 = vcmp.ge.s32.totalorder %v278, 1
        %vm283 = vmand %vm281, %vm282
        %vm284 = vcmp.le.s32.totalorder %v278, 16
        %vm285 = vmand %vm283, %vm284
        %v286 = vld [vmem:[%s3] sm:$0xf]
        %v287 = vld [vmem:[%s276] sm:$0xff]
        %v288 = vld [vmem:[%s276 + $0x8] sm:$0xf]
        %s289 = scalar_lea.vmem %s3, 4
        %v290 = vld [vmem:[%s289] sm:$0xf]
        %v293 = vcombine.high %v287, %v287
        %294 = vrot.lane.b32.xlu0 %v287, 127
        %v295 = vpop.permute.xlu0 %294
        %296 = vrot.lane.b32.xlu0 %v293, 127
        %v297 = vpop.permute.xlu0 %296
        %298 = vrot.lane.b32.xlu0 %v288, 127
        %v299 = vpop.permute.xlu0 %298
        %vm300 = vcmask 1039360
        %v301 = vsel %vm300, %v295, %v297
        %v302 = vsel %vm300, %v297, %v299
        %vm303 = vcmask 31744
        %v305 = vsel %vm303, %v290, 0
        %vm307 = vcmask 1043456
        %v308 = vsel %vm307, %v301, 0
        %v310 = vsel %vm307, %v302, 0
        %v312 = vsel %vm307, %v299, 0
        %314 = vmatprep.subr.mxu0 0.0
        %315 = vmatpush1.msra.mxu0 0.0
        %316 = vmatprep.subr.mxu0 0.0
        %317 = vmatpush1.msra.mxu0 0.0
        %318 = vmatprep.subr.mxu0 0.0
        %319 = vmatpush1.msra.mxu0 0.0
        %320 = vmatprep.subr.mxu0 0.0
        %321 = vmatpush1.msra.mxu0 0.0
        %322 = vmatprep.subr.mxu0 0.0
        %323 = vmatpush1.msra.mxu0 0.0
        %324 = vmatprep.subr.mxu0 0.0
        %325 = vmatpush1.msra.mxu0 0.0
        %326 = vmatprep.subr.mxu0 0.0
        %327 = vmatpush1.msra.mxu0 0.0
        %328 = vmatprep.subr.mxu0 0.0
        %329 = vmatpush1.msra.mxu0 0.0
        %330 = vmatprep.subr.mxu0 0.0
        %331 = vmatpush1.msra.mxu0 0.0
        %332 = vmatprep.subr.mxu0 0.0
        %333 = vmatpush1.msra.mxu0 0.0
        %334 = vmatprep.subr.mxu0 0.0
        %335 = vmatpush1.msra.mxu0 0.0
        %336 = vmatprep.subr.mxu0 0.0
        %337 = vmatpush1.msra.mxu0 0.0
        %338 = vmatprep.subr.mxu0 0.0
        %339 = vmatpush1.msra.mxu0 0.0
        %340 = vmatprep.subr.mxu0 0.0
        %341 = vmatpush1.msra.mxu0 0.0
        %342 = vmatprep.subr.mxu0 0.0
        %343 = vmatpush1.msra.mxu0 0.0
        %344 = vmatprep.subr.mxu0 %v310
        %345 = vmatpush1.msra.mxu0 %v308
        %346 = vmatprep.subr.mxu0 0.0
        %347 = vmatpush2.msra.mxu0 0.0
        %348 = vmatprep.subr.mxu0 0.0
        %349 = vmatpush2.msra.mxu0 0.0
        %350 = vmatprep.subr.mxu0 0.0
        %351 = vmatpush2.msra.mxu0 0.0
        %352 = vmatprep.subr.mxu0 0.0
        %353 = vmatpush2.msra.mxu0 0.0
        %354 = vmatprep.subr.mxu0 0.0
        %355 = vmatpush2.msra.mxu0 0.0
        %356 = vmatprep.subr.mxu0 0.0
        %357 = vmatpush2.msra.mxu0 0.0
        %358 = vmatprep.subr.mxu0 0.0
        %359 = vmatpush2.msra.mxu0 0.0
        %360 = vmatprep.subr.mxu0 0.0
        %361 = vmatpush2.msra.mxu0 0.0
        %362 = vmatprep.subr.mxu0 0.0
        %363 = vmatpush2.msra.mxu0 0.0
        %364 = vmatprep.subr.mxu0 0.0
        %365 = vmatpush2.msra.mxu0 0.0
        %366 = vmatprep.subr.mxu0 0.0
        %367 = vmatpush2.msra.mxu0 0.0
        %368 = vmatprep.subr.mxu0 0.0
        %369 = vmatpush2.msra.mxu0 0.0
        %370 = vmatprep.subr.mxu0 0.0
        %371 = vmatpush2.msra.mxu0 0.0
        %372 = vmatprep.subr.mxu0 0.0
        %373 = vmatpush2.msra.mxu0 0.0
        %374 = vmatprep.subr.mxu0 0.0
        %375 = vmatpush2.msra.mxu0 0.0
        %376 = vmatprep.subr.mxu0 0.0
        %377 = vmatpush2.msra.mxu0 0.0
        %378 = vmatprep.mubr.f32.mxu0 0.0
        %379 = vmatmul.mubr.f32.gmra.mxu0 %v305
        %v380 = vpop.f32.mrf.mxu0
        %v381 = vadd.f32 0.0, %v380
        %v382 = vpop.f32.mrf.mxu0
        %v383 = vadd.f32 0.0, %v382
        %384 = vdwg.mxu0
        %385 = vmatprep.subr.mxu0 0.0
        %386 = vmatpush1.msra.mxu0 0.0
        %387 = vmatprep.subr.mxu0 0.0
        %388 = vmatpush1.msra.mxu0 0.0
        %389 = vmatprep.subr.mxu0 0.0
        %390 = vmatpush1.msra.mxu0 0.0
        %391 = vmatprep.subr.mxu0 0.0
        %392 = vmatpush1.msra.mxu0 0.0
        %393 = vmatprep.subr.mxu0 0.0
        %394 = vmatpush1.msra.mxu0 0.0
        %395 = vmatprep.subr.mxu0 0.0
        %396 = vmatpush1.msra.mxu0 0.0
        %397 = vmatprep.subr.mxu0 0.0
        %398 = vmatpush1.msra.mxu0 0.0
        %399 = vmatprep.subr.mxu0 0.0
        %400 = vmatpush1.msra.mxu0 0.0
        %401 = vmatprep.subr.mxu0 0.0
        %402 = vmatpush1.msra.mxu0 0.0
        %403 = vmatprep.subr.mxu0 0.0
        %404 = vmatpush1.msra.mxu0 0.0
        %405 = vmatprep.subr.mxu0 0.0
        %406 = vmatpush1.msra.mxu0 0.0
        %407 = vmatprep.subr.mxu0 0.0
        %408 = vmatpush1.msra.mxu0 0.0
        %409 = vmatprep.subr.mxu0 0.0
        %410 = vmatpush1.msra.mxu0 0.0
        %411 = vmatprep.subr.mxu0 0.0
        %412 = vmatpush1.msra.mxu0 0.0
        %413 = vmatprep.subr.mxu0 0.0
        %414 = vmatpush1.msra.mxu0 0.0
        %415 = vmatprep.subr.mxu0 0.0
        %416 = vmatpush1.msra.mxu0 %v312
        %417 = vmatprep.subr.mxu0 0.0
        %418 = vmatpush2.msra.mxu0 0.0
        %419 = vmatprep.subr.mxu0 0.0
        %420 = vmatpush2.msra.mxu0 0.0
        %421 = vmatprep.subr.mxu0 0.0
        %422 = vmatpush2.msra.mxu0 0.0
        %423 = vmatprep.subr.mxu0 0.0
        %424 = vmatpush2.msra.mxu0 0.0
        %425 = vmatprep.subr.mxu0 0.0
        %426 = vmatpush2.msra.mxu0 0.0
        %427 = vmatprep.subr.mxu0 0.0
        %428 = vmatpush2.msra.mxu0 0.0
        %429 = vmatprep.subr.mxu0 0.0
        %430 = vmatpush2.msra.mxu0 0.0
        %431 = vmatprep.subr.mxu0 0.0
        %432 = vmatpush2.msra.mxu0 0.0
        %433 = vmatprep.subr.mxu0 0.0
        %434 = vmatpush2.msra.mxu0 0.0
        %435 = vmatprep.subr.mxu0 0.0
        %436 = vmatpush2.msra.mxu0 0.0
        %437 = vmatprep.subr.mxu0 0.0
        %438 = vmatpush2.msra.mxu0 0.0
        %439 = vmatprep.subr.mxu0 0.0
        %440 = vmatpush2.msra.mxu0 0.0
        %441 = vmatprep.subr.mxu0 0.0
        %442 = vmatpush2.msra.mxu0 0.0
        %443 = vmatprep.subr.mxu0 0.0
        %444 = vmatpush2.msra.mxu0 0.0
        %445 = vmatprep.subr.mxu0 0.0
        %446 = vmatpush2.msra.mxu0 0.0
        %447 = vmatprep.subr.mxu0 0.0
        %448 = vmatpush2.msra.mxu0 0.0
        %449 = vmatprep.mubr.f32.mxu0 0.0
        %450 = vmatmul.mubr.f32.gmra.mxu0 %v305
        %v451 = vpop.f32.mrf.mxu0
        %v452 = vadd.f32 0.0, %v451
        %v453 = vpop.f32.mrf.mxu0
        %454 = vdwg.mxu0
        %v456 = vsel %vm303, %v286, 0
        %v458 = vsel %vm307, %v287, 0
        %v460 = vsel %vm307, %v293, 0
        %v462 = vsel %vm307, %v288, 0
        %464 = vmatprep.subr.mxu0 0.0
        %465 = vmatpush1.msra.mxu0 0.0
        %466 = vmatprep.subr.mxu0 0.0
        %467 = vmatpush1.msra.mxu0 0.0
        %468 = vmatprep.subr.mxu0 0.0
        %469 = vmatpush1.msra.mxu0 0.0
        %470 = vmatprep.subr.mxu0 0.0
        %471 = vmatpush1.msra.mxu0 0.0
        %472 = vmatprep.subr.mxu0 0.0
        %473 = vmatpush1.msra.mxu0 0.0
        %474 = vmatprep.subr.mxu0 0.0
        %475 = vmatpush1.msra.mxu0 0.0
        %476 = vmatprep.subr.mxu0 0.0
        %477 = vmatpush1.msra.mxu0 0.0
        %478 = vmatprep.subr.mxu0 0.0
        %479 = vmatpush1.msra.mxu0 0.0
        %480 = vmatprep.subr.mxu0 0.0
        %481 = vmatpush1.msra.mxu0 0.0
        %482 = vmatprep.subr.mxu0 0.0
        %483 = vmatpush1.msra.mxu0 0.0
        %484 = vmatprep.subr.mxu0 0.0
        %485 = vmatpush1.msra.mxu0 0.0
        %486 = vmatprep.subr.mxu0 0.0
        %487 = vmatpush1.msra.mxu0 0.0
        %488 = vmatprep.subr.mxu0 0.0
        %489 = vmatpush1.msra.mxu0 0.0
        %490 = vmatprep.subr.mxu0 0.0
        %491 = vmatpush1.msra.mxu0 0.0
        %492 = vmatprep.subr.mxu0 0.0
        %493 = vmatpush1.msra.mxu0 0.0
        %494 = vmatprep.subr.mxu0 %v460
        %495 = vmatpush1.msra.mxu0 %v458
        %496 = vmatprep.subr.mxu0 0.0
        %497 = vmatpush2.msra.mxu0 0.0
        %498 = vmatprep.subr.mxu0 0.0
        %499 = vmatpush2.msra.mxu0 0.0
        %500 = vmatprep.subr.mxu0 0.0
        %501 = vmatpush2.msra.mxu0 0.0
        %502 = vmatprep.subr.mxu0 0.0
        %503 = vmatpush2.msra.mxu0 0.0
        %504 = vmatprep.subr.mxu0 0.0
        %505 = vmatpush2.msra.mxu0 0.0
        %506 = vmatprep.subr.mxu0 0.0
        %507 = vmatpush2.msra.mxu0 0.0
        %508 = vmatprep.subr.mxu0 0.0
        %509 = vmatpush2.msra.mxu0 0.0
        %510 = vmatprep.subr.mxu0 0.0
        %511 = vmatpush2.msra.mxu0 0.0
        %512 = vmatprep.subr.mxu0 0.0
        %513 = vmatpush2.msra.mxu0 0.0
        %514 = vmatprep.subr.mxu0 0.0
        %515 = vmatpush2.msra.mxu0 0.0
        %516 = vmatprep.subr.mxu0 0.0
        %517 = vmatpush2.msra.mxu0 0.0
        %518 = vmatprep.subr.mxu0 0.0
        %519 = vmatpush2.msra.mxu0 0.0
        %520 = vmatprep.subr.mxu0 0.0
        %521 = vmatpush2.msra.mxu0 0.0
        %522 = vmatprep.subr.mxu0 0.0
        %523 = vmatpush2.msra.mxu0 0.0
        %524 = vmatprep.subr.mxu0 0.0
        %525 = vmatpush2.msra.mxu0 0.0
        %526 = vmatprep.subr.mxu0 0.0
        %527 = vmatpush2.msra.mxu0 0.0
        %528 = vmatprep.mubr.f32.mxu0 0.0
        %529 = vmatmul.mubr.f32.gmra.mxu0 %v456
        %v530 = vpop.f32.mrf.mxu0
        %v531 = vadd.f32 %v381, %v530
        %v532 = vpop.f32.mrf.mxu0
        %v533 = vadd.f32 %v383, %v532
        %534 = vdwg.mxu0
        %535 = vmatprep.subr.mxu0 0.0
        %536 = vmatpush1.msra.mxu0 0.0
        %537 = vmatprep.subr.mxu0 0.0
        %538 = vmatpush1.msra.mxu0 0.0
        %539 = vmatprep.subr.mxu0 0.0
        %540 = vmatpush1.msra.mxu0 0.0
        %541 = vmatprep.subr.mxu0 0.0
        %542 = vmatpush1.msra.mxu0 0.0
        %543 = vmatprep.subr.mxu0 0.0
        %544 = vmatpush1.msra.mxu0 0.0
        %545 = vmatprep.subr.mxu0 0.0
        %546 = vmatpush1.msra.mxu0 0.0
        %547 = vmatprep.subr.mxu0 0.0
        %548 = vmatpush1.msra.mxu0 0.0
        %549 = vmatprep.subr.mxu0 0.0
        %550 = vmatpush1.msra.mxu0 0.0
        %551 = vmatprep.subr.mxu0 0.0
        %552 = vmatpush1.msra.mxu0 0.0
        %553 = vmatprep.subr.mxu0 0.0
        %554 = vmatpush1.msra.mxu0 0.0
        %555 = vmatprep.subr.mxu0 0.0
        %556 = vmatpush1.msra.mxu0 0.0
        %557 = vmatprep.subr.mxu0 0.0
        %558 = vmatpush1.msra.mxu0 0.0
        %559 = vmatprep.subr.mxu0 0.0
        %560 = vmatpush1.msra.mxu0 0.0
        %561 = vmatprep.subr.mxu0 0.0
        %562 = vmatpush1.msra.mxu0 0.0
        %563 = vmatprep.subr.mxu0 0.0
        %564 = vmatpush1.msra.mxu0 0.0
        %565 = vmatprep.subr.mxu0 0.0
        %566 = vmatpush1.msra.mxu0 %v462
        %567 = vmatprep.subr.mxu0 0.0
        %568 = vmatpush2.msra.mxu0 0.0
        %569 = vmatprep.subr.mxu0 0.0
        %570 = vmatpush2.msra.mxu0 0.0
        %571 = vmatprep.subr.mxu0 0.0
        %572 = vmatpush2.msra.mxu0 0.0
        %573 = vmatprep.subr.mxu0 0.0
        %574 = vmatpush2.msra.mxu0 0.0
        %575 = vmatprep.subr.mxu0 0.0
        %576 = vmatpush2.msra.mxu0 0.0
        %577 = vmatprep.subr.mxu0 0.0
        %578 = vmatpush2.msra.mxu0 0.0
        %579 = vmatprep.subr.mxu0 0.0
        %580 = vmatpush2.msra.mxu0 0.0
        %581 = vmatprep.subr.mxu0 0.0
        %582 = vmatpush2.msra.mxu0 0.0
        %583 = vmatprep.subr.mxu0 0.0
        %584 = vmatpush2.msra.mxu0 0.0
        %585 = vmatprep.subr.mxu0 0.0
        %586 = vmatpush2.msra.mxu0 0.0
        %587 = vmatprep.subr.mxu0 0.0
        %588 = vmatpush2.msra.mxu0 0.0
        %589 = vmatprep.subr.mxu0 0.0
        %590 = vmatpush2.msra.mxu0 0.0
        %591 = vmatprep.subr.mxu0 0.0
        %592 = vmatpush2.msra.mxu0 0.0
        %593 = vmatprep.subr.mxu0 0.0
        %594 = vmatpush2.msra.mxu0 0.0
        %595 = vmatprep.subr.mxu0 0.0
        %596 = vmatpush2.msra.mxu0 0.0
        %597 = vmatprep.subr.mxu0 0.0
        %598 = vmatpush2.msra.mxu0 0.0
        %599 = vmatprep.mubr.f32.mxu0 0.0
        %600 = vmatmul.mubr.f32.gmra.mxu0 %v456
        %v601 = vpop.f32.mrf.mxu0
        %v602 = vadd.f32 %v452, %v601
        %v603 = vpop.f32.mrf.mxu0
        %604 = vdwg.mxu0
        %s605 = scalar_lea.vmem %s3, 8
        %v606 = vld [vmem:[%s605] sm:$0xf]
        %v607 = vld [vmem:[%s276] sm:$0xff]
        %v608 = vld [vmem:[%s276 + $0x8] sm:$0xf]
        %v611 = vcombine.high %v607, %v607
        %612 = vrot.lane.b32.xlu0 %v607, 126
        %v613 = vpop.permute.xlu0 %612
        %614 = vrot.lane.b32.xlu0 %v611, 126
        %v615 = vpop.permute.xlu0 %614
        %616 = vrot.lane.b32.xlu0 %v608, 126
        %v617 = vpop.permute.xlu0 %616
        %vm618 = vcmask 1031168
        %v619 = vsel %vm618, %v613, %v615
        %v620 = vsel %vm618, %v615, %v617
        %v622 = vsel %vm303, %v606, 0
        %v624 = vsel %vm307, %v619, 0
        %v626 = vsel %vm307, %v620, 0
        %v628 = vsel %vm307, %v617, 0
        %630 = vmatprep.subr.mxu0 0.0
        %631 = vmatpush1.msra.mxu0 0.0
        %632 = vmatprep.subr.mxu0 0.0
        %633 = vmatpush1.msra.mxu0 0.0
        %634 = vmatprep.subr.mxu0 0.0
        %635 = vmatpush1.msra.mxu0 0.0
        %636 = vmatprep.subr.mxu0 0.0
        %637 = vmatpush1.msra.mxu0 0.0
        %638 = vmatprep.subr.mxu0 0.0
        %639 = vmatpush1.msra.mxu0 0.0
        %640 = vmatprep.subr.mxu0 0.0
        %641 = vmatpush1.msra.mxu0 0.0
        %642 = vmatprep.subr.mxu0 0.0
        %643 = vmatpush1.msra.mxu0 0.0
        %644 = vmatprep.subr.mxu0 0.0
        %645 = vmatpush1.msra.mxu0 0.0
        %646 = vmatprep.subr.mxu0 0.0
        %647 = vmatpush1.msra.mxu0 0.0
        %648 = vmatprep.subr.mxu0 0.0
        %649 = vmatpush1.msra.mxu0 0.0
        %650 = vmatprep.subr.mxu0 0.0
        %651 = vmatpush1.msra.mxu0 0.0
        %652 = vmatprep.subr.mxu0 0.0
        %653 = vmatpush1.msra.mxu0 0.0
        %654 = vmatprep.subr.mxu0 0.0
        %655 = vmatpush1.msra.mxu0 0.0
        %656 = vmatprep.subr.mxu0 0.0
        %657 = vmatpush1.msra.mxu0 0.0
        %658 = vmatprep.subr.mxu0 0.0
        %659 = vmatpush1.msra.mxu0 0.0
        %660 = vmatprep.subr.mxu0 %v626
        %661 = vmatpush1.msra.mxu0 %v624
        %662 = vmatprep.subr.mxu0 0.0
        %663 = vmatpush2.msra.mxu0 0.0
        %664 = vmatprep.subr.mxu0 0.0
        %665 = vmatpush2.msra.mxu0 0.0
        %666 = vmatprep.subr.mxu0 0.0
        %667 = vmatpush2.msra.mxu0 0.0
        %668 = vmatprep.subr.mxu0 0.0
        %669 = vmatpush2.msra.mxu0 0.0
        %670 = vmatprep.subr.mxu0 0.0
        %671 = vmatpush2.msra.mxu0 0.0
        %672 = vmatprep.subr.mxu0 0.0
        %673 = vmatpush2.msra.mxu0 0.0
        %674 = vmatprep.subr.mxu0 0.0
        %675 = vmatpush2.msra.mxu0 0.0
        %676 = vmatprep.subr.mxu0 0.0
        %677 = vmatpush2.msra.mxu0 0.0
        %678 = vmatprep.subr.mxu0 0.0
        %679 = vmatpush2.msra.mxu0 0.0
        %680 = vmatprep.subr.mxu0 0.0
        %681 = vmatpush2.msra.mxu0 0.0
        %682 = vmatprep.subr.mxu0 0.0
        %683 = vmatpush2.msra.mxu0 0.0
        %684 = vmatprep.subr.mxu0 0.0
        %685 = vmatpush2.msra.mxu0 0.0
        %686 = vmatprep.subr.mxu0 0.0
        %687 = vmatpush2.msra.mxu0 0.0
        %688 = vmatprep.subr.mxu0 0.0
        %689 = vmatpush2.msra.mxu0 0.0
        %690 = vmatprep.subr.mxu0 0.0
        %691 = vmatpush2.msra.mxu0 0.0
        %692 = vmatprep.subr.mxu0 0.0
        %693 = vmatpush2.msra.mxu0 0.0
        %694 = vmatprep.mubr.f32.mxu0 0.0
        %695 = vmatmul.mubr.f32.gmra.mxu0 %v622
        %v696 = vpop.f32.mrf.mxu0
        %v697 = vadd.f32 0.0, %v696
        %v698 = vpop.f32.mrf.mxu0
        %v699 = vadd.f32 0.0, %v698
        %700 = vdwg.mxu0
        %701 = vmatprep.subr.mxu0 0.0
        %702 = vmatpush1.msra.mxu0 0.0
        %703 = vmatprep.subr.mxu0 0.0
        %704 = vmatpush1.msra.mxu0 0.0
        %705 = vmatprep.subr.mxu0 0.0
        %706 = vmatpush1.msra.mxu0 0.0
        %707 = vmatprep.subr.mxu0 0.0
        %708 = vmatpush1.msra.mxu0 0.0
        %709 = vmatprep.subr.mxu0 0.0
        %710 = vmatpush1.msra.mxu0 0.0
        %711 = vmatprep.subr.mxu0 0.0
        %712 = vmatpush1.msra.mxu0 0.0
        %713 = vmatprep.subr.mxu0 0.0
        %714 = vmatpush1.msra.mxu0 0.0
        %715 = vmatprep.subr.mxu0 0.0
        %716 = vmatpush1.msra.mxu0 0.0
        %717 = vmatprep.subr.mxu0 0.0
        %718 = vmatpush1.msra.mxu0 0.0
        %719 = vmatprep.subr.mxu0 0.0
        %720 = vmatpush1.msra.mxu0 0.0
        %721 = vmatprep.subr.mxu0 0.0
        %722 = vmatpush1.msra.mxu0 0.0
        %723 = vmatprep.subr.mxu0 0.0
        %724 = vmatpush1.msra.mxu0 0.0
        %725 = vmatprep.subr.mxu0 0.0
        %726 = vmatpush1.msra.mxu0 0.0
        %727 = vmatprep.subr.mxu0 0.0
        %728 = vmatpush1.msra.mxu0 0.0
        %729 = vmatprep.subr.mxu0 0.0
        %730 = vmatpush1.msra.mxu0 0.0
        %731 = vmatprep.subr.mxu0 0.0
        %732 = vmatpush1.msra.mxu0 %v628
        %733 = vmatprep.subr.mxu0 0.0
        %734 = vmatpush2.msra.mxu0 0.0
        %735 = vmatprep.subr.mxu0 0.0
        %736 = vmatpush2.msra.mxu0 0.0
        %737 = vmatprep.subr.mxu0 0.0
        %738 = vmatpush2.msra.mxu0 0.0
        %739 = vmatprep.subr.mxu0 0.0
        %740 = vmatpush2.msra.mxu0 0.0
        %741 = vmatprep.subr.mxu0 0.0
        %742 = vmatpush2.msra.mxu0 0.0
        %743 = vmatprep.subr.mxu0 0.0
        %744 = vmatpush2.msra.mxu0 0.0
        %745 = vmatprep.subr.mxu0 0.0
        %746 = vmatpush2.msra.mxu0 0.0
        %747 = vmatprep.subr.mxu0 0.0
        %748 = vmatpush2.msra.mxu0 0.0
        %749 = vmatprep.subr.mxu0 0.0
        %750 = vmatpush2.msra.mxu0 0.0
        %751 = vmatprep.subr.mxu0 0.0
        %752 = vmatpush2.msra.mxu0 0.0
        %753 = vmatprep.subr.mxu0 0.0
        %754 = vmatpush2.msra.mxu0 0.0
        %755 = vmatprep.subr.mxu0 0.0
        %756 = vmatpush2.msra.mxu0 0.0
        %757 = vmatprep.subr.mxu0 0.0
        %758 = vmatpush2.msra.mxu0 0.0
        %759 = vmatprep.subr.mxu0 0.0
        %760 = vmatpush2.msra.mxu0 0.0
        %761 = vmatprep.subr.mxu0 0.0
        %762 = vmatpush2.msra.mxu0 0.0
        %763 = vmatprep.subr.mxu0 0.0
        %764 = vmatpush2.msra.mxu0 0.0
        %765 = vmatprep.mubr.f32.mxu0 0.0
        %766 = vmatmul.mubr.f32.gmra.mxu0 %v622
        %v767 = vpop.f32.mrf.mxu0
        %v768 = vadd.f32 0.0, %v767
        %v769 = vpop.f32.mrf.mxu0
        %770 = vdwg.mxu0
        %v771 = vadd.f32 %v531, %v697
        %v772 = vadd.f32 %v533, %v699
        %v773 = vadd.f32 %v602, %v768
        %s774 = scalar_lea.vmem %s3, 12
        %v775 = vld [vmem:[%s774] sm:$0xf]
        %v776 = vld [vmem:[%s276] sm:$0xff]
        %v777 = vld [vmem:[%s276 + $0x8] sm:$0xf]
        %v780 = vcombine.high %v776, %v776
        %781 = vrot.lane.b32.xlu0 %v776, 110
        %v782 = vpop.permute.xlu0 %781
        %783 = vrot.lane.b32.xlu0 %v780, 110
        %v784 = vpop.permute.xlu0 %783
        %785 = vrot.lane.b32.xlu0 %v777, 110
        %v786 = vpop.permute.xlu0 %785
        %vm787 = vcmask 900096
        %v788 = vsel %vm787, %v782, %v784
        %v789 = vsel %vm787, %v784, %v786
        %v791 = vsel %vm303, %v775, 0
        %v793 = vsel %vm307, %v788, 0
        %v795 = vsel %vm307, %v789, 0
        %v797 = vsel %vm307, %v786, 0
        %799 = vmatprep.subr.mxu0 0.0
        %800 = vmatpush1.msra.mxu0 0.0
        %801 = vmatprep.subr.mxu0 0.0
        %802 = vmatpush1.msra.mxu0 0.0
        %803 = vmatprep.subr.mxu0 0.0
        %804 = vmatpush1.msra.mxu0 0.0
        %805 = vmatprep.subr.mxu0 0.0
        %806 = vmatpush1.msra.mxu0 0.0
        %807 = vmatprep.subr.mxu0 0.0
        %808 = vmatpush1.msra.mxu0 0.0
        %809 = vmatprep.subr.mxu0 0.0
        %810 = vmatpush1.msra.mxu0 0.0
        %811 = vmatprep.subr.mxu0 0.0
        %812 = vmatpush1.msra.mxu0 0.0
        %813 = vmatprep.subr.mxu0 0.0
        %814 = vmatpush1.msra.mxu0 0.0
        %815 = vmatprep.subr.mxu0 0.0
        %816 = vmatpush1.msra.mxu0 0.0
        %817 = vmatprep.subr.mxu0 0.0
        %818 = vmatpush1.msra.mxu0 0.0
        %819 = vmatprep.subr.mxu0 0.0
        %820 = vmatpush1.msra.mxu0 0.0
        %821 = vmatprep.subr.mxu0 0.0
        %822 = vmatpush1.msra.mxu0 0.0
        %823 = vmatprep.subr.mxu0 0.0
        %824 = vmatpush1.msra.mxu0 0.0
        %825 = vmatprep.subr.mxu0 0.0
        %826 = vmatpush1.msra.mxu0 0.0
        %827 = vmatprep.subr.mxu0 0.0
        %828 = vmatpush1.msra.mxu0 0.0
        %829 = vmatprep.subr.mxu0 %v795
        %830 = vmatpush1.msra.mxu0 %v793
        %831 = vmatprep.subr.mxu0 0.0
        %832 = vmatpush2.msra.mxu0 0.0
        %833 = vmatprep.subr.mxu0 0.0
        %834 = vmatpush2.msra.mxu0 0.0
        %835 = vmatprep.subr.mxu0 0.0
        %836 = vmatpush2.msra.mxu0 0.0
        %837 = vmatprep.subr.mxu0 0.0
        %838 = vmatpush2.msra.mxu0 0.0
        %839 = vmatprep.subr.mxu0 0.0
        %840 = vmatpush2.msra.mxu0 0.0
        %841 = vmatprep.subr.mxu0 0.0
        %842 = vmatpush2.msra.mxu0 0.0
        %843 = vmatprep.subr.mxu0 0.0
        %844 = vmatpush2.msra.mxu0 0.0
        %845 = vmatprep.subr.mxu0 0.0
        %846 = vmatpush2.msra.mxu0 0.0
        %847 = vmatprep.subr.mxu0 0.0
        %848 = vmatpush2.msra.mxu0 0.0
        %849 = vmatprep.subr.mxu0 0.0
        %850 = vmatpush2.msra.mxu0 0.0
        %851 = vmatprep.subr.mxu0 0.0
        %852 = vmatpush2.msra.mxu0 0.0
        %853 = vmatprep.subr.mxu0 0.0
        %854 = vmatpush2.msra.mxu0 0.0
        %855 = vmatprep.subr.mxu0 0.0
        %856 = vmatpush2.msra.mxu0 0.0
        %857 = vmatprep.subr.mxu0 0.0
        %858 = vmatpush2.msra.mxu0 0.0
        %859 = vmatprep.subr.mxu0 0.0
        %860 = vmatpush2.msra.mxu0 0.0
        %861 = vmatprep.subr.mxu0 0.0
        %862 = vmatpush2.msra.mxu0 0.0
        %863 = vmatprep.mubr.f32.mxu0 0.0
        %864 = vmatmul.mubr.f32.gmra.mxu0 %v791
        %v865 = vpop.f32.mrf.mxu0
        %v866 = vadd.f32 0.0, %v865
        %v867 = vpop.f32.mrf.mxu0
        %v868 = vadd.f32 0.0, %v867
        %869 = vdwg.mxu0
        %870 = vmatprep.subr.mxu0 0.0
        %871 = vmatpush1.msra.mxu0 0.0
        %872 = vmatprep.subr.mxu0 0.0
        %873 = vmatpush1.msra.mxu0 0.0
        %874 = vmatprep.subr.mxu0 0.0
        %875 = vmatpush1.msra.mxu0 0.0
        %876 = vmatprep.subr.mxu0 0.0
        %877 = vmatpush1.msra.mxu0 0.0
        %878 = vmatprep.subr.mxu0 0.0
        %879 = vmatpush1.msra.mxu0 0.0
        %880 = vmatprep.subr.mxu0 0.0
        %881 = vmatpush1.msra.mxu0 0.0
        %882 = vmatprep.subr.mxu0 0.0
        %883 = vmatpush1.msra.mxu0 0.0
        %884 = vmatprep.subr.mxu0 0.0
        %885 = vmatpush1.msra.mxu0 0.0
        %886 = vmatprep.subr.mxu0 0.0
        %887 = vmatpush1.msra.mxu0 0.0
        %888 = vmatprep.subr.mxu0 0.0
        %889 = vmatpush1.msra.mxu0 0.0
        %890 = vmatprep.subr.mxu0 0.0
        %891 = vmatpush1.msra.mxu0 0.0
        %892 = vmatprep.subr.mxu0 0.0
        %893 = vmatpush1.msra.mxu0 0.0
        %894 = vmatprep.subr.mxu0 0.0
        %895 = vmatpush1.msra.mxu0 0.0
        %896 = vmatprep.subr.mxu0 0.0
        %897 = vmatpush1.msra.mxu0 0.0
        %898 = vmatprep.subr.mxu0 0.0
        %899 = vmatpush1.msra.mxu0 0.0
        %900 = vmatprep.subr.mxu0 0.0
        %901 = vmatpush1.msra.mxu0 %v797
        %902 = vmatprep.subr.mxu0 0.0
        %903 = vmatpush2.msra.mxu0 0.0
        %904 = vmatprep.subr.mxu0 0.0
        %905 = vmatpush2.msra.mxu0 0.0
        %906 = vmatprep.subr.mxu0 0.0
        %907 = vmatpush2.msra.mxu0 0.0
        %908 = vmatprep.subr.mxu0 0.0
        %909 = vmatpush2.msra.mxu0 0.0
        %910 = vmatprep.subr.mxu0 0.0
        %911 = vmatpush2.msra.mxu0 0.0
        %912 = vmatprep.subr.mxu0 0.0
        %913 = vmatpush2.msra.mxu0 0.0
        %914 = vmatprep.subr.mxu0 0.0
        %915 = vmatpush2.msra.mxu0 0.0
        %916 = vmatprep.subr.mxu0 0.0
        %917 = vmatpush2.msra.mxu0 0.0
        %918 = vmatprep.subr.mxu0 0.0
        %919 = vmatpush2.msra.mxu0 0.0
        %920 = vmatprep.subr.mxu0 0.0
        %921 = vmatpush2.msra.mxu0 0.0
        %922 = vmatprep.subr.mxu0 0.0
        %923 = vmatpush2.msra.mxu0 0.0
        %924 = vmatprep.subr.mxu0 0.0
        %925 = vmatpush2.msra.mxu0 0.0
        %926 = vmatprep.subr.mxu0 0.0
        %927 = vmatpush2.msra.mxu0 0.0
        %928 = vmatprep.subr.mxu0 0.0
        %929 = vmatpush2.msra.mxu0 0.0
        %930 = vmatprep.subr.mxu0 0.0
        %931 = vmatpush2.msra.mxu0 0.0
        %932 = vmatprep.subr.mxu0 0.0
        %933 = vmatpush2.msra.mxu0 0.0
        %934 = vmatprep.mubr.f32.mxu0 0.0
        %935 = vmatmul.mubr.f32.gmra.mxu0 %v791
        %v936 = vpop.f32.mrf.mxu0
        %v937 = vadd.f32 0.0, %v936
        %v938 = vpop.f32.mrf.mxu0
        %939 = vdwg.mxu0
        %v940 = vadd.f32 %v771, %v866
        %v941 = vadd.f32 %v772, %v868
        %v942 = vadd.f32 %v773, %v937
        %s943 = scalar_lea.vmem %s3, 16
        %v944 = vld [vmem:[%s943] sm:$0xf]
        %v945 = vld [vmem:[%s276] sm:$0xff]
        %v946 = vld [vmem:[%s276 + $0x8] sm:$0xf]
        %v949 = vcombine.high %v945, %v945
        %950 = vrot.lane.b32.xlu0 %v945, 109
        %v951 = vpop.permute.xlu0 %950
        %952 = vrot.lane.b32.xlu0 %v949, 109
        %v953 = vpop.permute.xlu0 %952
        %954 = vrot.lane.b32.xlu0 %v946, 109
        %v955 = vpop.permute.xlu0 %954
        %vm956 = vcmask 891904
        %v957 = vsel %vm956, %v951, %v953
        %v958 = vsel %vm956, %v953, %v955
        %v960 = vsel %vm303, %v944, 0
        %v962 = vsel %vm307, %v957, 0
        %v964 = vsel %vm307, %v958, 0
        %v966 = vsel %vm307, %v955, 0
        %968 = vmatprep.subr.mxu0 0.0
        %969 = vmatpush1.msra.mxu0 0.0
        %970 = vmatprep.subr.mxu0 0.0
        %971 = vmatpush1.msra.mxu0 0.0
        %972 = vmatprep.subr.mxu0 0.0
        %973 = vmatpush1.msra.mxu0 0.0
        %974 = vmatprep.subr.mxu0 0.0
        %975 = vmatpush1.msra.mxu0 0.0
        %976 = vmatprep.subr.mxu0 0.0
        %977 = vmatpush1.msra.mxu0 0.0
        %978 = vmatprep.subr.mxu0 0.0
        %979 = vmatpush1.msra.mxu0 0.0
        %980 = vmatprep.subr.mxu0 0.0
        %981 = vmatpush1.msra.mxu0 0.0
        %982 = vmatprep.subr.mxu0 0.0
        %983 = vmatpush1.msra.mxu0 0.0
        %984 = vmatprep.subr.mxu0 0.0
        %985 = vmatpush1.msra.mxu0 0.0
        %986 = vmatprep.subr.mxu0 0.0
        %987 = vmatpush1.msra.mxu0 0.0
        %988 = vmatprep.subr.mxu0 0.0
        %989 = vmatpush1.msra.mxu0 0.0
        %990 = vmatprep.subr.mxu0 0.0
        %991 = vmatpush1.msra.mxu0 0.0
        %992 = vmatprep.subr.mxu0 0.0
        %993 = vmatpush1.msra.mxu0 0.0
        %994 = vmatprep.subr.mxu0 0.0
        %995 = vmatpush1.msra.mxu0 0.0
        %996 = vmatprep.subr.mxu0 0.0
        %997 = vmatpush1.msra.mxu0 0.0
        %998 = vmatprep.subr.mxu0 %v964
        %999 = vmatpush1.msra.mxu0 %v962
        %1000 = vmatprep.subr.mxu0 0.0
        %1001 = vmatpush2.msra.mxu0 0.0
        %1002 = vmatprep.subr.mxu0 0.0
        %1003 = vmatpush2.msra.mxu0 0.0
        %1004 = vmatprep.subr.mxu0 0.0
        %1005 = vmatpush2.msra.mxu0 0.0
        %1006 = vmatprep.subr.mxu0 0.0
        %1007 = vmatpush2.msra.mxu0 0.0
        %1008 = vmatprep.subr.mxu0 0.0
        %1009 = vmatpush2.msra.mxu0 0.0
        %1010 = vmatprep.subr.mxu0 0.0
        %1011 = vmatpush2.msra.mxu0 0.0
        %1012 = vmatprep.subr.mxu0 0.0
        %1013 = vmatpush2.msra.mxu0 0.0
        %1014 = vmatprep.subr.mxu0 0.0
        %1015 = vmatpush2.msra.mxu0 0.0
        %1016 = vmatprep.subr.mxu0 0.0
        %1017 = vmatpush2.msra.mxu0 0.0
        %1018 = vmatprep.subr.mxu0 0.0
        %1019 = vmatpush2.msra.mxu0 0.0
        %1020 = vmatprep.subr.mxu0 0.0
        %1021 = vmatpush2.msra.mxu0 0.0
        %1022 = vmatprep.subr.mxu0 0.0
        %1023 = vmatpush2.msra.mxu0 0.0
        %1024 = vmatprep.subr.mxu0 0.0
        %1025 = vmatpush2.msra.mxu0 0.0
        %1026 = vmatprep.subr.mxu0 0.0
        %1027 = vmatpush2.msra.mxu0 0.0
        %1028 = vmatprep.subr.mxu0 0.0
        %1029 = vmatpush2.msra.mxu0 0.0
        %1030 = vmatprep.subr.mxu0 0.0
        %1031 = vmatpush2.msra.mxu0 0.0
        %1032 = vmatprep.mubr.f32.mxu0 0.0
        %1033 = vmatmul.mubr.f32.gmra.mxu0 %v960
        %v1034 = vpop.f32.mrf.mxu0
        %v1035 = vadd.f32 0.0, %v1034
        %v1036 = vpop.f32.mrf.mxu0
        %v1037 = vadd.f32 0.0, %v1036
        %1038 = vdwg.mxu0
        %1039 = vmatprep.subr.mxu0 0.0
        %1040 = vmatpush1.msra.mxu0 0.0
        %1041 = vmatprep.subr.mxu0 0.0
        %1042 = vmatpush1.msra.mxu0 0.0
        %1043 = vmatprep.subr.mxu0 0.0
        %1044 = vmatpush1.msra.mxu0 0.0
        %1045 = vmatprep.subr.mxu0 0.0
        %1046 = vmatpush1.msra.mxu0 0.0
        %1047 = vmatprep.subr.mxu0 0.0
        %1048 = vmatpush1.msra.mxu0 0.0
        %1049 = vmatprep.subr.mxu0 0.0
        %1050 = vmatpush1.msra.mxu0 0.0
        %1051 = vmatprep.subr.mxu0 0.0
        %1052 = vmatpush1.msra.mxu0 0.0
        %1053 = vmatprep.subr.mxu0 0.0
        %1054 = vmatpush1.msra.mxu0 0.0
        %1055 = vmatprep.subr.mxu0 0.0
        %1056 = vmatpush1.msra.mxu0 0.0
        %1057 = vmatprep.subr.mxu0 0.0
        %1058 = vmatpush1.msra.mxu0 0.0
        %1059 = vmatprep.subr.mxu0 0.0
        %1060 = vmatpush1.msra.mxu0 0.0
        %1061 = vmatprep.subr.mxu0 0.0
        %1062 = vmatpush1.msra.mxu0 0.0
        %1063 = vmatprep.subr.mxu0 0.0
        %1064 = vmatpush1.msra.mxu0 0.0
        %1065 = vmatprep.subr.mxu0 0.0
        %1066 = vmatpush1.msra.mxu0 0.0
        %1067 = vmatprep.subr.mxu0 0.0
        %1068 = vmatpush1.msra.mxu0 0.0
        %1069 = vmatprep.subr.mxu0 0.0
        %1070 = vmatpush1.msra.mxu0 %v966
        %1071 = vmatprep.subr.mxu0 0.0
        %1072 = vmatpush2.msra.mxu0 0.0
        %1073 = vmatprep.subr.mxu0 0.0
        %1074 = vmatpush2.msra.mxu0 0.0
        %1075 = vmatprep.subr.mxu0 0.0
        %1076 = vmatpush2.msra.mxu0 0.0
        %1077 = vmatprep.subr.mxu0 0.0
        %1078 = vmatpush2.msra.mxu0 0.0
        %1079 = vmatprep.subr.mxu0 0.0
        %1080 = vmatpush2.msra.mxu0 0.0
        %1081 = vmatprep.subr.mxu0 0.0
        %1082 = vmatpush2.msra.mxu0 0.0
        %1083 = vmatprep.subr.mxu0 0.0
        %1084 = vmatpush2.msra.mxu0 0.0
        %1085 = vmatprep.subr.mxu0 0.0
        %1086 = vmatpush2.msra.mxu0 0.0
        %1087 = vmatprep.subr.mxu0 0.0
        %1088 = vmatpush2.msra.mxu0 0.0
        %1089 = vmatprep.subr.mxu0 0.0
        %1090 = vmatpush2.msra.mxu0 0.0
        %1091 = vmatprep.subr.mxu0 0.0
        %1092 = vmatpush2.msra.mxu0 0.0
        %1093 = vmatprep.subr.mxu0 0.0
        %1094 = vmatpush2.msra.mxu0 0.0
        %1095 = vmatprep.subr.mxu0 0.0
        %1096 = vmatpush2.msra.mxu0 0.0
        %1097 = vmatprep.subr.mxu0 0.0
        %1098 = vmatpush2.msra.mxu0 0.0
        %1099 = vmatprep.subr.mxu0 0.0
        %1100 = vmatpush2.msra.mxu0 0.0
        %1101 = vmatprep.subr.mxu0 0.0
        %1102 = vmatpush2.msra.mxu0 0.0
        %1103 = vmatprep.mubr.f32.mxu0 0.0
        %1104 = vmatmul.mubr.f32.gmra.mxu0 %v960
        %v1105 = vpop.f32.mrf.mxu0
        %v1106 = vadd.f32 0.0, %v1105
        %v1107 = vpop.f32.mrf.mxu0
        %1108 = vdwg.mxu0
        %v1109 = vadd.f32 %v940, %v1035
        %v1110 = vadd.f32 %v941, %v1037
        %v1111 = vadd.f32 %v942, %v1106
        %s1112 = scalar_lea.vmem %s3, 20
        %v1113 = vld [vmem:[%s1112] sm:$0xf]
        %v1114 = vld [vmem:[%s276] sm:$0xff]
        %v1115 = vld [vmem:[%s276 + $0x8] sm:$0xf]
        %v1118 = vcombine.high %v1114, %v1114
        %1119 = vrot.lane.b32.xlu0 %v1114, 108
        %v1120 = vpop.permute.xlu0 %1119
        %1121 = vrot.lane.b32.xlu0 %v1118, 108
        %v1122 = vpop.permute.xlu0 %1121
        %1123 = vrot.lane.b32.xlu0 %v1115, 108
        %v1124 = vpop.permute.xlu0 %1123
        %vm1125 = vcmask 883712
        %v1126 = vsel %vm1125, %v1120, %v1122
        %v1127 = vsel %vm1125, %v1122, %v1124
        %v1129 = vsel %vm303, %v1113, 0
        %v1131 = vsel %vm307, %v1126, 0
        %v1133 = vsel %vm307, %v1127, 0
        %v1135 = vsel %vm307, %v1124, 0
        %1137 = vmatprep.subr.mxu0 0.0
        %1138 = vmatpush1.msra.mxu0 0.0
        %1139 = vmatprep.subr.mxu0 0.0
        %1140 = vmatpush1.msra.mxu0 0.0
        %1141 = vmatprep.subr.mxu0 0.0
        %1142 = vmatpush1.msra.mxu0 0.0
        %1143 = vmatprep.subr.mxu0 0.0
        %1144 = vmatpush1.msra.mxu0 0.0
        %1145 = vmatprep.subr.mxu0 0.0
        %1146 = vmatpush1.msra.mxu0 0.0
        %1147 = vmatprep.subr.mxu0 0.0
        %1148 = vmatpush1.msra.mxu0 0.0
        %1149 = vmatprep.subr.mxu0 0.0
        %1150 = vmatpush1.msra.mxu0 0.0
        %1151 = vmatprep.subr.mxu0 0.0
        %1152 = vmatpush1.msra.mxu0 0.0
        %1153 = vmatprep.subr.mxu0 0.0
        %1154 = vmatpush1.msra.mxu0 0.0
        %1155 = vmatprep.subr.mxu0 0.0
        %1156 = vmatpush1.msra.mxu0 0.0
        %1157 = vmatprep.subr.mxu0 0.0
        %1158 = vmatpush1.msra.mxu0 0.0
        %1159 = vmatprep.subr.mxu0 0.0
        %1160 = vmatpush1.msra.mxu0 0.0
        %1161 = vmatprep.subr.mxu0 0.0
        %1162 = vmatpush1.msra.mxu0 0.0
        %1163 = vmatprep.subr.mxu0 0.0
        %1164 = vmatpush1.msra.mxu0 0.0
        %1165 = vmatprep.subr.mxu0 0.0
        %1166 = vmatpush1.msra.mxu0 0.0
        %1167 = vmatprep.subr.mxu0 %v1133
        %1168 = vmatpush1.msra.mxu0 %v1131
        %1169 = vmatprep.subr.mxu0 0.0
        %1170 = vmatpush2.msra.mxu0 0.0
        %1171 = vmatprep.subr.mxu0 0.0
        %1172 = vmatpush2.msra.mxu0 0.0
        %1173 = vmatprep.subr.mxu0 0.0
        %1174 = vmatpush2.msra.mxu0 0.0
        %1175 = vmatprep.subr.mxu0 0.0
        %1176 = vmatpush2.msra.mxu0 0.0
        %1177 = vmatprep.subr.mxu0 0.0
        %1178 = vmatpush2.msra.mxu0 0.0
        %1179 = vmatprep.subr.mxu0 0.0
        %1180 = vmatpush2.msra.mxu0 0.0
        %1181 = vmatprep.subr.mxu0 0.0
        %1182 = vmatpush2.msra.mxu0 0.0
        %1183 = vmatprep.subr.mxu0 0.0
        %1184 = vmatpush2.msra.mxu0 0.0
        %1185 = vmatprep.subr.mxu0 0.0
        %1186 = vmatpush2.msra.mxu0 0.0
        %1187 = vmatprep.subr.mxu0 0.0
        %1188 = vmatpush2.msra.mxu0 0.0
        %1189 = vmatprep.subr.mxu0 0.0
        %1190 = vmatpush2.msra.mxu0 0.0
        %1191 = vmatprep.subr.mxu0 0.0
        %1192 = vmatpush2.msra.mxu0 0.0
        %1193 = vmatprep.subr.mxu0 0.0
        %1194 = vmatpush2.msra.mxu0 0.0
        %1195 = vmatprep.subr.mxu0 0.0
        %1196 = vmatpush2.msra.mxu0 0.0
        %1197 = vmatprep.subr.mxu0 0.0
        %1198 = vmatpush2.msra.mxu0 0.0
        %1199 = vmatprep.subr.mxu0 0.0
        %1200 = vmatpush2.msra.mxu0 0.0
        %1201 = vmatprep.mubr.f32.mxu0 0.0
        %1202 = vmatmul.mubr.f32.gmra.mxu0 %v1129
        %v1203 = vpop.f32.mrf.mxu0
        %v1204 = vadd.f32 0.0, %v1203
        %v1205 = vpop.f32.mrf.mxu0
        %v1206 = vadd.f32 0.0, %v1205
        %1207 = vdwg.mxu0
        %1208 = vmatprep.subr.mxu0 0.0
        %1209 = vmatpush1.msra.mxu0 0.0
        %1210 = vmatprep.subr.mxu0 0.0
        %1211 = vmatpush1.msra.mxu0 0.0
        %1212 = vmatprep.subr.mxu0 0.0
        %1213 = vmatpush1.msra.mxu0 0.0
        %1214 = vmatprep.subr.mxu0 0.0
        %1215 = vmatpush1.msra.mxu0 0.0
        %1216 = vmatprep.subr.mxu0 0.0
        %1217 = vmatpush1.msra.mxu0 0.0
        %1218 = vmatprep.subr.mxu0 0.0
        %1219 = vmatpush1.msra.mxu0 0.0
        %1220 = vmatprep.subr.mxu0 0.0
        %1221 = vmatpush1.msra.mxu0 0.0
        %1222 = vmatprep.subr.mxu0 0.0
        %1223 = vmatpush1.msra.mxu0 0.0
        %1224 = vmatprep.subr.mxu0 0.0
        %1225 = vmatpush1.msra.mxu0 0.0
        %1226 = vmatprep.subr.mxu0 0.0
        %1227 = vmatpush1.msra.mxu0 0.0
        %1228 = vmatprep.subr.mxu0 0.0
        %1229 = vmatpush1.msra.mxu0 0.0
        %1230 = vmatprep.subr.mxu0 0.0
        %1231 = vmatpush1.msra.mxu0 0.0
        %1232 = vmatprep.subr.mxu0 0.0
        %1233 = vmatpush1.msra.mxu0 0.0
        %1234 = vmatprep.subr.mxu0 0.0
        %1235 = vmatpush1.msra.mxu0 0.0
        %1236 = vmatprep.subr.mxu0 0.0
        %1237 = vmatpush1.msra.mxu0 0.0
        %1238 = vmatprep.subr.mxu0 0.0
        %1239 = vmatpush1.msra.mxu0 %v1135
        %1240 = vmatprep.subr.mxu0 0.0
        %1241 = vmatpush2.msra.mxu0 0.0
        %1242 = vmatprep.subr.mxu0 0.0
        %1243 = vmatpush2.msra.mxu0 0.0
        %1244 = vmatprep.subr.mxu0 0.0
        %1245 = vmatpush2.msra.mxu0 0.0
        %1246 = vmatprep.subr.mxu0 0.0
        %1247 = vmatpush2.msra.mxu0 0.0
        %1248 = vmatprep.subr.mxu0 0.0
        %1249 = vmatpush2.msra.mxu0 0.0
        %1250 = vmatprep.subr.mxu0 0.0
        %1251 = vmatpush2.msra.mxu0 0.0
        %1252 = vmatprep.subr.mxu0 0.0
        %1253 = vmatpush2.msra.mxu0 0.0
        %1254 = vmatprep.subr.mxu0 0.0
        %1255 = vmatpush2.msra.mxu0 0.0
        %1256 = vmatprep.subr.mxu0 0.0
        %1257 = vmatpush2.msra.mxu0 0.0
        %1258 = vmatprep.subr.mxu0 0.0
        %1259 = vmatpush2.msra.mxu0 0.0
        %1260 = vmatprep.subr.mxu0 0.0
        %1261 = vmatpush2.msra.mxu0 0.0
        %1262 = vmatprep.subr.mxu0 0.0
        %1263 = vmatpush2.msra.mxu0 0.0
        %1264 = vmatprep.subr.mxu0 0.0
        %1265 = vmatpush2.msra.mxu0 0.0
        %1266 = vmatprep.subr.mxu0 0.0
        %1267 = vmatpush2.msra.mxu0 0.0
        %1268 = vmatprep.subr.mxu0 0.0
        %1269 = vmatpush2.msra.mxu0 0.0
        %1270 = vmatprep.subr.mxu0 0.0
        %1271 = vmatpush2.msra.mxu0 0.0
        %1272 = vmatprep.mubr.f32.mxu0 0.0
        %1273 = vmatmul.mubr.f32.gmra.mxu0 %v1129
        %v1274 = vpop.f32.mrf.mxu0
        %v1275 = vadd.f32 0.0, %v1274
        %v1276 = vpop.f32.mrf.mxu0
        %1277 = vdwg.mxu0
        %v1278 = vadd.f32 %v1109, %v1204
        %v1279 = vadd.f32 %v1110, %v1206
        %v1280 = vadd.f32 %v1111, %v1275
        %s1281 = scalar_lea.vmem %s3, 24
        %v1282 = vld [vmem:[%s1281] sm:$0xf]
        %v1283 = vld [vmem:[%s276] sm:$0xff]
        %v1284 = vld [vmem:[%s276 + $0x8] sm:$0xf]
        %v1287 = vcombine.high %v1283, %v1283
        %1288 = vrot.lane.b32.xlu0 %v1283, 92
        %v1289 = vpop.permute.xlu0 %1288
        %1290 = vrot.lane.b32.xlu0 %v1287, 92
        %v1291 = vpop.permute.xlu0 %1290
        %1292 = vrot.lane.b32.xlu0 %v1284, 92
        %v1293 = vpop.permute.xlu0 %1292
        %vm1294 = vcmask 752640
        %v1295 = vsel %vm1294, %v1289, %v1291
        %v1296 = vsel %vm1294, %v1291, %v1293
        %v1298 = vsel %vm303, %v1282, 0
        %v1300 = vsel %vm307, %v1295, 0
        %v1302 = vsel %vm307, %v1296, 0
        %v1304 = vsel %vm307, %v1293, 0
        %1306 = vmatprep.subr.mxu0 0.0
        %1307 = vmatpush1.msra.mxu0 0.0
        %1308 = vmatprep.subr.mxu0 0.0
        %1309 = vmatpush1.msra.mxu0 0.0
        %1310 = vmatprep.subr.mxu0 0.0
        %1311 = vmatpush1.msra.mxu0 0.0
        %1312 = vmatprep.subr.mxu0 0.0
        %1313 = vmatpush1.msra.mxu0 0.0
        %1314 = vmatprep.subr.mxu0 0.0
        %1315 = vmatpush1.msra.mxu0 0.0
        %1316 = vmatprep.subr.mxu0 0.0
        %1317 = vmatpush1.msra.mxu0 0.0
        %1318 = vmatprep.subr.mxu0 0.0
        %1319 = vmatpush1.msra.mxu0 0.0
        %1320 = vmatprep.subr.mxu0 0.0
        %1321 = vmatpush1.msra.mxu0 0.0
        %1322 = vmatprep.subr.mxu0 0.0
        %1323 = vmatpush1.msra.mxu0 0.0
        %1324 = vmatprep.subr.mxu0 0.0
        %1325 = vmatpush1.msra.mxu0 0.0
        %1326 = vmatprep.subr.mxu0 0.0
        %1327 = vmatpush1.msra.mxu0 0.0
        %1328 = vmatprep.subr.mxu0 0.0
        %1329 = vmatpush1.msra.mxu0 0.0
        %1330 = vmatprep.subr.mxu0 0.0
        %1331 = vmatpush1.msra.mxu0 0.0
        %1332 = vmatprep.subr.mxu0 0.0
        %1333 = vmatpush1.msra.mxu0 0.0
        %1334 = vmatprep.subr.mxu0 0.0
        %1335 = vmatpush1.msra.mxu0 0.0
        %1336 = vmatprep.subr.mxu0 %v1302
        %1337 = vmatpush1.msra.mxu0 %v1300
        %1338 = vmatprep.subr.mxu0 0.0
        %1339 = vmatpush2.msra.mxu0 0.0
        %1340 = vmatprep.subr.mxu0 0.0
        %1341 = vmatpush2.msra.mxu0 0.0
        %1342 = vmatprep.subr.mxu0 0.0
        %1343 = vmatpush2.msra.mxu0 0.0
        %1344 = vmatprep.subr.mxu0 0.0
        %1345 = vmatpush2.msra.mxu0 0.0
        %1346 = vmatprep.subr.mxu0 0.0
        %1347 = vmatpush2.msra.mxu0 0.0
        %1348 = vmatprep.subr.mxu0 0.0
        %1349 = vmatpush2.msra.mxu0 0.0
        %1350 = vmatprep.subr.mxu0 0.0
        %1351 = vmatpush2.msra.mxu0 0.0
        %1352 = vmatprep.subr.mxu0 0.0
        %1353 = vmatpush2.msra.mxu0 0.0
        %1354 = vmatprep.subr.mxu0 0.0
        %1355 = vmatpush2.msra.mxu0 0.0
        %1356 = vmatprep.subr.mxu0 0.0
        %1357 = vmatpush2.msra.mxu0 0.0
        %1358 = vmatprep.subr.mxu0 0.0
        %1359 = vmatpush2.msra.mxu0 0.0
        %1360 = vmatprep.subr.mxu0 0.0
        %1361 = vmatpush2.msra.mxu0 0.0
        %1362 = vmatprep.subr.mxu0 0.0
        %1363 = vmatpush2.msra.mxu0 0.0
        %1364 = vmatprep.subr.mxu0 0.0
        %1365 = vmatpush2.msra.mxu0 0.0
        %1366 = vmatprep.subr.mxu0 0.0
        %1367 = vmatpush2.msra.mxu0 0.0
        %1368 = vmatprep.subr.mxu0 0.0
        %1369 = vmatpush2.msra.mxu0 0.0
        %1370 = vmatprep.mubr.f32.mxu0 0.0
        %1371 = vmatmul.mubr.f32.gmra.mxu0 %v1298
        %v1372 = vpop.f32.mrf.mxu0
        %v1373 = vadd.f32 0.0, %v1372
        %v1374 = vpop.f32.mrf.mxu0
        %v1375 = vadd.f32 0.0, %v1374
        %1376 = vdwg.mxu0
        %1377 = vmatprep.subr.mxu0 0.0
        %1378 = vmatpush1.msra.mxu0 0.0
        %1379 = vmatprep.subr.mxu0 0.0
        %1380 = vmatpush1.msra.mxu0 0.0
        %1381 = vmatprep.subr.mxu0 0.0
        %1382 = vmatpush1.msra.mxu0 0.0
        %1383 = vmatprep.subr.mxu0 0.0
        %1384 = vmatpush1.msra.mxu0 0.0
        %1385 = vmatprep.subr.mxu0 0.0
        %1386 = vmatpush1.msra.mxu0 0.0
        %1387 = vmatprep.subr.mxu0 0.0
        %1388 = vmatpush1.msra.mxu0 0.0
        %1389 = vmatprep.subr.mxu0 0.0
        %1390 = vmatpush1.msra.mxu0 0.0
        %1391 = vmatprep.subr.mxu0 0.0
        %1392 = vmatpush1.msra.mxu0 0.0
        %1393 = vmatprep.subr.mxu0 0.0
        %1394 = vmatpush1.msra.mxu0 0.0
        %1395 = vmatprep.subr.mxu0 0.0
        %1396 = vmatpush1.msra.mxu0 0.0
        %1397 = vmatprep.subr.mxu0 0.0
        %1398 = vmatpush1.msra.mxu0 0.0
        %1399 = vmatprep.subr.mxu0 0.0
        %1400 = vmatpush1.msra.mxu0 0.0
        %1401 = vmatprep.subr.mxu0 0.0
        %1402 = vmatpush1.msra.mxu0 0.0
        %1403 = vmatprep.subr.mxu0 0.0
        %1404 = vmatpush1.msra.mxu0 0.0
        %1405 = vmatprep.subr.mxu0 0.0
        %1406 = vmatpush1.msra.mxu0 0.0
        %1407 = vmatprep.subr.mxu0 0.0
        %1408 = vmatpush1.msra.mxu0 %v1304
        %1409 = vmatprep.subr.mxu0 0.0
        %1410 = vmatpush2.msra.mxu0 0.0
        %1411 = vmatprep.subr.mxu0 0.0
        %1412 = vmatpush2.msra.mxu0 0.0
        %1413 = vmatprep.subr.mxu0 0.0
        %1414 = vmatpush2.msra.mxu0 0.0
        %1415 = vmatprep.subr.mxu0 0.0
        %1416 = vmatpush2.msra.mxu0 0.0
        %1417 = vmatprep.subr.mxu0 0.0
        %1418 = vmatpush2.msra.mxu0 0.0
        %1419 = vmatprep.subr.mxu0 0.0
        %1420 = vmatpush2.msra.mxu0 0.0
        %1421 = vmatprep.subr.mxu0 0.0
        %1422 = vmatpush2.msra.mxu0 0.0
        %1423 = vmatprep.subr.mxu0 0.0
        %1424 = vmatpush2.msra.mxu0 0.0
        %1425 = vmatprep.subr.mxu0 0.0
        %1426 = vmatpush2.msra.mxu0 0.0
        %1427 = vmatprep.subr.mxu0 0.0
        %1428 = vmatpush2.msra.mxu0 0.0
        %1429 = vmatprep.subr.mxu0 0.0
        %1430 = vmatpush2.msra.mxu0 0.0
        %1431 = vmatprep.subr.mxu0 0.0
        %1432 = vmatpush2.msra.mxu0 0.0
        %1433 = vmatprep.subr.mxu0 0.0
        %1434 = vmatpush2.msra.mxu0 0.0
        %1435 = vmatprep.subr.mxu0 0.0
        %1436 = vmatpush2.msra.mxu0 0.0
        %1437 = vmatprep.subr.mxu0 0.0
        %1438 = vmatpush2.msra.mxu0 0.0
        %1439 = vmatprep.subr.mxu0 0.0
        %1440 = vmatpush2.msra.mxu0 0.0
        %1441 = vmatprep.mubr.f32.mxu0 0.0
        %1442 = vmatmul.mubr.f32.gmra.mxu0 %v1298
        %v1443 = vpop.f32.mrf.mxu0
        %v1444 = vadd.f32 0.0, %v1443
        %v1445 = vpop.f32.mrf.mxu0
        %1446 = vdwg.mxu0
        %v1447 = vadd.f32 %v1278, %v1373
        %v1448 = vadd.f32 %v1279, %v1375
        %v1449 = vadd.f32 %v1280, %v1444
        %s1450 = scalar_lea.vmem %s3, 28
        %v1451 = vld [vmem:[%s1450] sm:$0xf]
        %v1452 = vld [vmem:[%s276] sm:$0xff]
        %v1453 = vld [vmem:[%s276 + $0x8] sm:$0xf]
        %v1456 = vcombine.high %v1452, %v1452
        %1457 = vrot.lane.b32.xlu0 %v1452, 91
        %v1458 = vpop.permute.xlu0 %1457
        %1459 = vrot.lane.b32.xlu0 %v1456, 91
        %v1460 = vpop.permute.xlu0 %1459
        %1461 = vrot.lane.b32.xlu0 %v1453, 91
        %v1462 = vpop.permute.xlu0 %1461
        %vm1463 = vcmask 744448
        %v1464 = vsel %vm1463, %v1458, %v1460
        %v1465 = vsel %vm1463, %v1460, %v1462
        %v1467 = vsel %vm303, %v1451, 0
        %v1469 = vsel %vm307, %v1464, 0
        %v1471 = vsel %vm307, %v1465, 0
        %v1473 = vsel %vm307, %v1462, 0
        %1475 = vmatprep.subr.mxu0 0.0
        %1476 = vmatpush1.msra.mxu0 0.0
        %1477 = vmatprep.subr.mxu0 0.0
        %1478 = vmatpush1.msra.mxu0 0.0
        %1479 = vmatprep.subr.mxu0 0.0
        %1480 = vmatpush1.msra.mxu0 0.0
        %1481 = vmatprep.subr.mxu0 0.0
        %1482 = vmatpush1.msra.mxu0 0.0
        %1483 = vmatprep.subr.mxu0 0.0
        %1484 = vmatpush1.msra.mxu0 0.0
        %1485 = vmatprep.subr.mxu0 0.0
        %1486 = vmatpush1.msra.mxu0 0.0
        %1487 = vmatprep.subr.mxu0 0.0
        %1488 = vmatpush1.msra.mxu0 0.0
        %1489 = vmatprep.subr.mxu0 0.0
        %1490 = vmatpush1.msra.mxu0 0.0
        %1491 = vmatprep.subr.mxu0 0.0
        %1492 = vmatpush1.msra.mxu0 0.0
        %1493 = vmatprep.subr.mxu0 0.0
        %1494 = vmatpush1.msra.mxu0 0.0
        %1495 = vmatprep.subr.mxu0 0.0
        %1496 = vmatpush1.msra.mxu0 0.0
        %1497 = vmatprep.subr.mxu0 0.0
        %1498 = vmatpush1.msra.mxu0 0.0
        %1499 = vmatprep.subr.mxu0 0.0
        %1500 = vmatpush1.msra.mxu0 0.0
        %1501 = vmatprep.subr.mxu0 0.0
        %1502 = vmatpush1.msra.mxu0 0.0
        %1503 = vmatprep.subr.mxu0 0.0
        %1504 = vmatpush1.msra.mxu0 0.0
        %1505 = vmatprep.subr.mxu0 %v1471
        %1506 = vmatpush1.msra.mxu0 %v1469
        %1507 = vmatprep.subr.mxu0 0.0
        %1508 = vmatpush2.msra.mxu0 0.0
        %1509 = vmatprep.subr.mxu0 0.0
        %1510 = vmatpush2.msra.mxu0 0.0
        %1511 = vmatprep.subr.mxu0 0.0
        %1512 = vmatpush2.msra.mxu0 0.0
        %1513 = vmatprep.subr.mxu0 0.0
        %1514 = vmatpush2.msra.mxu0 0.0
        %1515 = vmatprep.subr.mxu0 0.0
        %1516 = vmatpush2.msra.mxu0 0.0
        %1517 = vmatprep.subr.mxu0 0.0
        %1518 = vmatpush2.msra.mxu0 0.0
        %1519 = vmatprep.subr.mxu0 0.0
        %1520 = vmatpush2.msra.mxu0 0.0
        %1521 = vmatprep.subr.mxu0 0.0
        %1522 = vmatpush2.msra.mxu0 0.0
        %1523 = vmatprep.subr.mxu0 0.0
        %1524 = vmatpush2.msra.mxu0 0.0
        %1525 = vmatprep.subr.mxu0 0.0
        %1526 = vmatpush2.msra.mxu0 0.0
        %1527 = vmatprep.subr.mxu0 0.0
        %1528 = vmatpush2.msra.mxu0 0.0
        %1529 = vmatprep.subr.mxu0 0.0
        %1530 = vmatpush2.msra.mxu0 0.0
        %1531 = vmatprep.subr.mxu0 0.0
        %1532 = vmatpush2.msra.mxu0 0.0
        %1533 = vmatprep.subr.mxu0 0.0
        %1534 = vmatpush2.msra.mxu0 0.0
        %1535 = vmatprep.subr.mxu0 0.0
        %1536 = vmatpush2.msra.mxu0 0.0
        %1537 = vmatprep.subr.mxu0 0.0
        %1538 = vmatpush2.msra.mxu0 0.0
        %1539 = vmatprep.mubr.f32.mxu0 0.0
        %1540 = vmatmul.mubr.f32.gmra.mxu0 %v1467
        %v1541 = vpop.f32.mrf.mxu0
        %v1542 = vadd.f32 0.0, %v1541
        %v1543 = vpop.f32.mrf.mxu0
        %v1544 = vadd.f32 0.0, %v1543
        %1545 = vdwg.mxu0
        %1546 = vmatprep.subr.mxu0 0.0
        %1547 = vmatpush1.msra.mxu0 0.0
        %1548 = vmatprep.subr.mxu0 0.0
        %1549 = vmatpush1.msra.mxu0 0.0
        %1550 = vmatprep.subr.mxu0 0.0
        %1551 = vmatpush1.msra.mxu0 0.0
        %1552 = vmatprep.subr.mxu0 0.0
        %1553 = vmatpush1.msra.mxu0 0.0
        %1554 = vmatprep.subr.mxu0 0.0
        %1555 = vmatpush1.msra.mxu0 0.0
        %1556 = vmatprep.subr.mxu0 0.0
        %1557 = vmatpush1.msra.mxu0 0.0
        %1558 = vmatprep.subr.mxu0 0.0
        %1559 = vmatpush1.msra.mxu0 0.0
        %1560 = vmatprep.subr.mxu0 0.0
        %1561 = vmatpush1.msra.mxu0 0.0
        %1562 = vmatprep.subr.mxu0 0.0
        %1563 = vmatpush1.msra.mxu0 0.0
        %1564 = vmatprep.subr.mxu0 0.0
        %1565 = vmatpush1.msra.mxu0 0.0
        %1566 = vmatprep.subr.mxu0 0.0
        %1567 = vmatpush1.msra.mxu0 0.0
        %1568 = vmatprep.subr.mxu0 0.0
        %1569 = vmatpush1.msra.mxu0 0.0
        %1570 = vmatprep.subr.mxu0 0.0
        %1571 = vmatpush1.msra.mxu0 0.0
        %1572 = vmatprep.subr.mxu0 0.0
        %1573 = vmatpush1.msra.mxu0 0.0
        %1574 = vmatprep.subr.mxu0 0.0
        %1575 = vmatpush1.msra.mxu0 0.0
        %1576 = vmatprep.subr.mxu0 0.0
        %1577 = vmatpush1.msra.mxu0 %v1473
        %1578 = vmatprep.subr.mxu0 0.0
        %1579 = vmatpush2.msra.mxu0 0.0
        %1580 = vmatprep.subr.mxu0 0.0
        %1581 = vmatpush2.msra.mxu0 0.0
        %1582 = vmatprep.subr.mxu0 0.0
        %1583 = vmatpush2.msra.mxu0 0.0
        %1584 = vmatprep.subr.mxu0 0.0
        %1585 = vmatpush2.msra.mxu0 0.0
        %1586 = vmatprep.subr.mxu0 0.0
        %1587 = vmatpush2.msra.mxu0 0.0
        %1588 = vmatprep.subr.mxu0 0.0
        %1589 = vmatpush2.msra.mxu0 0.0
        %1590 = vmatprep.subr.mxu0 0.0
        %1591 = vmatpush2.msra.mxu0 0.0
        %1592 = vmatprep.subr.mxu0 0.0
        %1593 = vmatpush2.msra.mxu0 0.0
        %1594 = vmatprep.subr.mxu0 0.0
        %1595 = vmatpush2.msra.mxu0 0.0
        %1596 = vmatprep.subr.mxu0 0.0
        %1597 = vmatpush2.msra.mxu0 0.0
        %1598 = vmatprep.subr.mxu0 0.0
        %1599 = vmatpush2.msra.mxu0 0.0
        %1600 = vmatprep.subr.mxu0 0.0
        %1601 = vmatpush2.msra.mxu0 0.0
        %1602 = vmatprep.subr.mxu0 0.0
        %1603 = vmatpush2.msra.mxu0 0.0
        %1604 = vmatprep.subr.mxu0 0.0
        %1605 = vmatpush2.msra.mxu0 0.0
        %1606 = vmatprep.subr.mxu0 0.0
        %1607 = vmatpush2.msra.mxu0 0.0
        %1608 = vmatprep.subr.mxu0 0.0
        %1609 = vmatpush2.msra.mxu0 0.0
        %1610 = vmatprep.mubr.f32.mxu0 0.0
        %1611 = vmatmul.mubr.f32.gmra.mxu0 %v1467
        %v1612 = vpop.f32.mrf.mxu0
        %v1613 = vadd.f32 0.0, %v1612
        %v1614 = vpop.f32.mrf.mxu0
        %1615 = vdwg.mxu0
        %v1616 = vadd.f32 %v1447, %v1542
        %v1617 = vadd.f32 %v1448, %v1544
        %v1618 = vadd.f32 %v1449, %v1613
        %s1619 = scalar_lea.vmem %s3, 32
        %v1620 = vld [vmem:[%s1619] sm:$0xf]
        %v1621 = vld [vmem:[%s276] sm:$0xff]
        %v1622 = vld [vmem:[%s276 + $0x8] sm:$0xf]
        %v1625 = vcombine.high %v1621, %v1621
        %1626 = vrot.lane.b32.xlu0 %v1621, 90
        %v1627 = vpop.permute.xlu0 %1626
        %1628 = vrot.lane.b32.xlu0 %v1625, 90
        %v1629 = vpop.permute.xlu0 %1628
        %1630 = vrot.lane.b32.xlu0 %v1622, 90
        %v1631 = vpop.permute.xlu0 %1630
        %vm1632 = vcmask 736256
        %v1633 = vsel %vm1632, %v1627, %v1629
        %v1634 = vsel %vm1632, %v1629, %v1631
        %v1636 = vsel %vm303, %v1620, 0
        %v1638 = vsel %vm307, %v1633, 0
        %v1640 = vsel %vm307, %v1634, 0
        %v1642 = vsel %vm307, %v1631, 0
        %1644 = vmatprep.subr.mxu0 0.0
        %1645 = vmatpush1.msra.mxu0 0.0
        %1646 = vmatprep.subr.mxu0 0.0
        %1647 = vmatpush1.msra.mxu0 0.0
        %1648 = vmatprep.subr.mxu0 0.0
        %1649 = vmatpush1.msra.mxu0 0.0
        %1650 = vmatprep.subr.mxu0 0.0
        %1651 = vmatpush1.msra.mxu0 0.0
        %1652 = vmatprep.subr.mxu0 0.0
        %1653 = vmatpush1.msra.mxu0 0.0
        %1654 = vmatprep.subr.mxu0 0.0
        %1655 = vmatpush1.msra.mxu0 0.0
        %1656 = vmatprep.subr.mxu0 0.0
        %1657 = vmatpush1.msra.mxu0 0.0
        %1658 = vmatprep.subr.mxu0 0.0
        %1659 = vmatpush1.msra.mxu0 0.0
        %1660 = vmatprep.subr.mxu0 0.0
        %1661 = vmatpush1.msra.mxu0 0.0
        %1662 = vmatprep.subr.mxu0 0.0
        %1663 = vmatpush1.msra.mxu0 0.0
        %1664 = vmatprep.subr.mxu0 0.0
        %1665 = vmatpush1.msra.mxu0 0.0
        %1666 = vmatprep.subr.mxu0 0.0
        %1667 = vmatpush1.msra.mxu0 0.0
        %1668 = vmatprep.subr.mxu0 0.0
        %1669 = vmatpush1.msra.mxu0 0.0
        %1670 = vmatprep.subr.mxu0 0.0
        %1671 = vmatpush1.msra.mxu0 0.0
        %1672 = vmatprep.subr.mxu0 0.0
        %1673 = vmatpush1.msra.mxu0 0.0
        %1674 = vmatprep.subr.mxu0 %v1640
        %1675 = vmatpush1.msra.mxu0 %v1638
        %1676 = vmatprep.subr.mxu0 0.0
        %1677 = vmatpush2.msra.mxu0 0.0
        %1678 = vmatprep.subr.mxu0 0.0
        %1679 = vmatpush2.msra.mxu0 0.0
        %1680 = vmatprep.subr.mxu0 0.0
        %1681 = vmatpush2.msra.mxu0 0.0
        %1682 = vmatprep.subr.mxu0 0.0
        %1683 = vmatpush2.msra.mxu0 0.0
        %1684 = vmatprep.subr.mxu0 0.0
        %1685 = vmatpush2.msra.mxu0 0.0
        %1686 = vmatprep.subr.mxu0 0.0
        %1687 = vmatpush2.msra.mxu0 0.0
        %1688 = vmatprep.subr.mxu0 0.0
        %1689 = vmatpush2.msra.mxu0 0.0
        %1690 = vmatprep.subr.mxu0 0.0
        %1691 = vmatpush2.msra.mxu0 0.0
        %1692 = vmatprep.subr.mxu0 0.0
        %1693 = vmatpush2.msra.mxu0 0.0
        %1694 = vmatprep.subr.mxu0 0.0
        %1695 = vmatpush2.msra.mxu0 0.0
        %1696 = vmatprep.subr.mxu0 0.0
        %1697 = vmatpush2.msra.mxu0 0.0
        %1698 = vmatprep.subr.mxu0 0.0
        %1699 = vmatpush2.msra.mxu0 0.0
        %1700 = vmatprep.subr.mxu0 0.0
        %1701 = vmatpush2.msra.mxu0 0.0
        %1702 = vmatprep.subr.mxu0 0.0
        %1703 = vmatpush2.msra.mxu0 0.0
        %1704 = vmatprep.subr.mxu0 0.0
        %1705 = vmatpush2.msra.mxu0 0.0
        %1706 = vmatprep.subr.mxu0 0.0
        %1707 = vmatpush2.msra.mxu0 0.0
        %1708 = vmatprep.mubr.f32.mxu0 0.0
        %1709 = vmatmul.mubr.f32.gmra.mxu0 %v1636
        %v1710 = vpop.f32.mrf.mxu0
        %v1711 = vadd.f32 0.0, %v1710
        %v1712 = vpop.f32.mrf.mxu0
        %v1713 = vadd.f32 0.0, %v1712
        %1714 = vdwg.mxu0
        %1715 = vmatprep.subr.mxu0 0.0
        %1716 = vmatpush1.msra.mxu0 0.0
        %1717 = vmatprep.subr.mxu0 0.0
        %1718 = vmatpush1.msra.mxu0 0.0
        %1719 = vmatprep.subr.mxu0 0.0
        %1720 = vmatpush1.msra.mxu0 0.0
        %1721 = vmatprep.subr.mxu0 0.0
        %1722 = vmatpush1.msra.mxu0 0.0
        %1723 = vmatprep.subr.mxu0 0.0
        %1724 = vmatpush1.msra.mxu0 0.0
        %1725 = vmatprep.subr.mxu0 0.0
        %1726 = vmatpush1.msra.mxu0 0.0
        %1727 = vmatprep.subr.mxu0 0.0
        %1728 = vmatpush1.msra.mxu0 0.0
        %1729 = vmatprep.subr.mxu0 0.0
        %1730 = vmatpush1.msra.mxu0 0.0
        %1731 = vmatprep.subr.mxu0 0.0
        %1732 = vmatpush1.msra.mxu0 0.0
        %1733 = vmatprep.subr.mxu0 0.0
        %1734 = vmatpush1.msra.mxu0 0.0
        %1735 = vmatprep.subr.mxu0 0.0
        %1736 = vmatpush1.msra.mxu0 0.0
        %1737 = vmatprep.subr.mxu0 0.0
        %1738 = vmatpush1.msra.mxu0 0.0
        %1739 = vmatprep.subr.mxu0 0.0
        %1740 = vmatpush1.msra.mxu0 0.0
        %1741 = vmatprep.subr.mxu0 0.0
        %1742 = vmatpush1.msra.mxu0 0.0
        %1743 = vmatprep.subr.mxu0 0.0
        %1744 = vmatpush1.msra.mxu0 0.0
        %1745 = vmatprep.subr.mxu0 0.0
        %1746 = vmatpush1.msra.mxu0 %v1642
        %1747 = vmatprep.subr.mxu0 0.0
        %1748 = vmatpush2.msra.mxu0 0.0
        %1749 = vmatprep.subr.mxu0 0.0
        %1750 = vmatpush2.msra.mxu0 0.0
        %1751 = vmatprep.subr.mxu0 0.0
        %1752 = vmatpush2.msra.mxu0 0.0
        %1753 = vmatprep.subr.mxu0 0.0
        %1754 = vmatpush2.msra.mxu0 0.0
        %1755 = vmatprep.subr.mxu0 0.0
        %1756 = vmatpush2.msra.mxu0 0.0
        %1757 = vmatprep.subr.mxu0 0.0
        %1758 = vmatpush2.msra.mxu0 0.0
        %1759 = vmatprep.subr.mxu0 0.0
        %1760 = vmatpush2.msra.mxu0 0.0
        %1761 = vmatprep.subr.mxu0 0.0
        %1762 = vmatpush2.msra.mxu0 0.0
        %1763 = vmatprep.subr.mxu0 0.0
        %1764 = vmatpush2.msra.mxu0 0.0
        %1765 = vmatprep.subr.mxu0 0.0
        %1766 = vmatpush2.msra.mxu0 0.0
        %1767 = vmatprep.subr.mxu0 0.0
        %1768 = vmatpush2.msra.mxu0 0.0
        %1769 = vmatprep.subr.mxu0 0.0
        %1770 = vmatpush2.msra.mxu0 0.0
        %1771 = vmatprep.subr.mxu0 0.0
        %1772 = vmatpush2.msra.mxu0 0.0
        %1773 = vmatprep.subr.mxu0 0.0
        %1774 = vmatpush2.msra.mxu0 0.0
        %1775 = vmatprep.subr.mxu0 0.0
        %1776 = vmatpush2.msra.mxu0 0.0
        %1777 = vmatprep.subr.mxu0 0.0
        %1778 = vmatpush2.msra.mxu0 0.0
        %1779 = vmatprep.mubr.f32.mxu0 0.0
        %1780 = vmatmul.mubr.f32.gmra.mxu0 %v1636
        %v1781 = vpop.f32.mrf.mxu0
        %v1782 = vadd.f32 0.0, %v1781
        %v1783 = vpop.f32.mrf.mxu0
        %1784 = vdwg.mxu0
        %v1785 = vadd.f32 %v1616, %v1711
        %v1786 = vadd.f32 %v1617, %v1713
        %v1787 = vadd.f32 %v1618, %v1782
        %v1788 = vld [vmem:[%s4] sm:$0xf]
        %1790 = vset.pattern.permute.xlu0 0
        %1791 = vperm.xlu0 %1790, %v1788
        %v1792 = vpop.permute.xlu0 %1791
        %v1794 = vadd.f32 %v1785, %v1792
        %v1795 = vadd.f32 %v1786, %v1792
        %v1796 = vadd.f32 %v1787, %v1792
        %v1797 = vsel %vm285, 1, 0
        %v1798 = vlaneseq
        %v1799 = vshrl.u32 %v1798, 7
        %v1800 = vsub.s32 0, %v1799
        %v1801 = vrot.slane %v1797, %v1800
        %v1802 = vlaneseq
        %v1803 = vshrl.u32 %v1802, 7
        %v1804 = vsub.s32 1, %v1803
        %v1805 = vrot.slane %v1797, %v1804
        %v1806 = vlaneseq
        %v1807 = vshrl.u32 %v1806, 7
        %v1808 = vsub.s32 2, %v1807
        %v1809 = vrot.slane %v1797, %v1808
        %vm1810 = vcmp.eq.s32.totalorder %v1801, 1
        %vm1811 = vcmp.eq.s32.totalorder %v1805, 1
        %vm1812 = vcmp.eq.s32.totalorder %v1809, 1
        %v1813 = vsel %vm1810, %v1794, 0.0
        %v1814 = vsel %vm1811, %v1795, 0.0
        %v1815 = vsel %vm1812, %v1796, 0.0
        %v1816 = vsel %vm307, %v1813, 0.0
        %v1817 = vsel %vm307, %v1814, 0.0
        %v1818 = vadd.f32 %v1816, %v1817
        %vm1819 = vcmask 551936
        %v1820 = vsel %vm1819, %v1815, 0.0
        %v1821 = vadd.f32 %v1818, %v1820
        %1822 = vadd.xlane.f32.xlu0 %v1821
        %v1823 = vpop.xlane.xlu0 %1822
        %v1824 = vrcp.pop 256.0
        %v1825 = vmul.f32 %v1823, %v1824
        %v1826 = vsub.f32 %v1794, %v1825
        %v1827 = vsub.f32 %v1795, %v1825
        %v1828 = vsub.f32 %v1796, %v1825
        %v1829 = vmul.f32 %v1826, %v1826
        %v1830 = vmul.f32 %v1827, %v1827
        %v1831 = vmul.f32 %v1828, %v1828
        %v1832 = vsel %vm1810, %v1829, 0.0
        %v1833 = vsel %vm1811, %v1830, 0.0
        %v1834 = vsel %vm1812, %v1831, 0.0
        %v1835 = vsel %vm307, %v1832, 0.0
        %v1836 = vsel %vm307, %v1833, 0.0
        %v1837 = vadd.f32 %v1835, %v1836
        %v1838 = vsel %vm1819, %v1834, 0.0
        %v1839 = vadd.f32 %v1837, %v1838
        %1840 = vadd.xlane.f32.xlu0 %v1839
        %v1841 = vpop.xlane.xlu0 %1840
        %v1842 = vmul.f32 %v1841, %v1824
        %v1843 = vadd.f32 %v1842, 1e-05
        %v1844 = vrsqrt.pop %v1843
        %v1845 = vmul.f32 %v1826, %v1844
        %v1846 = vmul.f32 %v1827, %v1844
        %v1847 = vmul.f32 %v1828, %v1844
        %v1848 = vmax.f32 %v1845, 0.0
        %v1849 = vmax.f32 %v1846, 0.0
        %v1850 = vmax.f32 %v1847, 0.0
        %vm1851 = vcmask 150528
        %1852 = vst.msk [vmem:[#allocation2] sm:$0xf] %vm1851, 0.0
        %vm1853 = vcmask 863928
        %1854 = vst.msk [vmem:[#allocation2 + $0x8] sm:$0xf] %vm1853, 0.0
        %v1858 = vcombine.low %v1848, %v1849
        %1859 = vrot.lane.b32.xlu0 %v1858, 19
        %v1860 = vpop.permute.xlu0 %1859
        %1861 = vrot.lane.b32.xlu0 %v1850, 19
        %v1862 = vpop.permute.xlu0 %1861
        %v1863 = vrot.slane %v1860, 4
        %vm1864 = vcmask 154624
        %v1865 = vsel %vm1864, %v1863, %v1860
        %v1866 = vsel %vm1864, %v1863, %v1862
        %vm1869 = vcmask 1043608
        %vm1870 = vcmask 1047556
        %vm1871 = vmor %vm1870, %vm1869
        %1872 = vst.msk [vmem:[#allocation2] sm:$0xff] %vm1871, %v1865
        %vm1873 = vcmask 707584
        %1874 = vst.msk [vmem:[#allocation2 + $0x8] sm:$0xf] %vm1873, %v1866
        %v1875 = vld [vmem:[#allocation2] sm:$0xff]
        %v1876 = vld [vmem:[#allocation2 + $0x8] sm:$0xf]
        %vm1877 = vcmp.eq.s32.totalorder %v278, 0
        %vm1878 = vcmp.eq.s32.totalorder %v278, 17
        %v1879 = vsel %vm1878, 1, 0
        %v1880 = vlaneseq
        %v1881 = vshrl.u32 %v1880, 7
        %v1882 = vsub.s32 0, %v1881
        %v1883 = vrot.slane %v1879, %v1882
        %v1884 = vlaneseq
        %v1885 = vshrl.u32 %v1884, 7
        %v1886 = vsub.s32 1, %v1885
        %v1887 = vrot.slane %v1879, %v1886
        %v1888 = vlaneseq
        %v1889 = vshrl.u32 %v1888, 7
        %v1890 = vsub.s32 2, %v1889
        %v1891 = vrot.slane %v1879, %v1890
        %vm1892 = vcmp.eq.s32.totalorder %v1883, 1
        %vm1893 = vcmp.eq.s32.totalorder %v1887, 1
        %vm1894 = vcmp.eq.s32.totalorder %v1891, 1
        %v1897 = vcombine.high %v1875, %v1875
        %1898 = vrot.lane.b32.xlu0 %v1875, 111
        %v1899 = vpop.permute.xlu0 %1898
        %1900 = vrot.lane.b32.xlu0 %v1897, 111
        %v1901 = vpop.permute.xlu0 %1900
        %1902 = vrot.lane.b32.xlu0 %v1876, 111
        %v1903 = vpop.permute.xlu0 %1902
        %vm1904 = vcmask 908288
        %v1905 = vsel %vm1904, %v1899, %v1901
        %v1906 = vsel %vm1904, %v1901, %v1903
        %v1910 = vsel %vm1892, %v1905, %v1848
        %v1911 = vsel %vm1893, %v1906, %v1849
        %v1912 = vsel %vm1894, %v1903, %v1850
        %v1913 = vsel %vm1877, 1, 0
        %v1914 = vlaneseq
        %v1915 = vshrl.u32 %v1914, 7
        %v1916 = vsub.s32 0, %v1915
        %v1917 = vrot.slane %v1913, %v1916
        %v1918 = vlaneseq
        %v1919 = vshrl.u32 %v1918, 7
        %v1920 = vsub.s32 1, %v1919
        %v1921 = vrot.slane %v1913, %v1920
        %v1922 = vlaneseq
        %v1923 = vshrl.u32 %v1922, 7
        %v1924 = vsub.s32 2, %v1923
        %v1925 = vrot.slane %v1913, %v1924
        %vm1926 = vcmp.eq.s32.totalorder %v1917, 1
        %vm1927 = vcmp.eq.s32.totalorder %v1921, 1
        %vm1928 = vcmp.eq.s32.totalorder %v1925, 1
        %1929 = vrot.lane.b32.xlu0 %v1875, 107
        %v1930 = vpop.permute.xlu0 %1929
        %1931 = vrot.lane.b32.xlu0 %v1897, 107
        %v1932 = vpop.permute.xlu0 %1931
        %1933 = vrot.lane.b32.xlu0 %v1876, 107
        %v1934 = vpop.permute.xlu0 %1933
        %vm1935 = vcmask 875520
        %v1936 = vsel %vm1935, %v1930, %v1932
        %v1937 = vsel %vm1935, %v1932, %v1934
        %v1941 = vsel %vm1926, %v1936, %v1910
        %v1942 = vsel %vm1927, %v1937, %v1911
        %v1943 = vsel %vm1928, %v1934, %v1912
        %v1947 = vcombine.low %v1941, %v1942
        %1948 = vrot.lane.b32.xlu0 %v1947, 19
        %v1949 = vpop.permute.xlu0 %1948
        %1950 = vrot.lane.b32.xlu0 %v1943, 19
        %v1951 = vpop.permute.xlu0 %1950
        %v1952 = vrot.slane %v1949, 4
        %v1953 = vsel %vm1864, %v1952, %v1949
        %v1954 = vsel %vm1864, %v1952, %v1951
        %1957 = vst.msk [vmem:[#allocation2] sm:$0xff] %vm1871, %v1953
        %1958 = vst.msk [vmem:[#allocation2 + $0x8] sm:$0xf] %vm1873, %v1954
        %v1959 = vld [vmem:[#allocation2] sm:$0xf]
        %1961 = vrot.lane.b32.xlu0 %v1959, 92
        %v1962 = vpop.permute.xlu0 %1961
        %vm1964 = vcmask 298136
        %1965 = vst.msk [vmem:[#allocation2] sm:$0xf] %vm1964, %v1962
        %v1966 = vld [vmem:[#allocation2 + $0x8] sm:$0xf]
        %1968 = vrot.lane.b32.xlu0 %v1966, 36
        %v1969 = vpop.permute.xlu0 %1968
        %vm1971 = vcmask 708136
        %1972 = vst.msk [vmem:[#allocation2 + $0x8] sm:$0xf] %vm1971, %v1969
        %v1973 = vld [vmem:[%s5] sm:$0xf]
        %v1974 = vld [vmem:[#allocation2] sm:$0xff]
        %v1975 = vld [vmem:[#allocation2 + $0x8] sm:$0xf]
        %s1976 = scalar_lea.vmem %s5, 4
        %v1977 = vld [vmem:[%s1976] sm:$0xf]
        %v1980 = vcombine.high %v1974, %v1974
        %1981 = vrot.lane.b32.xlu0 %v1974, 127
        %v1982 = vpop.permute.xlu0 %1981
        %1983 = vrot.lane.b32.xlu0 %v1980, 127
        %v1984 = vpop.permute.xlu0 %1983
        %1985 = vrot.lane.b32.xlu0 %v1975, 127
        %v1986 = vpop.permute.xlu0 %1985
        %v1987 = vsel %vm300, %v1982, %v1984
        %v1988 = vsel %vm300, %v1984, %v1986
        %v1990 = vsel %vm303, %v1977, 0
        %v1992 = vsel %vm307, %v1987, 0
        %v1994 = vsel %vm307, %v1988, 0
        %v1996 = vsel %vm307, %v1986, 0
        %1998 = vmatprep.subr.mxu0 0.0
        %1999 = vmatpush1.msra.mxu0 0.0
        %2000 = vmatprep.subr.mxu0 0.0
        %2001 = vmatpush1.msra.mxu0 0.0
        %2002 = vmatprep.subr.mxu0 0.0
        %2003 = vmatpush1.msra.mxu0 0.0
        %2004 = vmatprep.subr.mxu0 0.0
        %2005 = vmatpush1.msra.mxu0 0.0
        %2006 = vmatprep.subr.mxu0 0.0
        %2007 = vmatpush1.msra.mxu0 0.0
        %2008 = vmatprep.subr.mxu0 0.0
        %2009 = vmatpush1.msra.mxu0 0.0
        %2010 = vmatprep.subr.mxu0 0.0
        %2011 = vmatpush1.msra.mxu0 0.0
        %2012 = vmatprep.subr.mxu0 0.0
        %2013 = vmatpush1.msra.mxu0 0.0
        %2014 = vmatprep.subr.mxu0 0.0
        %2015 = vmatpush1.msra.mxu0 0.0
        %2016 = vmatprep.subr.mxu0 0.0
        %2017 = vmatpush1.msra.mxu0 0.0
        %2018 = vmatprep.subr.mxu0 0.0
        %2019 = vmatpush1.msra.mxu0 0.0
        %2020 = vmatprep.subr.mxu0 0.0
        %2021 = vmatpush1.msra.mxu0 0.0
        %2022 = vmatprep.subr.mxu0 0.0
        %2023 = vmatpush1.msra.mxu0 0.0
        %2024 = vmatprep.subr.mxu0 0.0
        %2025 = vmatpush1.msra.mxu0 0.0
        %2026 = vmatprep.subr.mxu0 0.0
        %2027 = vmatpush1.msra.mxu0 0.0
        %2028 = vmatprep.subr.mxu0 %v1994
        %2029 = vmatpush1.msra.mxu0 %v1992
        %2030 = vmatprep.subr.mxu0 0.0
        %2031 = vmatpush2.msra.mxu0 0.0
        %2032 = vmatprep.subr.mxu0 0.0
        %2033 = vmatpush2.msra.mxu0 0.0
        %2034 = vmatprep.subr.mxu0 0.0
        %2035 = vmatpush2.msra.mxu0 0.0
        %2036 = vmatprep.subr.mxu0 0.0
        %2037 = vmatpush2.msra.mxu0 0.0
        %2038 = vmatprep.subr.mxu0 0.0
        %2039 = vmatpush2.msra.mxu0 0.0
        %2040 = vmatprep.subr.mxu0 0.0
        %2041 = vmatpush2.msra.mxu0 0.0
        %2042 = vmatprep.subr.mxu0 0.0
        %2043 = vmatpush2.msra.mxu0 0.0
        %2044 = vmatprep.subr.mxu0 0.0
        %2045 = vmatpush2.msra.mxu0 0.0
        %2046 = vmatprep.subr.mxu0 0.0
        %2047 = vmatpush2.msra.mxu0 0.0
        %2048 = vmatprep.subr.mxu0 0.0
        %2049 = vmatpush2.msra.mxu0 0.0
        %2050 = vmatprep.subr.mxu0 0.0
        %2051 = vmatpush2.msra.mxu0 0.0
        %2052 = vmatprep.subr.mxu0 0.0
        %2053 = vmatpush2.msra.mxu0 0.0
        %2054 = vmatprep.subr.mxu0 0.0
        %2055 = vmatpush2.msra.mxu0 0.0
        %2056 = vmatprep.subr.mxu0 0.0
        %2057 = vmatpush2.msra.mxu0 0.0
        %2058 = vmatprep.subr.mxu0 0.0
        %2059 = vmatpush2.msra.mxu0 0.0
        %2060 = vmatprep.subr.mxu0 0.0
        %2061 = vmatpush2.msra.mxu0 0.0
        %2062 = vmatprep.mubr.f32.mxu0 0.0
        %2063 = vmatmul.mubr.f32.gmra.mxu0 %v1990
        %v2064 = vpop.f32.mrf.mxu0
        %v2065 = vadd.f32 0.0, %v2064
        %v2066 = vpop.f32.mrf.mxu0
        %v2067 = vadd.f32 0.0, %v2066
        %2068 = vdwg.mxu0
        %2069 = vmatprep.subr.mxu0 0.0
        %2070 = vmatpush1.msra.mxu0 0.0
        %2071 = vmatprep.subr.mxu0 0.0
        %2072 = vmatpush1.msra.mxu0 0.0
        %2073 = vmatprep.subr.mxu0 0.0
        %2074 = vmatpush1.msra.mxu0 0.0
        %2075 = vmatprep.subr.mxu0 0.0
        %2076 = vmatpush1.msra.mxu0 0.0
        %2077 = vmatprep.subr.mxu0 0.0
        %2078 = vmatpush1.msra.mxu0 0.0
        %2079 = vmatprep.subr.mxu0 0.0
        %2080 = vmatpush1.msra.mxu0 0.0
        %2081 = vmatprep.subr.mxu0 0.0
        %2082 = vmatpush1.msra.mxu0 0.0
        %2083 = vmatprep.subr.mxu0 0.0
        %2084 = vmatpush1.msra.mxu0 0.0
        %2085 = vmatprep.subr.mxu0 0.0
        %2086 = vmatpush1.msra.mxu0 0.0
        %2087 = vmatprep.subr.mxu0 0.0
        %2088 = vmatpush1.msra.mxu0 0.0
        %2089 = vmatprep.subr.mxu0 0.0
        %2090 = vmatpush1.msra.mxu0 0.0
        %2091 = vmatprep.subr.mxu0 0.0
        %2092 = vmatpush1.msra.mxu0 0.0
        %2093 = vmatprep.subr.mxu0 0.0
        %2094 = vmatpush1.msra.mxu0 0.0
        %2095 = vmatprep.subr.mxu0 0.0
        %2096 = vmatpush1.msra.mxu0 0.0
        %2097 = vmatprep.subr.mxu0 0.0
        %2098 = vmatpush1.msra.mxu0 0.0
        %2099 = vmatprep.subr.mxu0 0.0
        %2100 = vmatpush1.msra.mxu0 %v1996
        %2101 = vmatprep.subr.mxu0 0.0
        %2102 = vmatpush2.msra.mxu0 0.0
        %2103 = vmatprep.subr.mxu0 0.0
        %2104 = vmatpush2.msra.mxu0 0.0
        %2105 = vmatprep.subr.mxu0 0.0
        %2106 = vmatpush2.msra.mxu0 0.0
        %2107 = vmatprep.subr.mxu0 0.0
        %2108 = vmatpush2.msra.mxu0 0.0
        %2109 = vmatprep.subr.mxu0 0.0
        %2110 = vmatpush2.msra.mxu0 0.0
        %2111 = vmatprep.subr.mxu0 0.0
        %2112 = vmatpush2.msra.mxu0 0.0
        %2113 = vmatprep.subr.mxu0 0.0
        %2114 = vmatpush2.msra.mxu0 0.0
        %2115 = vmatprep.subr.mxu0 0.0
        %2116 = vmatpush2.msra.mxu0 0.0
        %2117 = vmatprep.subr.mxu0 0.0
        %2118 = vmatpush2.msra.mxu0 0.0
        %2119 = vmatprep.subr.mxu0 0.0
        %2120 = vmatpush2.msra.mxu0 0.0
        %2121 = vmatprep.subr.mxu0 0.0
        %2122 = vmatpush2.msra.mxu0 0.0
        %2123 = vmatprep.subr.mxu0 0.0
        %2124 = vmatpush2.msra.mxu0 0.0
        %2125 = vmatprep.subr.mxu0 0.0
        %2126 = vmatpush2.msra.mxu0 0.0
        %2127 = vmatprep.subr.mxu0 0.0
        %2128 = vmatpush2.msra.mxu0 0.0
        %2129 = vmatprep.subr.mxu0 0.0
        %2130 = vmatpush2.msra.mxu0 0.0
        %2131 = vmatprep.subr.mxu0 0.0
        %2132 = vmatpush2.msra.mxu0 0.0
        %2133 = vmatprep.mubr.f32.mxu0 0.0
        %2134 = vmatmul.mubr.f32.gmra.mxu0 %v1990
        %v2135 = vpop.f32.mrf.mxu0
        %v2136 = vadd.f32 0.0, %v2135
        %v2137 = vpop.f32.mrf.mxu0
        %2138 = vdwg.mxu0
        %v2140 = vsel %vm303, %v1973, 0
        %v2142 = vsel %vm307, %v1974, 0
        %v2144 = vsel %vm307, %v1980, 0
        %v2146 = vsel %vm307, %v1975, 0
        %2148 = vmatprep.subr.mxu0 0.0
        %2149 = vmatpush1.msra.mxu0 0.0
        %2150 = vmatprep.subr.mxu0 0.0
        %2151 = vmatpush1.msra.mxu0 0.0
        %2152 = vmatprep.subr.mxu0 0.0
        %2153 = vmatpush1.msra.mxu0 0.0
        %2154 = vmatprep.subr.mxu0 0.0
        %2155 = vmatpush1.msra.mxu0 0.0
        %2156 = vmatprep.subr.mxu0 0.0
        %2157 = vmatpush1.msra.mxu0 0.0
        %2158 = vmatprep.subr.mxu0 0.0
        %2159 = vmatpush1.msra.mxu0 0.0
        %2160 = vmatprep.subr.mxu0 0.0
        %2161 = vmatpush1.msra.mxu0 0.0
        %2162 = vmatprep.subr.mxu0 0.0
        %2163 = vmatpush1.msra.mxu0 0.0
        %2164 = vmatprep.subr.mxu0 0.0
        %2165 = vmatpush1.msra.mxu0 0.0
        %2166 = vmatprep.subr.mxu0 0.0
        %2167 = vmatpush1.msra.mxu0 0.0
        %2168 = vmatprep.subr.mxu0 0.0
        %2169 = vmatpush1.msra.mxu0 0.0
        %2170 = vmatprep.subr.mxu0 0.0
        %2171 = vmatpush1.msra.mxu0 0.0
        %2172 = vmatprep.subr.mxu0 0.0
        %2173 = vmatpush1.msra.mxu0 0.0
        %2174 = vmatprep.subr.mxu0 0.0
        %2175 = vmatpush1.msra.mxu0 0.0
        %2176 = vmatprep.subr.mxu0 0.0
        %2177 = vmatpush1.msra.mxu0 0.0
        %2178 = vmatprep.subr.mxu0 %v2144
        %2179 = vmatpush1.msra.mxu0 %v2142
        %2180 = vmatprep.subr.mxu0 0.0
        %2181 = vmatpush2.msra.mxu0 0.0
        %2182 = vmatprep.subr.mxu0 0.0
        %2183 = vmatpush2.msra.mxu0 0.0
        %2184 = vmatprep.subr.mxu0 0.0
        %2185 = vmatpush2.msra.mxu0 0.0
        %2186 = vmatprep.subr.mxu0 0.0
        %2187 = vmatpush2.msra.mxu0 0.0
        %2188 = vmatprep.subr.mxu0 0.0
        %2189 = vmatpush2.msra.mxu0 0.0
        %2190 = vmatprep.subr.mxu0 0.0
        %2191 = vmatpush2.msra.mxu0 0.0
        %2192 = vmatprep.subr.mxu0 0.0
        %2193 = vmatpush2.msra.mxu0 0.0
        %2194 = vmatprep.subr.mxu0 0.0
        %2195 = vmatpush2.msra.mxu0 0.0
        %2196 = vmatprep.subr.mxu0 0.0
        %2197 = vmatpush2.msra.mxu0 0.0
        %2198 = vmatprep.subr.mxu0 0.0
        %2199 = vmatpush2.msra.mxu0 0.0
        %2200 = vmatprep.subr.mxu0 0.0
        %2201 = vmatpush2.msra.mxu0 0.0
        %2202 = vmatprep.subr.mxu0 0.0
        %2203 = vmatpush2.msra.mxu0 0.0
        %2204 = vmatprep.subr.mxu0 0.0
        %2205 = vmatpush2.msra.mxu0 0.0
        %2206 = vmatprep.subr.mxu0 0.0
        %2207 = vmatpush2.msra.mxu0 0.0
        %2208 = vmatprep.subr.mxu0 0.0
        %2209 = vmatpush2.msra.mxu0 0.0
        %2210 = vmatprep.subr.mxu0 0.0
        %2211 = vmatpush2.msra.mxu0 0.0
        %2212 = vmatprep.mubr.f32.mxu0 0.0
        %2213 = vmatmul.mubr.f32.gmra.mxu0 %v2140
        %v2214 = vpop.f32.mrf.mxu0
        %v2215 = vadd.f32 %v2065, %v2214
        %v2216 = vpop.f32.mrf.mxu0
        %v2217 = vadd.f32 %v2067, %v2216
        %2218 = vdwg.mxu0
        %2219 = vmatprep.subr.mxu0 0.0
        %2220 = vmatpush1.msra.mxu0 0.0
        %2221 = vmatprep.subr.mxu0 0.0
        %2222 = vmatpush1.msra.mxu0 0.0
        %2223 = vmatprep.subr.mxu0 0.0
        %2224 = vmatpush1.msra.mxu0 0.0
        %2225 = vmatprep.subr.mxu0 0.0
        %2226 = vmatpush1.msra.mxu0 0.0
        %2227 = vmatprep.subr.mxu0 0.0
        %2228 = vmatpush1.msra.mxu0 0.0
        %2229 = vmatprep.subr.mxu0 0.0
        %2230 = vmatpush1.msra.mxu0 0.0
        %2231 = vmatprep.subr.mxu0 0.0
        %2232 = vmatpush1.msra.mxu0 0.0
        %2233 = vmatprep.subr.mxu0 0.0
        %2234 = vmatpush1.msra.mxu0 0.0
        %2235 = vmatprep.subr.mxu0 0.0
        %2236 = vmatpush1.msra.mxu0 0.0
        %2237 = vmatprep.subr.mxu0 0.0
        %2238 = vmatpush1.msra.mxu0 0.0
        %2239 = vmatprep.subr.mxu0 0.0
        %2240 = vmatpush1.msra.mxu0 0.0
        %2241 = vmatprep.subr.mxu0 0.0
        %2242 = vmatpush1.msra.mxu0 0.0
        %2243 = vmatprep.subr.mxu0 0.0
        %2244 = vmatpush1.msra.mxu0 0.0
        %2245 = vmatprep.subr.mxu0 0.0
        %2246 = vmatpush1.msra.mxu0 0.0
        %2247 = vmatprep.subr.mxu0 0.0
        %2248 = vmatpush1.msra.mxu0 0.0
        %2249 = vmatprep.subr.mxu0 0.0
        %2250 = vmatpush1.msra.mxu0 %v2146
        %2251 = vmatprep.subr.mxu0 0.0
        %2252 = vmatpush2.msra.mxu0 0.0
        %2253 = vmatprep.subr.mxu0 0.0
        %2254 = vmatpush2.msra.mxu0 0.0
        %2255 = vmatprep.subr.mxu0 0.0
        %2256 = vmatpush2.msra.mxu0 0.0
        %2257 = vmatprep.subr.mxu0 0.0
        %2258 = vmatpush2.msra.mxu0 0.0
        %2259 = vmatprep.subr.mxu0 0.0
        %2260 = vmatpush2.msra.mxu0 0.0
        %2261 = vmatprep.subr.mxu0 0.0
        %2262 = vmatpush2.msra.mxu0 0.0
        %2263 = vmatprep.subr.mxu0 0.0
        %2264 = vmatpush2.msra.mxu0 0.0
        %2265 = vmatprep.subr.mxu0 0.0
        %2266 = vmatpush2.msra.mxu0 0.0
        %2267 = vmatprep.subr.mxu0 0.0
        %2268 = vmatpush2.msra.mxu0 0.0
        %2269 = vmatprep.subr.mxu0 0.0
        %2270 = vmatpush2.msra.mxu0 0.0
        %2271 = vmatprep.subr.mxu0 0.0
        %2272 = vmatpush2.msra.mxu0 0.0
        %2273 = vmatprep.subr.mxu0 0.0
        %2274 = vmatpush2.msra.mxu0 0.0
        %2275 = vmatprep.subr.mxu0 0.0
        %2276 = vmatpush2.msra.mxu0 0.0
        %2277 = vmatprep.subr.mxu0 0.0
        %2278 = vmatpush2.msra.mxu0 0.0
        %2279 = vmatprep.subr.mxu0 0.0
        %2280 = vmatpush2.msra.mxu0 0.0
        %2281 = vmatprep.subr.mxu0 0.0
        %2282 = vmatpush2.msra.mxu0 0.0
        %2283 = vmatprep.mubr.f32.mxu0 0.0
        %2284 = vmatmul.mubr.f32.gmra.mxu0 %v2140
        %v2285 = vpop.f32.mrf.mxu0
        %v2286 = vadd.f32 %v2136, %v2285
        %v2287 = vpop.f32.mrf.mxu0
        %2288 = vdwg.mxu0
        %s2289 = scalar_lea.vmem %s5, 8
        %v2290 = vld [vmem:[%s2289] sm:$0xf]
        %v2291 = vld [vmem:[#allocation2] sm:$0xff]
        %v2292 = vld [vmem:[#allocation2 + $0x8] sm:$0xf]
        %v2295 = vcombine.high %v2291, %v2291
        %2296 = vrot.lane.b32.xlu0 %v2291, 126
        %v2297 = vpop.permute.xlu0 %2296
        %2298 = vrot.lane.b32.xlu0 %v2295, 126
        %v2299 = vpop.permute.xlu0 %2298
        %2300 = vrot.lane.b32.xlu0 %v2292, 126
        %v2301 = vpop.permute.xlu0 %2300
        %v2302 = vsel %vm618, %v2297, %v2299
        %v2303 = vsel %vm618, %v2299, %v2301
        %v2305 = vsel %vm303, %v2290, 0
        %v2307 = vsel %vm307, %v2302, 0
        %v2309 = vsel %vm307, %v2303, 0
        %v2311 = vsel %vm307, %v2301, 0
        %2313 = vmatprep.subr.mxu0 0.0
        %2314 = vmatpush1.msra.mxu0 0.0
        %2315 = vmatprep.subr.mxu0 0.0
        %2316 = vmatpush1.msra.mxu0 0.0
        %2317 = vmatprep.subr.mxu0 0.0
        %2318 = vmatpush1.msra.mxu0 0.0
        %2319 = vmatprep.subr.mxu0 0.0
        %2320 = vmatpush1.msra.mxu0 0.0
        %2321 = vmatprep.subr.mxu0 0.0
        %2322 = vmatpush1.msra.mxu0 0.0
        %2323 = vmatprep.subr.mxu0 0.0
        %2324 = vmatpush1.msra.mxu0 0.0
        %2325 = vmatprep.subr.mxu0 0.0
        %2326 = vmatpush1.msra.mxu0 0.0
        %2327 = vmatprep.subr.mxu0 0.0
        %2328 = vmatpush1.msra.mxu0 0.0
        %2329 = vmatprep.subr.mxu0 0.0
        %2330 = vmatpush1.msra.mxu0 0.0
        %2331 = vmatprep.subr.mxu0 0.0
        %2332 = vmatpush1.msra.mxu0 0.0
        %2333 = vmatprep.subr.mxu0 0.0
        %2334 = vmatpush1.msra.mxu0 0.0
        %2335 = vmatprep.subr.mxu0 0.0
        %2336 = vmatpush1.msra.mxu0 0.0
        %2337 = vmatprep.subr.mxu0 0.0
        %2338 = vmatpush1.msra.mxu0 0.0
        %2339 = vmatprep.subr.mxu0 0.0
        %2340 = vmatpush1.msra.mxu0 0.0
        %2341 = vmatprep.subr.mxu0 0.0
        %2342 = vmatpush1.msra.mxu0 0.0
        %2343 = vmatprep.subr.mxu0 %v2309
        %2344 = vmatpush1.msra.mxu0 %v2307
        %2345 = vmatprep.subr.mxu0 0.0
        %2346 = vmatpush2.msra.mxu0 0.0
        %2347 = vmatprep.subr.mxu0 0.0
        %2348 = vmatpush2.msra.mxu0 0.0
        %2349 = vmatprep.subr.mxu0 0.0
        %2350 = vmatpush2.msra.mxu0 0.0
        %2351 = vmatprep.subr.mxu0 0.0
        %2352 = vmatpush2.msra.mxu0 0.0
        %2353 = vmatprep.subr.mxu0 0.0
        %2354 = vmatpush2.msra.mxu0 0.0
        %2355 = vmatprep.subr.mxu0 0.0
        %2356 = vmatpush2.msra.mxu0 0.0
        %2357 = vmatprep.subr.mxu0 0.0
        %2358 = vmatpush2.msra.mxu0 0.0
        %2359 = vmatprep.subr.mxu0 0.0
        %2360 = vmatpush2.msra.mxu0 0.0
        %2361 = vmatprep.subr.mxu0 0.0
        %2362 = vmatpush2.msra.mxu0 0.0
        %2363 = vmatprep.subr.mxu0 0.0
        %2364 = vmatpush2.msra.mxu0 0.0
        %2365 = vmatprep.subr.mxu0 0.0
        %2366 = vmatpush2.msra.mxu0 0.0
        %2367 = vmatprep.subr.mxu0 0.0
        %2368 = vmatpush2.msra.mxu0 0.0
        %2369 = vmatprep.subr.mxu0 0.0
        %2370 = vmatpush2.msra.mxu0 0.0
        %2371 = vmatprep.subr.mxu0 0.0
        %2372 = vmatpush2.msra.mxu0 0.0
        %2373 = vmatprep.subr.mxu0 0.0
        %2374 = vmatpush2.msra.mxu0 0.0
        %2375 = vmatprep.subr.mxu0 0.0
        %2376 = vmatpush2.msra.mxu0 0.0
        %2377 = vmatprep.mubr.f32.mxu0 0.0
        %2378 = vmatmul.mubr.f32.gmra.mxu0 %v2305
        %v2379 = vpop.f32.mrf.mxu0
        %v2380 = vadd.f32 0.0, %v2379
        %v2381 = vpop.f32.mrf.mxu0
        %v2382 = vadd.f32 0.0, %v2381
        %2383 = vdwg.mxu0
        %2384 = vmatprep.subr.mxu0 0.0
        %2385 = vmatpush1.msra.mxu0 0.0
        %2386 = vmatprep.subr.mxu0 0.0
        %2387 = vmatpush1.msra.mxu0 0.0
        %2388 = vmatprep.subr.mxu0 0.0
        %2389 = vmatpush1.msra.mxu0 0.0
        %2390 = vmatprep.subr.mxu0 0.0
        %2391 = vmatpush1.msra.mxu0 0.0
        %2392 = vmatprep.subr.mxu0 0.0
        %2393 = vmatpush1.msra.mxu0 0.0
        %2394 = vmatprep.subr.mxu0 0.0
        %2395 = vmatpush1.msra.mxu0 0.0
        %2396 = vmatprep.subr.mxu0 0.0
        %2397 = vmatpush1.msra.mxu0 0.0
        %2398 = vmatprep.subr.mxu0 0.0
        %2399 = vmatpush1.msra.mxu0 0.0
        %2400 = vmatprep.subr.mxu0 0.0
        %2401 = vmatpush1.msra.mxu0 0.0
        %2402 = vmatprep.subr.mxu0 0.0
        %2403 = vmatpush1.msra.mxu0 0.0
        %2404 = vmatprep.subr.mxu0 0.0
        %2405 = vmatpush1.msra.mxu0 0.0
        %2406 = vmatprep.subr.mxu0 0.0
        %2407 = vmatpush1.msra.mxu0 0.0
        %2408 = vmatprep.subr.mxu0 0.0
        %2409 = vmatpush1.msra.mxu0 0.0
        %2410 = vmatprep.subr.mxu0 0.0
        %2411 = vmatpush1.msra.mxu0 0.0
        %2412 = vmatprep.subr.mxu0 0.0
        %2413 = vmatpush1.msra.mxu0 0.0
        %2414 = vmatprep.subr.mxu0 0.0
        %2415 = vmatpush1.msra.mxu0 %v2311
        %2416 = vmatprep.subr.mxu0 0.0
        %2417 = vmatpush2.msra.mxu0 0.0
        %2418 = vmatprep.subr.mxu0 0.0
        %2419 = vmatpush2.msra.mxu0 0.0
        %2420 = vmatprep.subr.mxu0 0.0
        %2421 = vmatpush2.msra.mxu0 0.0
        %2422 = vmatprep.subr.mxu0 0.0
        %2423 = vmatpush2.msra.mxu0 0.0
        %2424 = vmatprep.subr.mxu0 0.0
        %2425 = vmatpush2.msra.mxu0 0.0
        %2426 = vmatprep.subr.mxu0 0.0
        %2427 = vmatpush2.msra.mxu0 0.0
        %2428 = vmatprep.subr.mxu0 0.0
        %2429 = vmatpush2.msra.mxu0 0.0
        %2430 = vmatprep.subr.mxu0 0.0
        %2431 = vmatpush2.msra.mxu0 0.0
        %2432 = vmatprep.subr.mxu0 0.0
        %2433 = vmatpush2.msra.mxu0 0.0
        %2434 = vmatprep.subr.mxu0 0.0
        %2435 = vmatpush2.msra.mxu0 0.0
        %2436 = vmatprep.subr.mxu0 0.0
        %2437 = vmatpush2.msra.mxu0 0.0
        %2438 = vmatprep.subr.mxu0 0.0
        %2439 = vmatpush2.msra.mxu0 0.0
        %2440 = vmatprep.subr.mxu0 0.0
        %2441 = vmatpush2.msra.mxu0 0.0
        %2442 = vmatprep.subr.mxu0 0.0
        %2443 = vmatpush2.msra.mxu0 0.0
        %2444 = vmatprep.subr.mxu0 0.0
        %2445 = vmatpush2.msra.mxu0 0.0
        %2446 = vmatprep.subr.mxu0 0.0
        %2447 = vmatpush2.msra.mxu0 0.0
        %2448 = vmatprep.mubr.f32.mxu0 0.0
        %2449 = vmatmul.mubr.f32.gmra.mxu0 %v2305
        %v2450 = vpop.f32.mrf.mxu0
        %v2451 = vadd.f32 0.0, %v2450
        %v2452 = vpop.f32.mrf.mxu0
        %2453 = vdwg.mxu0
        %v2454 = vadd.f32 %v2215, %v2380
        %v2455 = vadd.f32 %v2217, %v2382
        %v2456 = vadd.f32 %v2286, %v2451
        %s2457 = scalar_lea.vmem %s5, 12
        %v2458 = vld [vmem:[%s2457] sm:$0xf]
        %v2459 = vld [vmem:[#allocation2] sm:$0xff]
        %v2460 = vld [vmem:[#allocation2 + $0x8] sm:$0xf]
        %v2463 = vcombine.high %v2459, %v2459
        %2464 = vrot.lane.b32.xlu0 %v2459, 110
        %v2465 = vpop.permute.xlu0 %2464
        %2466 = vrot.lane.b32.xlu0 %v2463, 110
        %v2467 = vpop.permute.xlu0 %2466
        %2468 = vrot.lane.b32.xlu0 %v2460, 110
        %v2469 = vpop.permute.xlu0 %2468
        %v2470 = vsel %vm787, %v2465, %v2467
        %v2471 = vsel %vm787, %v2467, %v2469
        %v2473 = vsel %vm303, %v2458, 0
        %v2475 = vsel %vm307, %v2470, 0
        %v2477 = vsel %vm307, %v2471, 0
        %v2479 = vsel %vm307, %v2469, 0
        %2481 = vmatprep.subr.mxu0 0.0
        %2482 = vmatpush1.msra.mxu0 0.0
        %2483 = vmatprep.subr.mxu0 0.0
        %2484 = vmatpush1.msra.mxu0 0.0
        %2485 = vmatprep.subr.mxu0 0.0
        %2486 = vmatpush1.msra.mxu0 0.0
        %2487 = vmatprep.subr.mxu0 0.0
        %2488 = vmatpush1.msra.mxu0 0.0
        %2489 = vmatprep.subr.mxu0 0.0
        %2490 = vmatpush1.msra.mxu0 0.0
        %2491 = vmatprep.subr.mxu0 0.0
        %2492 = vmatpush1.msra.mxu0 0.0
        %2493 = vmatprep.subr.mxu0 0.0
        %2494 = vmatpush1.msra.mxu0 0.0
        %2495 = vmatprep.subr.mxu0 0.0
        %2496 = vmatpush1.msra.mxu0 0.0
        %2497 = vmatprep.subr.mxu0 0.0
        %2498 = vmatpush1.msra.mxu0 0.0
        %2499 = vmatprep.subr.mxu0 0.0
        %2500 = vmatpush1.msra.mxu0 0.0
        %2501 = vmatprep.subr.mxu0 0.0
        %2502 = vmatpush1.msra.mxu0 0.0
        %2503 = vmatprep.subr.mxu0 0.0
        %2504 = vmatpush1.msra.mxu0 0.0
        %2505 = vmatprep.subr.mxu0 0.0
        %2506 = vmatpush1.msra.mxu0 0.0
        %2507 = vmatprep.subr.mxu0 0.0
        %2508 = vmatpush1.msra.mxu0 0.0
        %2509 = vmatprep.subr.mxu0 0.0
        %2510 = vmatpush1.msra.mxu0 0.0
        %2511 = vmatprep.subr.mxu0 %v2477
        %2512 = vmatpush1.msra.mxu0 %v2475
        %2513 = vmatprep.subr.mxu0 0.0
        %2514 = vmatpush2.msra.mxu0 0.0
        %2515 = vmatprep.subr.mxu0 0.0
        %2516 = vmatpush2.msra.mxu0 0.0
        %2517 = vmatprep.subr.mxu0 0.0
        %2518 = vmatpush2.msra.mxu0 0.0
        %2519 = vmatprep.subr.mxu0 0.0
        %2520 = vmatpush2.msra.mxu0 0.0
        %2521 = vmatprep.subr.mxu0 0.0
        %2522 = vmatpush2.msra.mxu0 0.0
        %2523 = vmatprep.subr.mxu0 0.0
        %2524 = vmatpush2.msra.mxu0 0.0
        %2525 = vmatprep.subr.mxu0 0.0
        %2526 = vmatpush2.msra.mxu0 0.0
        %2527 = vmatprep.subr.mxu0 0.0
        %2528 = vmatpush2.msra.mxu0 0.0
        %2529 = vmatprep.subr.mxu0 0.0
        %2530 = vmatpush2.msra.mxu0 0.0
        %2531 = vmatprep.subr.mxu0 0.0
        %2532 = vmatpush2.msra.mxu0 0.0
        %2533 = vmatprep.subr.mxu0 0.0
        %2534 = vmatpush2.msra.mxu0 0.0
        %2535 = vmatprep.subr.mxu0 0.0
        %2536 = vmatpush2.msra.mxu0 0.0
        %2537 = vmatprep.subr.mxu0 0.0
        %2538 = vmatpush2.msra.mxu0 0.0
        %2539 = vmatprep.subr.mxu0 0.0
        %2540 = vmatpush2.msra.mxu0 0.0
        %2541 = vmatprep.subr.mxu0 0.0
        %2542 = vmatpush2.msra.mxu0 0.0
        %2543 = vmatprep.subr.mxu0 0.0
        %2544 = vmatpush2.msra.mxu0 0.0
        %2545 = vmatprep.mubr.f32.mxu0 0.0
        %2546 = vmatmul.mubr.f32.gmra.mxu0 %v2473
        %v2547 = vpop.f32.mrf.mxu0
        %v2548 = vadd.f32 0.0, %v2547
        %v2549 = vpop.f32.mrf.mxu0
        %v2550 = vadd.f32 0.0, %v2549
        %2551 = vdwg.mxu0
        %2552 = vmatprep.subr.mxu0 0.0
        %2553 = vmatpush1.msra.mxu0 0.0
        %2554 = vmatprep.subr.mxu0 0.0
        %2555 = vmatpush1.msra.mxu0 0.0
        %2556 = vmatprep.subr.mxu0 0.0
        %2557 = vmatpush1.msra.mxu0 0.0
        %2558 = vmatprep.subr.mxu0 0.0
        %2559 = vmatpush1.msra.mxu0 0.0
        %2560 = vmatprep.subr.mxu0 0.0
        %2561 = vmatpush1.msra.mxu0 0.0
        %2562 = vmatprep.subr.mxu0 0.0
        %2563 = vmatpush1.msra.mxu0 0.0
        %2564 = vmatprep.subr.mxu0 0.0
        %2565 = vmatpush1.msra.mxu0 0.0
        %2566 = vmatprep.subr.mxu0 0.0
        %2567 = vmatpush1.msra.mxu0 0.0
        %2568 = vmatprep.subr.mxu0 0.0
        %2569 = vmatpush1.msra.mxu0 0.0
        %2570 = vmatprep.subr.mxu0 0.0
        %2571 = vmatpush1.msra.mxu0 0.0
        %2572 = vmatprep.subr.mxu0 0.0
        %2573 = vmatpush1.msra.mxu0 0.0
        %2574 = vmatprep.subr.mxu0 0.0
        %2575 = vmatpush1.msra.mxu0 0.0
        %2576 = vmatprep.subr.mxu0 0.0
        %2577 = vmatpush1.msra.mxu0 0.0
        %2578 = vmatprep.subr.mxu0 0.0
        %2579 = vmatpush1.msra.mxu0 0.0
        %2580 = vmatprep.subr.mxu0 0.0
        %2581 = vmatpush1.msra.mxu0 0.0
        %2582 = vmatprep.subr.mxu0 0.0
        %2583 = vmatpush1.msra.mxu0 %v2479
        %2584 = vmatprep.subr.mxu0 0.0
        %2585 = vmatpush2.msra.mxu0 0.0
        %2586 = vmatprep.subr.mxu0 0.0
        %2587 = vmatpush2.msra.mxu0 0.0
        %2588 = vmatprep.subr.mxu0 0.0
        %2589 = vmatpush2.msra.mxu0 0.0
        %2590 = vmatprep.subr.mxu0 0.0
        %2591 = vmatpush2.msra.mxu0 0.0
        %2592 = vmatprep.subr.mxu0 0.0
        %2593 = vmatpush2.msra.mxu0 0.0
        %2594 = vmatprep.subr.mxu0 0.0
        %2595 = vmatpush2.msra.mxu0 0.0
        %2596 = vmatprep.subr.mxu0 0.0
        %2597 = vmatpush2.msra.mxu0 0.0
        %2598 = vmatprep.subr.mxu0 0.0
        %2599 = vmatpush2.msra.mxu0 0.0
        %2600 = vmatprep.subr.mxu0 0.0
        %2601 = vmatpush2.msra.mxu0 0.0
        %2602 = vmatprep.subr.mxu0 0.0
        %2603 = vmatpush2.msra.mxu0 0.0
        %2604 = vmatprep.subr.mxu0 0.0
        %2605 = vmatpush2.msra.mxu0 0.0
        %2606 = vmatprep.subr.mxu0 0.0
        %2607 = vmatpush2.msra.mxu0 0.0
        %2608 = vmatprep.subr.mxu0 0.0
        %2609 = vmatpush2.msra.mxu0 0.0
        %2610 = vmatprep.subr.mxu0 0.0
        %2611 = vmatpush2.msra.mxu0 0.0
        %2612 = vmatprep.subr.mxu0 0.0
        %2613 = vmatpush2.msra.mxu0 0.0
        %2614 = vmatprep.subr.mxu0 0.0
        %2615 = vmatpush2.msra.mxu0 0.0
        %2616 = vmatprep.mubr.f32.mxu0 0.0
        %2617 = vmatmul.mubr.f32.gmra.mxu0 %v2473
        %v2618 = vpop.f32.mrf.mxu0
        %v2619 = vadd.f32 0.0, %v2618
        %v2620 = vpop.f32.mrf.mxu0
        %2621 = vdwg.mxu0
        %v2622 = vadd.f32 %v2454, %v2548
        %v2623 = vadd.f32 %v2455, %v2550
        %v2624 = vadd.f32 %v2456, %v2619
        %s2625 = scalar_lea.vmem %s5, 16
        %v2626 = vld [vmem:[%s2625] sm:$0xf]
        %v2627 = vld [vmem:[#allocation2] sm:$0xff]
        %v2628 = vld [vmem:[#allocation2 + $0x8] sm:$0xf]
        %v2631 = vcombine.high %v2627, %v2627
        %2632 = vrot.lane.b32.xlu0 %v2627, 109
        %v2633 = vpop.permute.xlu0 %2632
        %2634 = vrot.lane.b32.xlu0 %v2631, 109
        %v2635 = vpop.permute.xlu0 %2634
        %2636 = vrot.lane.b32.xlu0 %v2628, 109
        %v2637 = vpop.permute.xlu0 %2636
        %v2638 = vsel %vm956, %v2633, %v2635
        %v2639 = vsel %vm956, %v2635, %v2637
        %v2641 = vsel %vm303, %v2626, 0
        %v2643 = vsel %vm307, %v2638, 0
        %v2645 = vsel %vm307, %v2639, 0
        %v2647 = vsel %vm307, %v2637, 0
        %2649 = vmatprep.subr.mxu0 0.0
        %2650 = vmatpush1.msra.mxu0 0.0
        %2651 = vmatprep.subr.mxu0 0.0
        %2652 = vmatpush1.msra.mxu0 0.0
        %2653 = vmatprep.subr.mxu0 0.0
        %2654 = vmatpush1.msra.mxu0 0.0
        %2655 = vmatprep.subr.mxu0 0.0
        %2656 = vmatpush1.msra.mxu0 0.0
        %2657 = vmatprep.subr.mxu0 0.0
        %2658 = vmatpush1.msra.mxu0 0.0
        %2659 = vmatprep.subr.mxu0 0.0
        %2660 = vmatpush1.msra.mxu0 0.0
        %2661 = vmatprep.subr.mxu0 0.0
        %2662 = vmatpush1.msra.mxu0 0.0
        %2663 = vmatprep.subr.mxu0 0.0
        %2664 = vmatpush1.msra.mxu0 0.0
        %2665 = vmatprep.subr.mxu0 0.0
        %2666 = vmatpush1.msra.mxu0 0.0
        %2667 = vmatprep.subr.mxu0 0.0
        %2668 = vmatpush1.msra.mxu0 0.0
        %2669 = vmatprep.subr.mxu0 0.0
        %2670 = vmatpush1.msra.mxu0 0.0
        %2671 = vmatprep.subr.mxu0 0.0
        %2672 = vmatpush1.msra.mxu0 0.0
        %2673 = vmatprep.subr.mxu0 0.0
        %2674 = vmatpush1.msra.mxu0 0.0
        %2675 = vmatprep.subr.mxu0 0.0
        %2676 = vmatpush1.msra.mxu0 0.0
        %2677 = vmatprep.subr.mxu0 0.0
        %2678 = vmatpush1.msra.mxu0 0.0
        %2679 = vmatprep.subr.mxu0 %v2645
        %2680 = vmatpush1.msra.mxu0 %v2643
        %2681 = vmatprep.subr.mxu0 0.0
        %2682 = vmatpush2.msra.mxu0 0.0
        %2683 = vmatprep.subr.mxu0 0.0
        %2684 = vmatpush2.msra.mxu0 0.0
        %2685 = vmatprep.subr.mxu0 0.0
        %2686 = vmatpush2.msra.mxu0 0.0
        %2687 = vmatprep.subr.mxu0 0.0
        %2688 = vmatpush2.msra.mxu0 0.0
        %2689 = vmatprep.subr.mxu0 0.0
        %2690 = vmatpush2.msra.mxu0 0.0
        %2691 = vmatprep.subr.mxu0 0.0
        %2692 = vmatpush2.msra.mxu0 0.0
        %2693 = vmatprep.subr.mxu0 0.0
        %2694 = vmatpush2.msra.mxu0 0.0
        %2695 = vmatprep.subr.mxu0 0.0
        %2696 = vmatpush2.msra.mxu0 0.0
        %2697 = vmatprep.subr.mxu0 0.0
        %2698 = vmatpush2.msra.mxu0 0.0
        %2699 = vmatprep.subr.mxu0 0.0
        %2700 = vmatpush2.msra.mxu0 0.0
        %2701 = vmatprep.subr.mxu0 0.0
        %2702 = vmatpush2.msra.mxu0 0.0
        %2703 = vmatprep.subr.mxu0 0.0
        %2704 = vmatpush2.msra.mxu0 0.0
        %2705 = vmatprep.subr.mxu0 0.0
        %2706 = vmatpush2.msra.mxu0 0.0
        %2707 = vmatprep.subr.mxu0 0.0
        %2708 = vmatpush2.msra.mxu0 0.0
        %2709 = vmatprep.subr.mxu0 0.0
        %2710 = vmatpush2.msra.mxu0 0.0
        %2711 = vmatprep.subr.mxu0 0.0
        %2712 = vmatpush2.msra.mxu0 0.0
        %2713 = vmatprep.mubr.f32.mxu0 0.0
        %2714 = vmatmul.mubr.f32.gmra.mxu0 %v2641
        %v2715 = vpop.f32.mrf.mxu0
        %v2716 = vadd.f32 0.0, %v2715
        %v2717 = vpop.f32.mrf.mxu0
        %v2718 = vadd.f32 0.0, %v2717
        %2719 = vdwg.mxu0
        %2720 = vmatprep.subr.mxu0 0.0
        %2721 = vmatpush1.msra.mxu0 0.0
        %2722 = vmatprep.subr.mxu0 0.0
        %2723 = vmatpush1.msra.mxu0 0.0
        %2724 = vmatprep.subr.mxu0 0.0
        %2725 = vmatpush1.msra.mxu0 0.0
        %2726 = vmatprep.subr.mxu0 0.0
        %2727 = vmatpush1.msra.mxu0 0.0
        %2728 = vmatprep.subr.mxu0 0.0
        %2729 = vmatpush1.msra.mxu0 0.0
        %2730 = vmatprep.subr.mxu0 0.0
        %2731 = vmatpush1.msra.mxu0 0.0
        %2732 = vmatprep.subr.mxu0 0.0
        %2733 = vmatpush1.msra.mxu0 0.0
        %2734 = vmatprep.subr.mxu0 0.0
        %2735 = vmatpush1.msra.mxu0 0.0
        %2736 = vmatprep.subr.mxu0 0.0
        %2737 = vmatpush1.msra.mxu0 0.0
        %2738 = vmatprep.subr.mxu0 0.0
        %2739 = vmatpush1.msra.mxu0 0.0
        %2740 = vmatprep.subr.mxu0 0.0
        %2741 = vmatpush1.msra.mxu0 0.0
        %2742 = vmatprep.subr.mxu0 0.0
        %2743 = vmatpush1.msra.mxu0 0.0
        %2744 = vmatprep.subr.mxu0 0.0
        %2745 = vmatpush1.msra.mxu0 0.0
        %2746 = vmatprep.subr.mxu0 0.0
        %2747 = vmatpush1.msra.mxu0 0.0
        %2748 = vmatprep.subr.mxu0 0.0
        %2749 = vmatpush1.msra.mxu0 0.0
        %2750 = vmatprep.subr.mxu0 0.0
        %2751 = vmatpush1.msra.mxu0 %v2647
        %2752 = vmatprep.subr.mxu0 0.0
        %2753 = vmatpush2.msra.mxu0 0.0
        %2754 = vmatprep.subr.mxu0 0.0
        %2755 = vmatpush2.msra.mxu0 0.0
        %2756 = vmatprep.subr.mxu0 0.0
        %2757 = vmatpush2.msra.mxu0 0.0
        %2758 = vmatprep.subr.mxu0 0.0
        %2759 = vmatpush2.msra.mxu0 0.0
        %2760 = vmatprep.subr.mxu0 0.0
        %2761 = vmatpush2.msra.mxu0 0.0
        %2762 = vmatprep.subr.mxu0 0.0
        %2763 = vmatpush2.msra.mxu0 0.0
        %2764 = vmatprep.subr.mxu0 0.0
        %2765 = vmatpush2.msra.mxu0 0.0
        %2766 = vmatprep.subr.mxu0 0.0
        %2767 = vmatpush2.msra.mxu0 0.0
        %2768 = vmatprep.subr.mxu0 0.0
        %2769 = vmatpush2.msra.mxu0 0.0
        %2770 = vmatprep.subr.mxu0 0.0
        %2771 = vmatpush2.msra.mxu0 0.0
        %2772 = vmatprep.subr.mxu0 0.0
        %2773 = vmatpush2.msra.mxu0 0.0
        %2774 = vmatprep.subr.mxu0 0.0
        %2775 = vmatpush2.msra.mxu0 0.0
        %2776 = vmatprep.subr.mxu0 0.0
        %2777 = vmatpush2.msra.mxu0 0.0
        %2778 = vmatprep.subr.mxu0 0.0
        %2779 = vmatpush2.msra.mxu0 0.0
        %2780 = vmatprep.subr.mxu0 0.0
        %2781 = vmatpush2.msra.mxu0 0.0
        %2782 = vmatprep.subr.mxu0 0.0
        %2783 = vmatpush2.msra.mxu0 0.0
        %2784 = vmatprep.mubr.f32.mxu0 0.0
        %2785 = vmatmul.mubr.f32.gmra.mxu0 %v2641
        %v2786 = vpop.f32.mrf.mxu0
        %v2787 = vadd.f32 0.0, %v2786
        %v2788 = vpop.f32.mrf.mxu0
        %2789 = vdwg.mxu0
        %v2790 = vadd.f32 %v2622, %v2716
        %v2791 = vadd.f32 %v2623, %v2718
        %v2792 = vadd.f32 %v2624, %v2787
        %s2793 = scalar_lea.vmem %s5, 20
        %v2794 = vld [vmem:[%s2793] sm:$0xf]
        %v2795 = vld [vmem:[#allocation2] sm:$0xff]
        %v2796 = vld [vmem:[#allocation2 + $0x8] sm:$0xf]
        %v2799 = vcombine.high %v2795, %v2795
        %2800 = vrot.lane.b32.xlu0 %v2795, 108
        %v2801 = vpop.permute.xlu0 %2800
        %2802 = vrot.lane.b32.xlu0 %v2799, 108
        %v2803 = vpop.permute.xlu0 %2802
        %2804 = vrot.lane.b32.xlu0 %v2796, 108
        %v2805 = vpop.permute.xlu0 %2804
        %v2806 = vsel %vm1125, %v2801, %v2803
        %v2807 = vsel %vm1125, %v2803, %v2805
        %v2809 = vsel %vm303, %v2794, 0
        %v2811 = vsel %vm307, %v2806, 0
        %v2813 = vsel %vm307, %v2807, 0
        %v2815 = vsel %vm307, %v2805, 0
        %2817 = vmatprep.subr.mxu0 0.0
        %2818 = vmatpush1.msra.mxu0 0.0
        %2819 = vmatprep.subr.mxu0 0.0
        %2820 = vmatpush1.msra.mxu0 0.0
        %2821 = vmatprep.subr.mxu0 0.0
        %2822 = vmatpush1.msra.mxu0 0.0
        %2823 = vmatprep.subr.mxu0 0.0
        %2824 = vmatpush1.msra.mxu0 0.0
        %2825 = vmatprep.subr.mxu0 0.0
        %2826 = vmatpush1.msra.mxu0 0.0
        %2827 = vmatprep.subr.mxu0 0.0
        %2828 = vmatpush1.msra.mxu0 0.0
        %2829 = vmatprep.subr.mxu0 0.0
        %2830 = vmatpush1.msra.mxu0 0.0
        %2831 = vmatprep.subr.mxu0 0.0
        %2832 = vmatpush1.msra.mxu0 0.0
        %2833 = vmatprep.subr.mxu0 0.0
        %2834 = vmatpush1.msra.mxu0 0.0
        %2835 = vmatprep.subr.mxu0 0.0
        %2836 = vmatpush1.msra.mxu0 0.0
        %2837 = vmatprep.subr.mxu0 0.0
        %2838 = vmatpush1.msra.mxu0 0.0
        %2839 = vmatprep.subr.mxu0 0.0
        %2840 = vmatpush1.msra.mxu0 0.0
        %2841 = vmatprep.subr.mxu0 0.0
        %2842 = vmatpush1.msra.mxu0 0.0
        %2843 = vmatprep.subr.mxu0 0.0
        %2844 = vmatpush1.msra.mxu0 0.0
        %2845 = vmatprep.subr.mxu0 0.0
        %2846 = vmatpush1.msra.mxu0 0.0
        %2847 = vmatprep.subr.mxu0 %v2813
        %2848 = vmatpush1.msra.mxu0 %v2811
        %2849 = vmatprep.subr.mxu0 0.0
        %2850 = vmatpush2.msra.mxu0 0.0
        %2851 = vmatprep.subr.mxu0 0.0
        %2852 = vmatpush2.msra.mxu0 0.0
        %2853 = vmatprep.subr.mxu0 0.0
        %2854 = vmatpush2.msra.mxu0 0.0
        %2855 = vmatprep.subr.mxu0 0.0
        %2856 = vmatpush2.msra.mxu0 0.0
        %2857 = vmatprep.subr.mxu0 0.0
        %2858 = vmatpush2.msra.mxu0 0.0
        %2859 = vmatprep.subr.mxu0 0.0
        %2860 = vmatpush2.msra.mxu0 0.0
        %2861 = vmatprep.subr.mxu0 0.0
        %2862 = vmatpush2.msra.mxu0 0.0
        %2863 = vmatprep.subr.mxu0 0.0
        %2864 = vmatpush2.msra.mxu0 0.0
        %2865 = vmatprep.subr.mxu0 0.0
        %2866 = vmatpush2.msra.mxu0 0.0
        %2867 = vmatprep.subr.mxu0 0.0
        %2868 = vmatpush2.msra.mxu0 0.0
        %2869 = vmatprep.subr.mxu0 0.0
        %2870 = vmatpush2.msra.mxu0 0.0
        %2871 = vmatprep.subr.mxu0 0.0
        %2872 = vmatpush2.msra.mxu0 0.0
        %2873 = vmatprep.subr.mxu0 0.0
        %2874 = vmatpush2.msra.mxu0 0.0
        %2875 = vmatprep.subr.mxu0 0.0
        %2876 = vmatpush2.msra.mxu0 0.0
        %2877 = vmatprep.subr.mxu0 0.0
        %2878 = vmatpush2.msra.mxu0 0.0
        %2879 = vmatprep.subr.mxu0 0.0
        %2880 = vmatpush2.msra.mxu0 0.0
        %2881 = vmatprep.mubr.f32.mxu0 0.0
        %2882 = vmatmul.mubr.f32.gmra.mxu0 %v2809
        %v2883 = vpop.f32.mrf.mxu0
        %v2884 = vadd.f32 0.0, %v2883
        %v2885 = vpop.f32.mrf.mxu0
        %v2886 = vadd.f32 0.0, %v2885
        %2887 = vdwg.mxu0
        %2888 = vmatprep.subr.mxu0 0.0
        %2889 = vmatpush1.msra.mxu0 0.0
        %2890 = vmatprep.subr.mxu0 0.0
        %2891 = vmatpush1.msra.mxu0 0.0
        %2892 = vmatprep.subr.mxu0 0.0
        %2893 = vmatpush1.msra.mxu0 0.0
        %2894 = vmatprep.subr.mxu0 0.0
        %2895 = vmatpush1.msra.mxu0 0.0
        %2896 = vmatprep.subr.mxu0 0.0
        %2897 = vmatpush1.msra.mxu0 0.0
        %2898 = vmatprep.subr.mxu0 0.0
        %2899 = vmatpush1.msra.mxu0 0.0
        %2900 = vmatprep.subr.mxu0 0.0
        %2901 = vmatpush1.msra.mxu0 0.0
        %2902 = vmatprep.subr.mxu0 0.0
        %2903 = vmatpush1.msra.mxu0 0.0
        %2904 = vmatprep.subr.mxu0 0.0
        %2905 = vmatpush1.msra.mxu0 0.0
        %2906 = vmatprep.subr.mxu0 0.0
        %2907 = vmatpush1.msra.mxu0 0.0
        %2908 = vmatprep.subr.mxu0 0.0
        %2909 = vmatpush1.msra.mxu0 0.0
        %2910 = vmatprep.subr.mxu0 0.0
        %2911 = vmatpush1.msra.mxu0 0.0
        %2912 = vmatprep.subr.mxu0 0.0
        %2913 = vmatpush1.msra.mxu0 0.0
        %2914 = vmatprep.subr.mxu0 0.0
        %2915 = vmatpush1.msra.mxu0 0.0
        %2916 = vmatprep.subr.mxu0 0.0
        %2917 = vmatpush1.msra.mxu0 0.0
        %2918 = vmatprep.subr.mxu0 0.0
        %2919 = vmatpush1.msra.mxu0 %v2815
        %2920 = vmatprep.subr.mxu0 0.0
        %2921 = vmatpush2.msra.mxu0 0.0
        %2922 = vmatprep.subr.mxu0 0.0
        %2923 = vmatpush2.msra.mxu0 0.0
        %2924 = vmatprep.subr.mxu0 0.0
        %2925 = vmatpush2.msra.mxu0 0.0
        %2926 = vmatprep.subr.mxu0 0.0
        %2927 = vmatpush2.msra.mxu0 0.0
        %2928 = vmatprep.subr.mxu0 0.0
        %2929 = vmatpush2.msra.mxu0 0.0
        %2930 = vmatprep.subr.mxu0 0.0
        %2931 = vmatpush2.msra.mxu0 0.0
        %2932 = vmatprep.subr.mxu0 0.0
        %2933 = vmatpush2.msra.mxu0 0.0
        %2934 = vmatprep.subr.mxu0 0.0
        %2935 = vmatpush2.msra.mxu0 0.0
        %2936 = vmatprep.subr.mxu0 0.0
        %2937 = vmatpush2.msra.mxu0 0.0
        %2938 = vmatprep.subr.mxu0 0.0
        %2939 = vmatpush2.msra.mxu0 0.0
        %2940 = vmatprep.subr.mxu0 0.0
        %2941 = vmatpush2.msra.mxu0 0.0
        %2942 = vmatprep.subr.mxu0 0.0
        %2943 = vmatpush2.msra.mxu0 0.0
        %2944 = vmatprep.subr.mxu0 0.0
        %2945 = vmatpush2.msra.mxu0 0.0
        %2946 = vmatprep.subr.mxu0 0.0
        %2947 = vmatpush2.msra.mxu0 0.0
        %2948 = vmatprep.subr.mxu0 0.0
        %2949 = vmatpush2.msra.mxu0 0.0
        %2950 = vmatprep.subr.mxu0 0.0
        %2951 = vmatpush2.msra.mxu0 0.0
        %2952 = vmatprep.mubr.f32.mxu0 0.0
        %2953 = vmatmul.mubr.f32.gmra.mxu0 %v2809
        %v2954 = vpop.f32.mrf.mxu0
        %v2955 = vadd.f32 0.0, %v2954
        %v2956 = vpop.f32.mrf.mxu0
        %2957 = vdwg.mxu0
        %v2958 = vadd.f32 %v2790, %v2884
        %v2959 = vadd.f32 %v2791, %v2886
        %v2960 = vadd.f32 %v2792, %v2955
        %s2961 = scalar_lea.vmem %s5, 24
        %v2962 = vld [vmem:[%s2961] sm:$0xf]
        %v2963 = vld [vmem:[#allocation2] sm:$0xff]
        %v2964 = vld [vmem:[#allocation2 + $0x8] sm:$0xf]
        %v2967 = vcombine.high %v2963, %v2963
        %2968 = vrot.lane.b32.xlu0 %v2963, 92
        %v2969 = vpop.permute.xlu0 %2968
        %2970 = vrot.lane.b32.xlu0 %v2967, 92
        %v2971 = vpop.permute.xlu0 %2970
        %2972 = vrot.lane.b32.xlu0 %v2964, 92
        %v2973 = vpop.permute.xlu0 %2972
        %v2974 = vsel %vm1294, %v2969, %v2971
        %v2975 = vsel %vm1294, %v2971, %v2973
        %v2977 = vsel %vm303, %v2962, 0
        %v2979 = vsel %vm307, %v2974, 0
        %v2981 = vsel %vm307, %v2975, 0
        %v2983 = vsel %vm307, %v2973, 0
        %2985 = vmatprep.subr.mxu0 0.0
        %2986 = vmatpush1.msra.mxu0 0.0
        %2987 = vmatprep.subr.mxu0 0.0
        %2988 = vmatpush1.msra.mxu0 0.0
        %2989 = vmatprep.subr.mxu0 0.0
        %2990 = vmatpush1.msra.mxu0 0.0
        %2991 = vmatprep.subr.mxu0 0.0
        %2992 = vmatpush1.msra.mxu0 0.0
        %2993 = vmatprep.subr.mxu0 0.0
        %2994 = vmatpush1.msra.mxu0 0.0
        %2995 = vmatprep.subr.mxu0 0.0
        %2996 = vmatpush1.msra.mxu0 0.0
        %2997 = vmatprep.subr.mxu0 0.0
        %2998 = vmatpush1.msra.mxu0 0.0
        %2999 = vmatprep.subr.mxu0 0.0
        %3000 = vmatpush1.msra.mxu0 0.0
        %3001 = vmatprep.subr.mxu0 0.0
        %3002 = vmatpush1.msra.mxu0 0.0
        %3003 = vmatprep.subr.mxu0 0.0
        %3004 = vmatpush1.msra.mxu0 0.0
        %3005 = vmatprep.subr.mxu0 0.0
        %3006 = vmatpush1.msra.mxu0 0.0
        %3007 = vmatprep.subr.mxu0 0.0
        %3008 = vmatpush1.msra.mxu0 0.0
        %3009 = vmatprep.subr.mxu0 0.0
        %3010 = vmatpush1.msra.mxu0 0.0
        %3011 = vmatprep.subr.mxu0 0.0
        %3012 = vmatpush1.msra.mxu0 0.0
        %3013 = vmatprep.subr.mxu0 0.0
        %3014 = vmatpush1.msra.mxu0 0.0
        %3015 = vmatprep.subr.mxu0 %v2981
        %3016 = vmatpush1.msra.mxu0 %v2979
        %3017 = vmatprep.subr.mxu0 0.0
        %3018 = vmatpush2.msra.mxu0 0.0
        %3019 = vmatprep.subr.mxu0 0.0
        %3020 = vmatpush2.msra.mxu0 0.0
        %3021 = vmatprep.subr.mxu0 0.0
        %3022 = vmatpush2.msra.mxu0 0.0
        %3023 = vmatprep.subr.mxu0 0.0
        %3024 = vmatpush2.msra.mxu0 0.0
        %3025 = vmatprep.subr.mxu0 0.0
        %3026 = vmatpush2.msra.mxu0 0.0
        %3027 = vmatprep.subr.mxu0 0.0
        %3028 = vmatpush2.msra.mxu0 0.0
        %3029 = vmatprep.subr.mxu0 0.0
        %3030 = vmatpush2.msra.mxu0 0.0
        %3031 = vmatprep.subr.mxu0 0.0
        %3032 = vmatpush2.msra.mxu0 0.0
        %3033 = vmatprep.subr.mxu0 0.0
        %3034 = vmatpush2.msra.mxu0 0.0
        %3035 = vmatprep.subr.mxu0 0.0
        %3036 = vmatpush2.msra.mxu0 0.0
        %3037 = vmatprep.subr.mxu0 0.0
        %3038 = vmatpush2.msra.mxu0 0.0
        %3039 = vmatprep.subr.mxu0 0.0
        %3040 = vmatpush2.msra.mxu0 0.0
        %3041 = vmatprep.subr.mxu0 0.0
        %3042 = vmatpush2.msra.mxu0 0.0
        %3043 = vmatprep.subr.mxu0 0.0
        %3044 = vmatpush2.msra.mxu0 0.0
        %3045 = vmatprep.subr.mxu0 0.0
        %3046 = vmatpush2.msra.mxu0 0.0
        %3047 = vmatprep.subr.mxu0 0.0
        %3048 = vmatpush2.msra.mxu0 0.0
        %3049 = vmatprep.mubr.f32.mxu0 0.0
        %3050 = vmatmul.mubr.f32.gmra.mxu0 %v2977
        %v3051 = vpop.f32.mrf.mxu0
        %v3052 = vadd.f32 0.0, %v3051
        %v3053 = vpop.f32.mrf.mxu0
        %v3054 = vadd.f32 0.0, %v3053
        %3055 = vdwg.mxu0
        %3056 = vmatprep.subr.mxu0 0.0
        %3057 = vmatpush1.msra.mxu0 0.0
        %3058 = vmatprep.subr.mxu0 0.0
        %3059 = vmatpush1.msra.mxu0 0.0
        %3060 = vmatprep.subr.mxu0 0.0
        %3061 = vmatpush1.msra.mxu0 0.0
        %3062 = vmatprep.subr.mxu0 0.0
        %3063 = vmatpush1.msra.mxu0 0.0
        %3064 = vmatprep.subr.mxu0 0.0
        %3065 = vmatpush1.msra.mxu0 0.0
        %3066 = vmatprep.subr.mxu0 0.0
        %3067 = vmatpush1.msra.mxu0 0.0
        %3068 = vmatprep.subr.mxu0 0.0
        %3069 = vmatpush1.msra.mxu0 0.0
        %3070 = vmatprep.subr.mxu0 0.0
        %3071 = vmatpush1.msra.mxu0 0.0
        %3072 = vmatprep.subr.mxu0 0.0
        %3073 = vmatpush1.msra.mxu0 0.0
        %3074 = vmatprep.subr.mxu0 0.0
        %3075 = vmatpush1.msra.mxu0 0.0
        %3076 = vmatprep.subr.mxu0 0.0
        %3077 = vmatpush1.msra.mxu0 0.0
        %3078 = vmatprep.subr.mxu0 0.0
        %3079 = vmatpush1.msra.mxu0 0.0
        %3080 = vmatprep.subr.mxu0 0.0
        %3081 = vmatpush1.msra.mxu0 0.0
        %3082 = vmatprep.subr.mxu0 0.0
        %3083 = vmatpush1.msra.mxu0 0.0
        %3084 = vmatprep.subr.mxu0 0.0
        %3085 = vmatpush1.msra.mxu0 0.0
        %3086 = vmatprep.subr.mxu0 0.0
        %3087 = vmatpush1.msra.mxu0 %v2983
        %3088 = vmatprep.subr.mxu0 0.0
        %3089 = vmatpush2.msra.mxu0 0.0
        %3090 = vmatprep.subr.mxu0 0.0
        %3091 = vmatpush2.msra.mxu0 0.0
        %3092 = vmatprep.subr.mxu0 0.0
        %3093 = vmatpush2.msra.mxu0 0.0
        %3094 = vmatprep.subr.mxu0 0.0
        %3095 = vmatpush2.msra.mxu0 0.0
        %3096 = vmatprep.subr.mxu0 0.0
        %3097 = vmatpush2.msra.mxu0 0.0
        %3098 = vmatprep.subr.mxu0 0.0
        %3099 = vmatpush2.msra.mxu0 0.0
        %3100 = vmatprep.subr.mxu0 0.0
        %3101 = vmatpush2.msra.mxu0 0.0
        %3102 = vmatprep.subr.mxu0 0.0
        %3103 = vmatpush2.msra.mxu0 0.0
        %3104 = vmatprep.subr.mxu0 0.0
        %3105 = vmatpush2.msra.mxu0 0.0
        %3106 = vmatprep.subr.mxu0 0.0
        %3107 = vmatpush2.msra.mxu0 0.0
        %3108 = vmatprep.subr.mxu0 0.0
        %3109 = vmatpush2.msra.mxu0 0.0
        %3110 = vmatprep.subr.mxu0 0.0
        %3111 = vmatpush2.msra.mxu0 0.0
        %3112 = vmatprep.subr.mxu0 0.0
        %3113 = vmatpush2.msra.mxu0 0.0
        %3114 = vmatprep.subr.mxu0 0.0
        %3115 = vmatpush2.msra.mxu0 0.0
        %3116 = vmatprep.subr.mxu0 0.0
        %3117 = vmatpush2.msra.mxu0 0.0
        %3118 = vmatprep.subr.mxu0 0.0
        %3119 = vmatpush2.msra.mxu0 0.0
        %3120 = vmatprep.mubr.f32.mxu0 0.0
        %3121 = vmatmul.mubr.f32.gmra.mxu0 %v2977
        %v3122 = vpop.f32.mrf.mxu0
        %v3123 = vadd.f32 0.0, %v3122
        %v3124 = vpop.f32.mrf.mxu0
        %3125 = vdwg.mxu0
        %v3126 = vadd.f32 %v2958, %v3052
        %v3127 = vadd.f32 %v2959, %v3054
        %v3128 = vadd.f32 %v2960, %v3123
        %s3129 = scalar_lea.vmem %s5, 28
        %v3130 = vld [vmem:[%s3129] sm:$0xf]
        %v3131 = vld [vmem:[#allocation2] sm:$0xff]
        %v3132 = vld [vmem:[#allocation2 + $0x8] sm:$0xf]
        %v3135 = vcombine.high %v3131, %v3131
        %3136 = vrot.lane.b32.xlu0 %v3131, 91
        %v3137 = vpop.permute.xlu0 %3136
        %3138 = vrot.lane.b32.xlu0 %v3135, 91
        %v3139 = vpop.permute.xlu0 %3138
        %3140 = vrot.lane.b32.xlu0 %v3132, 91
        %v3141 = vpop.permute.xlu0 %3140
        %v3142 = vsel %vm1463, %v3137, %v3139
        %v3143 = vsel %vm1463, %v3139, %v3141
        %v3145 = vsel %vm303, %v3130, 0
        %v3147 = vsel %vm307, %v3142, 0
        %v3149 = vsel %vm307, %v3143, 0
        %v3151 = vsel %vm307, %v3141, 0
        %3153 = vmatprep.subr.mxu0 0.0
        %3154 = vmatpush1.msra.mxu0 0.0
        %3155 = vmatprep.subr.mxu0 0.0
        %3156 = vmatpush1.msra.mxu0 0.0
        %3157 = vmatprep.subr.mxu0 0.0
        %3158 = vmatpush1.msra.mxu0 0.0
        %3159 = vmatprep.subr.mxu0 0.0
        %3160 = vmatpush1.msra.mxu0 0.0
        %3161 = vmatprep.subr.mxu0 0.0
        %3162 = vmatpush1.msra.mxu0 0.0
        %3163 = vmatprep.subr.mxu0 0.0
        %3164 = vmatpush1.msra.mxu0 0.0
        %3165 = vmatprep.subr.mxu0 0.0
        %3166 = vmatpush1.msra.mxu0 0.0
        %3167 = vmatprep.subr.mxu0 0.0
        %3168 = vmatpush1.msra.mxu0 0.0
        %3169 = vmatprep.subr.mxu0 0.0
        %3170 = vmatpush1.msra.mxu0 0.0
        %3171 = vmatprep.subr.mxu0 0.0
        %3172 = vmatpush1.msra.mxu0 0.0
        %3173 = vmatprep.subr.mxu0 0.0
        %3174 = vmatpush1.msra.mxu0 0.0
        %3175 = vmatprep.subr.mxu0 0.0
        %3176 = vmatpush1.msra.mxu0 0.0
        %3177 = vmatprep.subr.mxu0 0.0
        %3178 = vmatpush1.msra.mxu0 0.0
        %3179 = vmatprep.subr.mxu0 0.0
        %3180 = vmatpush1.msra.mxu0 0.0
        %3181 = vmatprep.subr.mxu0 0.0
        %3182 = vmatpush1.msra.mxu0 0.0
        %3183 = vmatprep.subr.mxu0 %v3149
        %3184 = vmatpush1.msra.mxu0 %v3147
        %3185 = vmatprep.subr.mxu0 0.0
        %3186 = vmatpush2.msra.mxu0 0.0
        %3187 = vmatprep.subr.mxu0 0.0
        %3188 = vmatpush2.msra.mxu0 0.0
        %3189 = vmatprep.subr.mxu0 0.0
        %3190 = vmatpush2.msra.mxu0 0.0
        %3191 = vmatprep.subr.mxu0 0.0
        %3192 = vmatpush2.msra.mxu0 0.0
        %3193 = vmatprep.subr.mxu0 0.0
        %3194 = vmatpush2.msra.mxu0 0.0
        %3195 = vmatprep.subr.mxu0 0.0
        %3196 = vmatpush2.msra.mxu0 0.0
        %3197 = vmatprep.subr.mxu0 0.0
        %3198 = vmatpush2.msra.mxu0 0.0
        %3199 = vmatprep.subr.mxu0 0.0
        %3200 = vmatpush2.msra.mxu0 0.0
        %3201 = vmatprep.subr.mxu0 0.0
        %3202 = vmatpush2.msra.mxu0 0.0
        %3203 = vmatprep.subr.mxu0 0.0
        %3204 = vmatpush2.msra.mxu0 0.0
        %3205 = vmatprep.subr.mxu0 0.0
        %3206 = vmatpush2.msra.mxu0 0.0
        %3207 = vmatprep.subr.mxu0 0.0
        %3208 = vmatpush2.msra.mxu0 0.0
        %3209 = vmatprep.subr.mxu0 0.0
        %3210 = vmatpush2.msra.mxu0 0.0
        %3211 = vmatprep.subr.mxu0 0.0
        %3212 = vmatpush2.msra.mxu0 0.0
        %3213 = vmatprep.subr.mxu0 0.0
        %3214 = vmatpush2.msra.mxu0 0.0
        %3215 = vmatprep.subr.mxu0 0.0
        %3216 = vmatpush2.msra.mxu0 0.0
        %3217 = vmatprep.mubr.f32.mxu0 0.0
        %3218 = vmatmul.mubr.f32.gmra.mxu0 %v3145
        %v3219 = vpop.f32.mrf.mxu0
        %v3220 = vadd.f32 0.0, %v3219
        %v3221 = vpop.f32.mrf.mxu0
        %v3222 = vadd.f32 0.0, %v3221
        %3223 = vdwg.mxu0
        %3224 = vmatprep.subr.mxu0 0.0
        %3225 = vmatpush1.msra.mxu0 0.0
        %3226 = vmatprep.subr.mxu0 0.0
        %3227 = vmatpush1.msra.mxu0 0.0
        %3228 = vmatprep.subr.mxu0 0.0
        %3229 = vmatpush1.msra.mxu0 0.0
        %3230 = vmatprep.subr.mxu0 0.0
        %3231 = vmatpush1.msra.mxu0 0.0
        %3232 = vmatprep.subr.mxu0 0.0
        %3233 = vmatpush1.msra.mxu0 0.0
        %3234 = vmatprep.subr.mxu0 0.0
        %3235 = vmatpush1.msra.mxu0 0.0
        %3236 = vmatprep.subr.mxu0 0.0
        %3237 = vmatpush1.msra.mxu0 0.0
        %3238 = vmatprep.subr.mxu0 0.0
        %3239 = vmatpush1.msra.mxu0 0.0
        %3240 = vmatprep.subr.mxu0 0.0
        %3241 = vmatpush1.msra.mxu0 0.0
        %3242 = vmatprep.subr.mxu0 0.0
        %3243 = vmatpush1.msra.mxu0 0.0
        %3244 = vmatprep.subr.mxu0 0.0
        %3245 = vmatpush1.msra.mxu0 0.0
        %3246 = vmatprep.subr.mxu0 0.0
        %3247 = vmatpush1.msra.mxu0 0.0
        %3248 = vmatprep.subr.mxu0 0.0
        %3249 = vmatpush1.msra.mxu0 0.0
        %3250 = vmatprep.subr.mxu0 0.0
        %3251 = vmatpush1.msra.mxu0 0.0
        %3252 = vmatprep.subr.mxu0 0.0
        %3253 = vmatpush1.msra.mxu0 0.0
        %3254 = vmatprep.subr.mxu0 0.0
        %3255 = vmatpush1.msra.mxu0 %v3151
        %3256 = vmatprep.subr.mxu0 0.0
        %3257 = vmatpush2.msra.mxu0 0.0
        %3258 = vmatprep.subr.mxu0 0.0
        %3259 = vmatpush2.msra.mxu0 0.0
        %3260 = vmatprep.subr.mxu0 0.0
        %3261 = vmatpush2.msra.mxu0 0.0
        %3262 = vmatprep.subr.mxu0 0.0
        %3263 = vmatpush2.msra.mxu0 0.0
        %3264 = vmatprep.subr.mxu0 0.0
        %3265 = vmatpush2.msra.mxu0 0.0
        %3266 = vmatprep.subr.mxu0 0.0
        %3267 = vmatpush2.msra.mxu0 0.0
        %3268 = vmatprep.subr.mxu0 0.0
        %3269 = vmatpush2.msra.mxu0 0.0
        %3270 = vmatprep.subr.mxu0 0.0
        %3271 = vmatpush2.msra.mxu0 0.0
        %3272 = vmatprep.subr.mxu0 0.0
        %3273 = vmatpush2.msra.mxu0 0.0
        %3274 = vmatprep.subr.mxu0 0.0
        %3275 = vmatpush2.msra.mxu0 0.0
        %3276 = vmatprep.subr.mxu0 0.0
        %3277 = vmatpush2.msra.mxu0 0.0
        %3278 = vmatprep.subr.mxu0 0.0
        %3279 = vmatpush2.msra.mxu0 0.0
        %3280 = vmatprep.subr.mxu0 0.0
        %3281 = vmatpush2.msra.mxu0 0.0
        %3282 = vmatprep.subr.mxu0 0.0
        %3283 = vmatpush2.msra.mxu0 0.0
        %3284 = vmatprep.subr.mxu0 0.0
        %3285 = vmatpush2.msra.mxu0 0.0
        %3286 = vmatprep.subr.mxu0 0.0
        %3287 = vmatpush2.msra.mxu0 0.0
        %3288 = vmatprep.mubr.f32.mxu0 0.0
        %3289 = vmatmul.mubr.f32.gmra.mxu0 %v3145
        %v3290 = vpop.f32.mrf.mxu0
        %v3291 = vadd.f32 0.0, %v3290
        %v3292 = vpop.f32.mrf.mxu0
        %3293 = vdwg.mxu0
        %v3294 = vadd.f32 %v3126, %v3220
        %v3295 = vadd.f32 %v3127, %v3222
        %v3296 = vadd.f32 %v3128, %v3291
        %s3297 = scalar_lea.vmem %s5, 32
        %v3298 = vld [vmem:[%s3297] sm:$0xf]
        %v3299 = vld [vmem:[#allocation2] sm:$0xff]
        %v3300 = vld [vmem:[#allocation2 + $0x8] sm:$0xf]
        %v3303 = vcombine.high %v3299, %v3299
        %3304 = vrot.lane.b32.xlu0 %v3299, 90
        %v3305 = vpop.permute.xlu0 %3304
        %3306 = vrot.lane.b32.xlu0 %v3303, 90
        %v3307 = vpop.permute.xlu0 %3306
        %3308 = vrot.lane.b32.xlu0 %v3300, 90
        %v3309 = vpop.permute.xlu0 %3308
        %v3310 = vsel %vm1632, %v3305, %v3307
        %v3311 = vsel %vm1632, %v3307, %v3309
        %v3313 = vsel %vm303, %v3298, 0
        %v3315 = vsel %vm307, %v3310, 0
        %v3317 = vsel %vm307, %v3311, 0
        %v3319 = vsel %vm307, %v3309, 0
        %3321 = vmatprep.subr.mxu0 0.0
        %3322 = vmatpush1.msra.mxu0 0.0
        %3323 = vmatprep.subr.mxu0 0.0
        %3324 = vmatpush1.msra.mxu0 0.0
        %3325 = vmatprep.subr.mxu0 0.0
        %3326 = vmatpush1.msra.mxu0 0.0
        %3327 = vmatprep.subr.mxu0 0.0
        %3328 = vmatpush1.msra.mxu0 0.0
        %3329 = vmatprep.subr.mxu0 0.0
        %3330 = vmatpush1.msra.mxu0 0.0
        %3331 = vmatprep.subr.mxu0 0.0
        %3332 = vmatpush1.msra.mxu0 0.0
        %3333 = vmatprep.subr.mxu0 0.0
        %3334 = vmatpush1.msra.mxu0 0.0
        %3335 = vmatprep.subr.mxu0 0.0
        %3336 = vmatpush1.msra.mxu0 0.0
        %3337 = vmatprep.subr.mxu0 0.0
        %3338 = vmatpush1.msra.mxu0 0.0
        %3339 = vmatprep.subr.mxu0 0.0
        %3340 = vmatpush1.msra.mxu0 0.0
        %3341 = vmatprep.subr.mxu0 0.0
        %3342 = vmatpush1.msra.mxu0 0.0
        %3343 = vmatprep.subr.mxu0 0.0
        %3344 = vmatpush1.msra.mxu0 0.0
        %3345 = vmatprep.subr.mxu0 0.0
        %3346 = vmatpush1.msra.mxu0 0.0
        %3347 = vmatprep.subr.mxu0 0.0
        %3348 = vmatpush1.msra.mxu0 0.0
        %3349 = vmatprep.subr.mxu0 0.0
        %3350 = vmatpush1.msra.mxu0 0.0
        %3351 = vmatprep.subr.mxu0 %v3317
        %3352 = vmatpush1.msra.mxu0 %v3315
        %3353 = vmatprep.subr.mxu0 0.0
        %3354 = vmatpush2.msra.mxu0 0.0
        %3355 = vmatprep.subr.mxu0 0.0
        %3356 = vmatpush2.msra.mxu0 0.0
        %3357 = vmatprep.subr.mxu0 0.0
        %3358 = vmatpush2.msra.mxu0 0.0
        %3359 = vmatprep.subr.mxu0 0.0
        %3360 = vmatpush2.msra.mxu0 0.0
        %3361 = vmatprep.subr.mxu0 0.0
        %3362 = vmatpush2.msra.mxu0 0.0
        %3363 = vmatprep.subr.mxu0 0.0
        %3364 = vmatpush2.msra.mxu0 0.0
        %3365 = vmatprep.subr.mxu0 0.0
        %3366 = vmatpush2.msra.mxu0 0.0
        %3367 = vmatprep.subr.mxu0 0.0
        %3368 = vmatpush2.msra.mxu0 0.0
        %3369 = vmatprep.subr.mxu0 0.0
        %3370 = vmatpush2.msra.mxu0 0.0
        %3371 = vmatprep.subr.mxu0 0.0
        %3372 = vmatpush2.msra.mxu0 0.0
        %3373 = vmatprep.subr.mxu0 0.0
        %3374 = vmatpush2.msra.mxu0 0.0
        %3375 = vmatprep.subr.mxu0 0.0
        %3376 = vmatpush2.msra.mxu0 0.0
        %3377 = vmatprep.subr.mxu0 0.0
        %3378 = vmatpush2.msra.mxu0 0.0
        %3379 = vmatprep.subr.mxu0 0.0
        %3380 = vmatpush2.msra.mxu0 0.0
        %3381 = vmatprep.subr.mxu0 0.0
        %3382 = vmatpush2.msra.mxu0 0.0
        %3383 = vmatprep.subr.mxu0 0.0
        %3384 = vmatpush2.msra.mxu0 0.0
        %3385 = vmatprep.mubr.f32.mxu0 0.0
        %3386 = vmatmul.mubr.f32.gmra.mxu0 %v3313
        %v3387 = vpop.f32.mrf.mxu0
        %v3388 = vadd.f32 0.0, %v3387
        %v3389 = vpop.f32.mrf.mxu0
        %v3390 = vadd.f32 0.0, %v3389
        %3391 = vdwg.mxu0
        %3392 = vmatprep.subr.mxu0 0.0
        %3393 = vmatpush1.msra.mxu0 0.0
        %3394 = vmatprep.subr.mxu0 0.0
        %3395 = vmatpush1.msra.mxu0 0.0
        %3396 = vmatprep.subr.mxu0 0.0
        %3397 = vmatpush1.msra.mxu0 0.0
        %3398 = vmatprep.subr.mxu0 0.0
        %3399 = vmatpush1.msra.mxu0 0.0
        %3400 = vmatprep.subr.mxu0 0.0
        %3401 = vmatpush1.msra.mxu0 0.0
        %3402 = vmatprep.subr.mxu0 0.0
        %3403 = vmatpush1.msra.mxu0 0.0
        %3404 = vmatprep.subr.mxu0 0.0
        %3405 = vmatpush1.msra.mxu0 0.0
        %3406 = vmatprep.subr.mxu0 0.0
        %3407 = vmatpush1.msra.mxu0 0.0
        %3408 = vmatprep.subr.mxu0 0.0
        %3409 = vmatpush1.msra.mxu0 0.0
        %3410 = vmatprep.subr.mxu0 0.0
        %3411 = vmatpush1.msra.mxu0 0.0
        %3412 = vmatprep.subr.mxu0 0.0
        %3413 = vmatpush1.msra.mxu0 0.0
        %3414 = vmatprep.subr.mxu0 0.0
        %3415 = vmatpush1.msra.mxu0 0.0
        %3416 = vmatprep.subr.mxu0 0.0
        %3417 = vmatpush1.msra.mxu0 0.0
        %3418 = vmatprep.subr.mxu0 0.0
        %3419 = vmatpush1.msra.mxu0 0.0
        %3420 = vmatprep.subr.mxu0 0.0
        %3421 = vmatpush1.msra.mxu0 0.0
        %3422 = vmatprep.subr.mxu0 0.0
        %3423 = vmatpush1.msra.mxu0 %v3319
        %3424 = vmatprep.subr.mxu0 0.0
        %3425 = vmatpush2.msra.mxu0 0.0
        %3426 = vmatprep.subr.mxu0 0.0
        %3427 = vmatpush2.msra.mxu0 0.0
        %3428 = vmatprep.subr.mxu0 0.0
        %3429 = vmatpush2.msra.mxu0 0.0
        %3430 = vmatprep.subr.mxu0 0.0
        %3431 = vmatpush2.msra.mxu0 0.0
        %3432 = vmatprep.subr.mxu0 0.0
        %3433 = vmatpush2.msra.mxu0 0.0
        %3434 = vmatprep.subr.mxu0 0.0
        %3435 = vmatpush2.msra.mxu0 0.0
        %3436 = vmatprep.subr.mxu0 0.0
        %3437 = vmatpush2.msra.mxu0 0.0
        %3438 = vmatprep.subr.mxu0 0.0
        %3439 = vmatpush2.msra.mxu0 0.0
        %3440 = vmatprep.subr.mxu0 0.0
        %3441 = vmatpush2.msra.mxu0 0.0
        %3442 = vmatprep.subr.mxu0 0.0
        %3443 = vmatpush2.msra.mxu0 0.0
        %3444 = vmatprep.subr.mxu0 0.0
        %3445 = vmatpush2.msra.mxu0 0.0
        %3446 = vmatprep.subr.mxu0 0.0
        %3447 = vmatpush2.msra.mxu0 0.0
        %3448 = vmatprep.subr.mxu0 0.0
        %3449 = vmatpush2.msra.mxu0 0.0
        %3450 = vmatprep.subr.mxu0 0.0
        %3451 = vmatpush2.msra.mxu0 0.0
        %3452 = vmatprep.subr.mxu0 0.0
        %3453 = vmatpush2.msra.mxu0 0.0
        %3454 = vmatprep.subr.mxu0 0.0
        %3455 = vmatpush2.msra.mxu0 0.0
        %3456 = vmatprep.mubr.f32.mxu0 0.0
        %3457 = vmatmul.mubr.f32.gmra.mxu0 %v3313
        %v3458 = vpop.f32.mrf.mxu0
        %v3459 = vadd.f32 0.0, %v3458
        %v3460 = vpop.f32.mrf.mxu0
        %3461 = vdwg.mxu0
        %v3462 = vadd.f32 %v3294, %v3388
        %v3463 = vadd.f32 %v3295, %v3390
        %v3464 = vadd.f32 %v3296, %v3459
        %v3465 = vld [vmem:[%s6] sm:$0xf]
        %3467 = vset.pattern.permute.xlu0 0
        %3468 = vperm.xlu0 %3467, %v3465
        %v3469 = vpop.permute.xlu0 %3468
        %v3471 = vadd.f32 %v3462, %v3469
        %v3472 = vadd.f32 %v3463, %v3469
        %v3473 = vadd.f32 %v3464, %v3469
        %v3474 = vsel %vm1810, %v3471, 0.0
        %v3475 = vsel %vm1811, %v3472, 0.0
        %v3476 = vsel %vm1812, %v3473, 0.0
        %v3477 = vsel %vm307, %v3474, 0.0
        %v3478 = vsel %vm307, %v3475, 0.0
        %v3479 = vadd.f32 %v3477, %v3478
        %v3480 = vsel %vm1819, %v3476, 0.0
        %v3481 = vadd.f32 %v3479, %v3480
        %3482 = vadd.xlane.f32.xlu0 %v3481
        %v3483 = vpop.xlane.xlu0 %3482
        %v3484 = vmul.f32 %v3483, %v1824
        %v3485 = vsub.f32 %v3471, %v3484
        %v3486 = vsub.f32 %v3472, %v3484
        %v3487 = vsub.f32 %v3473, %v3484
        %v3488 = vmul.f32 %v3485, %v3485
        %v3489 = vmul.f32 %v3486, %v3486
        %v3490 = vmul.f32 %v3487, %v3487
        %v3491 = vsel %vm1810, %v3488, 0.0
        %v3492 = vsel %vm1811, %v3489, 0.0
        %v3493 = vsel %vm1812, %v3490, 0.0
        %v3494 = vsel %vm307, %v3491, 0.0
        %v3495 = vsel %vm307, %v3492, 0.0
        %v3496 = vadd.f32 %v3494, %v3495
        %v3497 = vsel %vm1819, %v3493, 0.0
        %v3498 = vadd.f32 %v3496, %v3497
        %3499 = vadd.xlane.f32.xlu0 %v3498
        %v3500 = vpop.xlane.xlu0 %3499
        %v3501 = vmul.f32 %v3500, %v1824
        %v3502 = vadd.f32 %v3501, 1e-05
        %v3503 = vrsqrt.pop %v3502
        %v3504 = vmul.f32 %v3485, %v3503
        %v3505 = vmul.f32 %v3486, %v3503
        %v3506 = vmul.f32 %v3487, %v3503
        %v3507 = vld [vmem:[%s276] sm:$0xff]
        %v3508 = vld [vmem:[%s276 + $0x8] sm:$0xf]
        %v3511 = vcombine.high %v3507, %v3507
        %3512 = vrot.lane.b32.xlu0 %v3507, 109
        %v3513 = vpop.permute.xlu0 %3512
        %3514 = vrot.lane.b32.xlu0 %v3511, 109
        %v3515 = vpop.permute.xlu0 %3514
        %3516 = vrot.lane.b32.xlu0 %v3508, 109
        %v3517 = vpop.permute.xlu0 %3516
        %v3518 = vsel %vm956, %v3513, %v3515
        %v3519 = vsel %vm956, %v3515, %v3517
        %v3523 = vadd.f32 %v3504, %v3518
        %v3524 = vadd.f32 %v3505, %v3519
        %v3525 = vadd.f32 %v3506, %v3517
        %3527 = vrot.lane.b32.xlu0 %v3523, 109
        %v3528 = vpop.permute.xlu0 %3527
        %vm3530 = vcmask 125952
        %3531 = vst.msk [vmem:[%s271] sm:$0xf] %vm3530, %v3528
        %3532 = vrot.lane.b32.xlu0 %v3523, 107
        %v3533 = vpop.permute.xlu0 %3532
        %vm3535 = vcmask 257152
        %3536 = vst.msk [vmem:[%s271] sm:$0xf] %vm3535, %v3533
        %3537 = vrot.lane.b32.xlu0 %v3523, 105
        %v3538 = vpop.permute.xlu0 %3537
        %vm3540 = vcmask 388352
        %3541 = vst.msk [vmem:[%s271] sm:$0xf] %vm3540, %v3538
        %3542 = vrot.lane.b32.xlu0 %v3523, 103
        %v3543 = vpop.permute.xlu0 %3542
        %vm3545 = vcmask 519552
        %3546 = vst.msk [vmem:[%s271] sm:$0xf] %vm3545, %v3543
        %3547 = vrot.lane.b32.xlu0 %v3523, 101
        %v3548 = vpop.permute.xlu0 %3547
        %vm3550 = vcmask 650752
        %3551 = vst.msk [vmem:[%s271] sm:$0xf] %vm3550, %v3548
        %3552 = vrot.lane.b32.xlu0 %v3523, 99
        %v3553 = vpop.permute.xlu0 %3552
        %vm3555 = vcmask 781952
        %3556 = vst.msk [vmem:[%s271] sm:$0xf] %vm3555, %v3553
        %v3558 = vcombine.low %v3523, %v3524
        %3559 = vrot.lane.b32.xlu0 %v3558, 97
        %v3560 = vpop.permute.xlu0 %3559
        %v3561 = vrot.slane %v3560, 4
        %vm3562 = vcmask 793600
        %v3563 = vsel %vm3562, %v3560, %v3561
        %vm3565 = vcmask 913152
        %3566 = vst.msk [vmem:[%s271] sm:$0xf] %vm3565, %v3563
        %3567 = vrot.lane.b32.xlu0 %v3524, 95
        %v3568 = vpop.permute.xlu0 %3567
        %vm3570 = vcmask 1044352
        %3571 = vst.msk [vmem:[%s271] sm:$0xf] %vm3570, %v3568
        %3572 = vrot.lane.b32.xlu0 %v3524, 93
        %v3573 = vpop.permute.xlu0 %3572
        %3575 = vst.msk [vmem:[%s271 + $0x4] sm:$0xf] %vm3530, %v3573
        %3576 = vrot.lane.b32.xlu0 %v3524, 91
        %v3577 = vpop.permute.xlu0 %3576
        %3579 = vst.msk [vmem:[%s271 + $0x4] sm:$0xf] %vm3535, %v3577
        %3580 = vrot.lane.b32.xlu0 %v3524, 89
        %v3581 = vpop.permute.xlu0 %3580
        %3583 = vst.msk [vmem:[%s271 + $0x4] sm:$0xf] %vm3540, %v3581
        %3584 = vrot.lane.b32.xlu0 %v3524, 87
        %v3585 = vpop.permute.xlu0 %3584
        %3587 = vst.msk [vmem:[%s271 + $0x4] sm:$0xf] %vm3545, %v3585
        %3588 = vrot.lane.b32.xlu0 %v3524, 85
        %v3589 = vpop.permute.xlu0 %3588
        %3591 = vst.msk [vmem:[%s271 + $0x4] sm:$0xf] %vm3550, %v3589
        %v3593 = vcombine.low %v3524, %v3525
        %3594 = vrot.lane.b32.xlu0 %v3593, 83
        %v3595 = vpop.permute.xlu0 %3594
        %v3596 = vrot.slane %v3595, 4
        %vm3597 = vcmask 678912
        %v3598 = vsel %vm3597, %v3595, %v3596
        %3600 = vst.msk [vmem:[%s271 + $0x4] sm:$0xf] %vm3555, %v3598
        %3601 = vrot.lane.b32.xlu0 %v3525, 81
        %v3602 = vpop.permute.xlu0 %3601
        %3604 = vst.msk [vmem:[%s271 + $0x4] sm:$0xf] %vm3565, %v3602
        %3605 = vrot.lane.b32.xlu0 %v3525, 79
        %v3606 = vpop.permute.xlu0 %3605
        %3608 = vst.msk [vmem:[%s271 + $0x4] sm:$0xf] %vm3570, %v3606
        %s3609 = sand.u32 %s181, 1
        %s3610 = scalar_lea.sflag [#allocation4], %s3609
        %s3611 = sand.u32 %s181, 1
        %s3612 = smul.addr %s3611, 8
        %s3613 = scalar_lea.vmem [#allocation3], %s3612
        // Predicated region
        $region49: #{tpu_custom_call.1} parent=47 // pred_check
          %p3614 = pneg %p191
        $region50: #{tpu_custom_call.1} parent=47 // pred_check_branch
          %3616 = sbr.rel (%p3614) target = $region52
        $region51: #{tpu_custom_call.1} parent=47 // pred_region
          %s3618 = ssub.s32 128, 128
          %3619 = vsyncadd %s3610, %s3618
          %s3620 = smul.addr %s21, 2
          %s3621 = smul.addr %s3620, 64
          %s3622 = scalar_lea.hbm %s7, %s3621
          %s3624 = sshll.u32 %s3613, 4
          %s3625 = int_to_ptr.vmem [resolvable:$true] %s3624
          %3627 = dma.vmem_to_hbm [thread:$0]  %s3625, 128, %s3622, %s3610
        $region52: #{tpu_custom_call.1} parent=47 // pred_fallthru
          _
      $region48: #{tpu_custom_call.1} parent=5 // pred_fallthru
        _
      %p3628 = scmp.le.s32.totalorder 2, %s16
      // Predicated region
      $region53: #{tpu_custom_call.1} parent=5 // pred_check
        %p3629 = pneg %p3628
      $region54: #{tpu_custom_call.1} parent=5 // pred_check_branch
        %3631 = sbr.rel (%p3629) target = $region56
      $region55: #{tpu_custom_call.1} parent=5 // pred_region
        %s3632 = ssub.s32 %s16, 2
        // Predicated region
        $region57: #{tpu_custom_call.1} parent=55 // pred_check
          %p3633 = pneg %p197
        $region58: #{tpu_custom_call.1} parent=55 // pred_check_branch
          %3635 = sbr.rel (%p3633) target = $region60
        $region59: #{tpu_custom_call.1} parent=55 // pred_region
          %s3636 = sand.u32 %s182, 1
          %s3637 = scalar_lea.sflag [#allocation4], %s3636
          %s3638 = sand.u32 %s182, 1
          %s3639 = smul.addr %s3638, 8
          %s3640 = scalar_lea.vmem [#allocation3], %s3639
          %3641 = dma.done %s3637, 128
        $region60: #{tpu_custom_call.1} parent=55 // pred_fallthru
          _
      $region56: #{tpu_custom_call.1} parent=5 // pred_fallthru
        _
    $region6: #{tpu_custom_call.1} parent=1 // loop_footer
      %s20 = sadd.s32 1, %s16
    $region7: #{tpu_custom_call.1} parent=1 // loop_footer_branch
      %15 = sbr.rel target = $region3
    $region8: #{tpu_custom_call.1} parent=1 // loop_exit
      _
    %3642 = vsyncpa [#allocation4], 1
    %s3643 = scalar_lea.sflag [#allocation4], 1
    %3644 = vsyncpa %s3643, 1

</llo_original>
